<compile_context>
chip_gen: v6e
topology: v6e:2x2x1
jax: 0.10.0
libtpu: 0.0.40
codegen_flags: <defaults>
</compile_context>

<pallas_src>
import jax
import jax.numpy as jnp
from jax.experimental import pallas as pl
from jax.experimental.pallas import tpu as pltpu  # noqa: F401  (kept for parity)


# ----------------------------- fused Pallas kernel -----------------------------

def _birnn_crf_kernel(x_ref, wih_ref, whh_f_ref, whh_b_ref, b_ref,
                      wtag_f_ref, wtag_b_ref, btag_ref,
                      mask_ref, start_ref, end_ref, transT_ref,
                      em_ref, denom_ref):
    """Fused BiLSTM + hidden2tag + CRF log-partition.

    x_ref      : [T, B, E]   time-major embedded inputs (already masked)
    wih_ref    : [E, 8H]     [W_ih_fwd.T | W_ih_bwd.T]  (gate order i,f,g,o)
    whh_*_ref  : [H, 4H]     per-direction W_hh.T
    b_ref      : [1, 8H]     [b_ih_f+b_hh_f | b_ih_b+b_hh_b]
    wtag_*_ref : [H, C]      hidden2tag weight halves (fwd / bwd rows of W.T)
    btag_ref   : [1, C]
    mask_ref   : [T, B, 1]   float 0/1 mask
    start/end  : [1, C]      CRF boundary scores
    transT_ref : [C, C]      CRF transitions, transposed (trans.T)
    em_ref     : [T, B, C]   output emissions (needed by the glue numerator)
    denom_ref  : [B, 1]      output log-partition per sequence
    """
    T, B, E = x_ref.shape
    H = whh_f_ref.shape[0]
    G = 4 * H

    wih = wih_ref[...]                           # [E, 8H]
    bias = b_ref[...]                            # [1, 8H]
    whh_f = whh_f_ref[...]                       # [H, 4H]
    whh_b = whh_b_ref[...]                       # [H, 4H]

    # ---- hoisted input projection: T independent dots, off the critical path
    gin = [jnp.dot(x_ref[t], wih, preferred_element_type=jnp.float32) + bias
           for t in range(T)]                    # each [B, 8H]

    # ---- one LSTM direction; (h, c) live as values in vregs (no scratch I/O)
    def run_dir(col0, whh, reverse):
        h = jnp.zeros((B, H), jnp.float32)
        c = jnp.zeros((B, H), jnp.float32)
        hs = [None] * T
        order = range(T - 1, -1, -1) if reverse else range(T)
        for t in order:
            gates = gin[t][:, col0:col0 + G] + jnp.dot(
                h, whh, preferred_element_type=jnp.float32)          # [B, 4H]
            i_g = jax.nn.sigmoid(gates[:, 0:H])
            f_g = jax.nn.sigmoid(gates[:, H:2 * H])
            g_g = jnp.tanh(gates[:, 2 * H:3 * H])
            o_g = jax.nn.sigmoid(gates[:, 3 * H:4 * H])
            c = f_g * c + i_g * g_g
            h = o_g * jnp.tanh(c)
            hs[t] = h
        return hs

    hs_f = run_dir(0, whh_f, reverse=False)
    hs_b = run_dir(G, whh_b, reverse=True)

    # ---- hidden2tag projection fused as epilogue (no [T,B,2H] HBM round trip)
    wtag_f = wtag_f_ref[...]                     # [H, C]
    wtag_b = wtag_b_ref[...]                     # [H, C]
    btag = btag_ref[...]                         # [1, C]
    em = [None] * T
    for t in range(T):
        em_t = (jnp.dot(hs_f[t], wtag_f, preferred_element_type=jnp.float32)
                + jnp.dot(hs_b[t], wtag_b, preferred_element_type=jnp.float32)
                + btag)                          # [B, C]
        em[t] = em_t
        em_ref[t] = em_t

    # ---- CRF log-partition (forward algorithm); gold-path numerator is glue
    transT = transT_ref[...]                     # [C, C] = trans.T
    alpha = start_ref[...] + em[0]               # [B, C]
    for t in range(1, T):
        m_t = mask_ref[t]                        # [B, 1]
        # x[b, j, i] = alpha[b, i] + trans[i, j]
        x_t = alpha[:, None, :] + transT[None, :, :]          # [B, C, C]
        mx = jnp.max(x_t, axis=-1)
        lse = mx + jnp.log(jnp.sum(jnp.exp(x_t - mx[:, :, None]), axis=-1))
        alpha = jnp.where(m_t > 0.0, lse + em[t], alpha)
    alpha = alpha + end_ref[...]
    mx2 = jnp.max(alpha, axis=-1, keepdims=True)
    denom_ref[...] = mx2 + jnp.log(
        jnp.sum(jnp.exp(alpha - mx2), axis=-1, keepdims=True))  # [B, 1]


# ----------------------------- pallas_call wrapper -----------------------------

def _run_birnn_crf(x, wih_both, whh_f, whh_b, b_both,
                   wtag_f, wtag_b, btag, mask_tb1, start, end, transT):
    T, B, E = x.shape
    H = whh_f.shape[0]
    C = transT.shape[0]
    return pl.pallas_call(
        _birnn_crf_kernel,
        grid=(1,),
        in_specs=[
            pl.BlockSpec((T, B, E), lambda i: (0, 0, 0)),
            pl.BlockSpec((E, 8 * H), lambda i: (0, 0)),
            pl.BlockSpec((H, 4 * H), lambda i: (0, 0)),
            pl.BlockSpec((H, 4 * H), lambda i: (0, 0)),
            pl.BlockSpec((1, 8 * H), lambda i: (0, 0)),
            pl.BlockSpec((H, C), lambda i: (0, 0)),
            pl.BlockSpec((H, C), lambda i: (0, 0)),
            pl.BlockSpec((1, C), lambda i: (0, 0)),
            pl.BlockSpec((T, B, 1), lambda i: (0, 0, 0)),
            pl.BlockSpec((1, C), lambda i: (0, 0)),
            pl.BlockSpec((1, C), lambda i: (0, 0)),
            pl.BlockSpec((C, C), lambda i: (0, 0)),
        ],
        out_specs=(
            pl.BlockSpec((T, B, C), lambda i: (0, 0, 0)),
            pl.BlockSpec((B, 1), lambda i: (0, 0)),
        ),
        out_shape=(
            jax.ShapeDtypeStruct((T, B, C), jnp.float32),
            jax.ShapeDtypeStruct((B, 1), jnp.float32),
        ),
    )(x, wih_both, whh_f, whh_b, b_both, wtag_f, wtag_b, btag,
      mask_tb1, start, end, transT)


# ----------------------------- parameters & forward -----------------------------

def init_params(key, vocab_size, E, H, C):
    ks = jax.random.split(key, 14)

    def u(k, shape, bound):
        return jax.random.uniform(k, shape, jnp.float32, -bound, bound)

    k_lstm = 1.0 / float(jnp.sqrt(jnp.float32(H)))
    k_lin = 1.0 / float(jnp.sqrt(jnp.float32(2 * H)))
    emb = jax.random.normal(ks[0], (vocab_size, E), jnp.float32)
    emb = emb.at[vocab_size - 1].set(0.0)  # padding_idx = vocab_size - 1
    return dict(
        embedding=emb,
        w_ih_f=u(ks[1], (4 * H, E), k_lstm), w_hh_f=u(ks[2], (4 * H, H), k_lstm),
        b_ih_f=u(ks[3], (4 * H,), k_lstm), b_hh_f=u(ks[4], (4 * H,), k_lstm),
        w_ih_b=u(ks[5], (4 * H, E), k_lstm), w_hh_b=u(ks[6], (4 * H, H), k_lstm),
        b_ih_b=u(ks[7], (4 * H,), k_lstm), b_hh_b=u(ks[8], (4 * H,), k_lstm),
        w_tag=u(ks[9], (C, 2 * H), k_lin), b_tag=u(ks[10], (C,), k_lin),
        crf_start=u(ks[11], (C,), 0.1),
        crf_end=u(ks[12], (C,), 0.1),
        crf_trans=u(ks[13], (C, C), 0.1),
    )


def birnn_crf_loss(params, input_ids, input_mask, label_ids):
    """Forward of BiRNN_CRF: returns -log_likelihood (token_mean)."""
    B, T = input_ids.shape
    H = params["w_hh_f"].shape[1]

    # Embedding lookup + mask (XLA glue).
    # TODO(synk): nn.Dropout is treated as identity (inference semantics).
    emb = jnp.take(params["embedding"], input_ids, axis=0)              # [B,T,E]
    maskf = input_mask.astype(jnp.float32)                              # [B,T]
    emb = emb * maskf[:, :, None]
    x = jnp.transpose(emb, (1, 0, 2)).astype(jnp.float32)               # [T,B,E]

    # Pre-pack weights so every in-kernel dot is a plain row-major matmul.
    wih_both = jnp.concatenate([params["w_ih_f"].T, params["w_ih_b"].T], axis=1)   # [E,8H]
    b_both = jnp.concatenate([params["b_ih_f"] + params["b_hh_f"],
                              params["b_ih_b"] + params["b_hh_b"]])[None, :]       # [1,8H]
    wtag_T = params["w_tag"].T                                                     # [2H,C]
    wtag_f, wtag_b = wtag_T[:H], wtag_T[H:]

    mask_tb = jnp.transpose(maskf, (1, 0))                              # [T,B]
    mask_tb1 = mask_tb[:, :, None]                                      # [T,B,1]

    emissions, denom = _run_birnn_crf(
        x, wih_both, params["w_hh_f"].T, params["w_hh_b"].T, b_both,
        wtag_f, wtag_b, params["b_tag"][None, :], mask_tb1,
        params["crf_start"][None, :], params["crf_end"][None, :],
        params["crf_trans"].T)

    # CRF gold-path numerator (gathers + sums only, no sequential dependence).
    tags_tb = jnp.transpose(label_ids, (1, 0))                          # [T,B]
    first_tags = tags_tb[0]
    score = params["crf_start"][first_tags]
    score = score + emissions[0][jnp.arange(B), first_tags]
    trans_sc = params["crf_trans"][tags_tb[:-1], tags_tb[1:]]           # [T-1,B]
    emit_sc = jnp.take_along_axis(
        emissions[1:], tags_tb[1:, :, None], axis=-1)[..., 0]           # [T-1,B]
    score = score + jnp.sum(mask_tb[1:] * (trans_sc + emit_sc), axis=0)
    seq_ends = jnp.sum(mask_tb, axis=0).astype(jnp.int32) - 1
    last_tags = tags_tb[seq_ends, jnp.arange(B)]
    score = score + params["crf_end"][last_tags]

    llh = jnp.sum(score - denom[:, 0])
    n_tok = jnp.sum(maskf)
    return -llh / n_tok


# ----------------------------- main -----------------------------

if __name__ == "__main__":
    B, T = 2, 8
    vocab_size, E, H, C = 50, 16, 32, 5

    key = jax.random.PRNGKey(0)
    kp, kids, ktags = jax.random.split(key, 3)
    params = init_params(kp, vocab_size, E, H, C)

    lengths = jnp.array([8, 5], dtype=jnp.int32)
    pos = jnp.arange(T)[None, :]
    input_mask = (pos < lengths[:, None]).astype(jnp.int32)             # [B,T]
    ids = jax.random.randint(kids, (B, T), 0, vocab_size - 1)
    input_ids = jnp.where(input_mask > 0, ids, vocab_size - 1).astype(jnp.int32)
    label_ids = jax.random.randint(ktags, (B, T), 0, C).astype(jnp.int32)

    loss = birnn_crf_loss(params, input_ids, input_mask, label_ids)
    jax.block_until_ready(loss)
    assert loss.shape == () and jnp.isfinite(loss)
    print("KERNEL_OK")
</pallas_src>

<mosaic_0001>
module attributes {stable_mosaic.version = 11 : i64} {
  func.func @_birnn_crf_kernel(%arg0: i32, %arg1: memref<8x2x16xf32, #tpu.memory_space<vmem>>, %arg2: memref<16x256xf32, #tpu.memory_space<vmem>>, %arg3: memref<32x128xf32, #tpu.memory_space<vmem>>, %arg4: memref<32x128xf32, #tpu.memory_space<vmem>>, %arg5: memref<1x256xf32, #tpu.memory_space<vmem>>, %arg6: memref<32x5xf32, #tpu.memory_space<vmem>>, %arg7: memref<32x5xf32, #tpu.memory_space<vmem>>, %arg8: memref<1x5xf32, #tpu.memory_space<vmem>>, %arg9: memref<8x2x1xf32, #tpu.memory_space<vmem>>, %arg10: memref<1x5xf32, #tpu.memory_space<vmem>>, %arg11: memref<1x5xf32, #tpu.memory_space<vmem>>, %arg12: memref<5x5xf32, #tpu.memory_space<vmem>>, %arg13: memref<8x2x5xf32, #tpu.memory_space<vmem>>, %arg14: memref<2x1xf32, #tpu.memory_space<vmem>>) attributes {dimension_semantics = [#tpu.dimension_semantics<arbitrary>], iteration_bounds = array<i64: 1>, scalar_prefetch = 0 : i64, scratch_operands = 0 : i64, tpu.core_type = #tpu.core_type<tc>, window_params = [{pipeline_mode = #tpu.pipeline_mode<synchronous>, transform_indices = @transform_0, window_bounds = array<i64: 8, 2, 16>}, {pipeline_mode = #tpu.pipeline_mode<synchronous>, transform_indices = @transform_1, window_bounds = array<i64: 16, 256>}, {pipeline_mode = #tpu.pipeline_mode<synchronous>, transform_indices = @transform_2, window_bounds = array<i64: 32, 128>}, {pipeline_mode = #tpu.pipeline_mode<synchronous>, transform_indices = @transform_3, window_bounds = array<i64: 32, 128>}, {pipeline_mode = #tpu.pipeline_mode<synchronous>, transform_indices = @transform_4, window_bounds = array<i64: 1, 256>}, {pipeline_mode = #tpu.pipeline_mode<synchronous>, transform_indices = @transform_5, window_bounds = array<i64: 32, 5>}, {pipeline_mode = #tpu.pipeline_mode<synchronous>, transform_indices = @transform_6, window_bounds = array<i64: 32, 5>}, {pipeline_mode = #tpu.pipeline_mode<synchronous>, transform_indices = @transform_7, window_bounds = array<i64: 1, 5>}, {pipeline_mode = #tpu.pipeline_mode<synchronous>, transform_indices = @transform_8, window_bounds = array<i64: 8, 2, 1>}, {pipeline_mode = #tpu.pipeline_mode<synchronous>, transform_indices = @transform_9, window_bounds = array<i64: 1, 5>}, {pipeline_mode = #tpu.pipeline_mode<synchronous>, transform_indices = @transform_10, window_bounds = array<i64: 1, 5>}, {pipeline_mode = #tpu.pipeline_mode<synchronous>, transform_indices = @transform_11, window_bounds = array<i64: 5, 5>}, {pipeline_mode = #tpu.pipeline_mode<synchronous>, transform_indices = @transform_12, window_bounds = array<i64: 8, 2, 5>}, {pipeline_mode = #tpu.pipeline_mode<synchronous>, transform_indices = @transform_13, window_bounds = array<i64: 2, 1>}]} {
    %c0 = arith.constant 0 : index
    %c0_0 = arith.constant 0 : index
    %0 = vector.load %arg2[%c0, %c0_0] : memref<16x256xf32, #tpu.memory_space<vmem>>, vector<16x256xf32>
    %c0_1 = arith.constant 0 : index
    %c0_2 = arith.constant 0 : index
    %1 = vector.load %arg5[%c0_1, %c0_2] : memref<1x256xf32, #tpu.memory_space<vmem>>, vector<1x256xf32>
    %c0_3 = arith.constant 0 : index
    %c0_4 = arith.constant 0 : index
    %2 = vector.load %arg3[%c0_3, %c0_4] : memref<32x128xf32, #tpu.memory_space<vmem>>, vector<32x128xf32>
    %c0_5 = arith.constant 0 : index
    %c0_6 = arith.constant 0 : index
    %3 = vector.load %arg4[%c0_5, %c0_6] : memref<32x128xf32, #tpu.memory_space<vmem>>, vector<32x128xf32>
    %c0_7 = arith.constant 0 : index
    %c0_8 = arith.constant 0 : index
    %c0_9 = arith.constant 0 : index
    %4 = vector.load %arg1[%c0_7, %c0_8, %c0_9] : memref<8x2x16xf32, #tpu.memory_space<vmem>>, vector<1x2x16xf32>
    %5 = vector.shape_cast %4 : vector<1x2x16xf32> to vector<2x16xf32>
    %cst = arith.constant dense<0.000000e+00> : vector<2x256xf32>
    %6 = tpu.matmul %5, %0, %cst {dimension_numbers = #tpu.dot_dimension_numbers<[1], [0], [0], [1], [0, 0, 1, 1], [], []>} : vector<2x16xf32>, vector<16x256xf32>, vector<2x256xf32> -> vector<2x256xf32>
    %7 = vector.broadcast %1 : vector<1x256xf32> to vector<2x256xf32>
    %8 = arith.addf %6, %7 : vector<2x256xf32>
    %c1 = arith.constant 1 : index
    %c0_10 = arith.constant 0 : index
    %c0_11 = arith.constant 0 : index
    %9 = vector.load %arg1[%c1, %c0_10, %c0_11] : memref<8x2x16xf32, #tpu.memory_space<vmem>>, vector<1x2x16xf32>
    %10 = vector.shape_cast %9 : vector<1x2x16xf32> to vector<2x16xf32>
    %cst_12 = arith.constant dense<0.000000e+00> : vector<2x256xf32>
    %11 = tpu.matmul %10, %0, %cst_12 {dimension_numbers = #tpu.dot_dimension_numbers<[1], [0], [0], [1], [0, 0, 1, 1], [], []>} : vector<2x16xf32>, vector<16x256xf32>, vector<2x256xf32> -> vector<2x256xf32>
    %12 = vector.broadcast %1 : vector<1x256xf32> to vector<2x256xf32>
    %13 = arith.addf %11, %12 : vector<2x256xf32>
    %c2 = arith.constant 2 : index
    %c0_13 = arith.constant 0 : index
    %c0_14 = arith.constant 0 : index
    %14 = vector.load %arg1[%c2, %c0_13, %c0_14] : memref<8x2x16xf32, #tpu.memory_space<vmem>>, vector<1x2x16xf32>
    %15 = vector.shape_cast %14 : vector<1x2x16xf32> to vector<2x16xf32>
    %cst_15 = arith.constant dense<0.000000e+00> : vector<2x256xf32>
    %16 = tpu.matmul %15, %0, %cst_15 {dimension_numbers = #tpu.dot_dimension_numbers<[1], [0], [0], [1], [0, 0, 1, 1], [], []>} : vector<2x16xf32>, vector<16x256xf32>, vector<2x256xf32> -> vector<2x256xf32>
    %17 = vector.broadcast %1 : vector<1x256xf32> to vector<2x256xf32>
    %18 = arith.addf %16, %17 : vector<2x256xf32>
    %c3 = arith.constant 3 : index
    %c0_16 = arith.constant 0 : index
    %c0_17 = arith.constant 0 : index
    %19 = vector.load %arg1[%c3, %c0_16, %c0_17] : memref<8x2x16xf32, #tpu.memory_space<vmem>>, vector<1x2x16xf32>
    %20 = vector.shape_cast %19 : vector<1x2x16xf32> to vector<2x16xf32>
    %cst_18 = arith.constant dense<0.000000e+00> : vector<2x256xf32>
    %21 = tpu.matmul %20, %0, %cst_18 {dimension_numbers = #tpu.dot_dimension_numbers<[1], [0], [0], [1], [0, 0, 1, 1], [], []>} : vector<2x16xf32>, vector<16x256xf32>, vector<2x256xf32> -> vector<2x256xf32>
    %22 = vector.broadcast %1 : vector<1x256xf32> to vector<2x256xf32>
    %23 = arith.addf %21, %22 : vector<2x256xf32>
    %c4 = arith.constant 4 : index
    %c0_19 = arith.constant 0 : index
    %c0_20 = arith.constant 0 : index
    %24 = vector.load %arg1[%c4, %c0_19, %c0_20] : memref<8x2x16xf32, #tpu.memory_space<vmem>>, vector<1x2x16xf32>
    %25 = vector.shape_cast %24 : vector<1x2x16xf32> to vector<2x16xf32>
    %cst_21 = arith.constant dense<0.000000e+00> : vector<2x256xf32>
    %26 = tpu.matmul %25, %0, %cst_21 {dimension_numbers = #tpu.dot_dimension_numbers<[1], [0], [0], [1], [0, 0, 1, 1], [], []>} : vector<2x16xf32>, vector<16x256xf32>, vector<2x256xf32> -> vector<2x256xf32>
    %27 = vector.broadcast %1 : vector<1x256xf32> to vector<2x256xf32>
    %28 = arith.addf %26, %27 : vector<2x256xf32>
    %c5 = arith.constant 5 : index
    %c0_22 = arith.constant 0 : index
    %c0_23 = arith.constant 0 : index
    %29 = vector.load %arg1[%c5, %c0_22, %c0_23] : memref<8x2x16xf32, #tpu.memory_space<vmem>>, vector<1x2x16xf32>
    %30 = vector.shape_cast %29 : vector<1x2x16xf32> to vector<2x16xf32>
    %cst_24 = arith.constant dense<0.000000e+00> : vector<2x256xf32>
    %31 = tpu.matmul %30, %0, %cst_24 {dimension_numbers = #tpu.dot_dimension_numbers<[1], [0], [0], [1], [0, 0, 1, 1], [], []>} : vector<2x16xf32>, vector<16x256xf32>, vector<2x256xf32> -> vector<2x256xf32>
    %32 = vector.broadcast %1 : vector<1x256xf32> to vector<2x256xf32>
    %33 = arith.addf %31, %32 : vector<2x256xf32>
    %c6 = arith.constant 6 : index
    %c0_25 = arith.constant 0 : index
    %c0_26 = arith.constant 0 : index
    %34 = vector.load %arg1[%c6, %c0_25, %c0_26] : memref<8x2x16xf32, #tpu.memory_space<vmem>>, vector<1x2x16xf32>
    %35 = vector.shape_cast %34 : vector<1x2x16xf32> to vector<2x16xf32>
    %cst_27 = arith.constant dense<0.000000e+00> : vector<2x256xf32>
    %36 = tpu.matmul %35, %0, %cst_27 {dimension_numbers = #tpu.dot_dimension_numbers<[1], [0], [0], [1], [0, 0, 1, 1], [], []>} : vector<2x16xf32>, vector<16x256xf32>, vector<2x256xf32> -> vector<2x256xf32>
    %37 = vector.broadcast %1 : vector<1x256xf32> to vector<2x256xf32>
    %38 = arith.addf %36, %37 : vector<2x256xf32>
    %c7 = arith.constant 7 : index
    %c0_28 = arith.constant 0 : index
    %c0_29 = arith.constant 0 : index
    %39 = vector.load %arg1[%c7, %c0_28, %c0_29] : memref<8x2x16xf32, #tpu.memory_space<vmem>>, vector<1x2x16xf32>
    %40 = vector.shape_cast %39 : vector<1x2x16xf32> to vector<2x16xf32>
    %cst_30 = arith.constant dense<0.000000e+00> : vector<2x256xf32>
    %41 = tpu.matmul %40, %0, %cst_30 {dimension_numbers = #tpu.dot_dimension_numbers<[1], [0], [0], [1], [0, 0, 1, 1], [], []>} : vector<2x16xf32>, vector<16x256xf32>, vector<2x256xf32> -> vector<2x256xf32>
    %42 = vector.broadcast %1 : vector<1x256xf32> to vector<2x256xf32>
    %43 = arith.addf %41, %42 : vector<2x256xf32>
    %cst_31 = arith.constant 0.000000e+00 : f32
    %44 = vector.broadcast %cst_31 : f32 to vector<2x32xf32>
    %cst_32 = arith.constant 0.000000e+00 : f32
    %45 = vector.broadcast %cst_32 : f32 to vector<2x32xf32>
    %46 = vector.extract_strided_slice %8 {offsets = [0, 0], sizes = [2, 128], strides = [1, 1]} : vector<2x256xf32> to vector<2x128xf32>
    %cst_33 = arith.constant dense<0.000000e+00> : vector<2x128xf32>
    %47 = tpu.matmul %44, %2, %cst_33 {dimension_numbers = #tpu.dot_dimension_numbers<[1], [0], [0], [1], [0, 0, 1, 1], [], []>} : vector<2x32xf32>, vector<32x128xf32>, vector<2x128xf32> -> vector<2x128xf32>
    %48 = arith.addf %46, %47 : vector<2x128xf32>
    %49 = vector.extract_strided_slice %48 {offsets = [0, 0], sizes = [2, 32], strides = [1, 1]} : vector<2x128xf32> to vector<2x32xf32>
    %50 = arith.negf %49 : vector<2x32xf32>
    %51 = math.exp %50 : vector<2x32xf32>
    %cst_34 = arith.constant 1.000000e+00 : f32
    %52 = vector.broadcast %cst_34 : f32 to vector<2x32xf32>
    %53 = arith.addf %52, %51 : vector<2x32xf32>
    %54 = arith.divf %52, %53 : vector<2x32xf32>
    %55 = vector.extract_strided_slice %48 {offsets = [0, 32], sizes = [2, 32], strides = [1, 1]} : vector<2x128xf32> to vector<2x32xf32>
    %56 = arith.negf %55 : vector<2x32xf32>
    %57 = math.exp %56 : vector<2x32xf32>
    %cst_35 = arith.constant 1.000000e+00 : f32
    %58 = vector.broadcast %cst_35 : f32 to vector<2x32xf32>
    %59 = arith.addf %58, %57 : vector<2x32xf32>
    %60 = arith.divf %58, %59 : vector<2x32xf32>
    %61 = vector.extract_strided_slice %48 {offsets = [0, 64], sizes = [2, 32], strides = [1, 1]} : vector<2x128xf32> to vector<2x32xf32>
    %62 = math.tanh %61 : vector<2x32xf32>
    %63 = vector.extract_strided_slice %48 {offsets = [0, 96], sizes = [2, 32], strides = [1, 1]} : vector<2x128xf32> to vector<2x32xf32>
    %64 = arith.negf %63 : vector<2x32xf32>
    %65 = math.exp %64 : vector<2x32xf32>
    %cst_36 = arith.constant 1.000000e+00 : f32
    %66 = vector.broadcast %cst_36 : f32 to vector<2x32xf32>
    %67 = arith.addf %66, %65 : vector<2x32xf32>
    %68 = arith.divf %66, %67 : vector<2x32xf32>
    %69 = arith.mulf %60, %45 : vector<2x32xf32>
    %70 = arith.mulf %54, %62 : vector<2x32xf32>
    %71 = arith.addf %69, %70 : vector<2x32xf32>
    %72 = math.tanh %71 : vector<2x32xf32>
    %73 = arith.mulf %68, %72 : vector<2x32xf32>
    %74 = vector.extract_strided_slice %13 {offsets = [0, 0], sizes = [2, 128], strides = [1, 1]} : vector<2x256xf32> to vector<2x128xf32>
    %cst_37 = arith.constant dense<0.000000e+00> : vector<2x128xf32>
    %75 = tpu.matmul %73, %2, %cst_37 {dimension_numbers = #tpu.dot_dimension_numbers<[1], [0], [0], [1], [0, 0, 1, 1], [], []>} : vector<2x32xf32>, vector<32x128xf32>, vector<2x128xf32> -> vector<2x128xf32>
    %76 = arith.addf %74, %75 : vector<2x128xf32>
    %77 = vector.extract_strided_slice %76 {offsets = [0, 0], sizes = [2, 32], strides = [1, 1]} : vector<2x128xf32> to vector<2x32xf32>
    %78 = arith.negf %77 : vector<2x32xf32>
    %79 = math.exp %78 : vector<2x32xf32>
    %cst_38 = arith.constant 1.000000e+00 : f32
    %80 = vector.broadcast %cst_38 : f32 to vector<2x32xf32>
    %81 = arith.addf %80, %79 : vector<2x32xf32>
    %82 = arith.divf %80, %81 : vector<2x32xf32>
    %83 = vector.extract_strided_slice %76 {offsets = [0, 32], sizes = [2, 32], strides = [1, 1]} : vector<2x128xf32> to vector<2x32xf32>
    %84 = arith.negf %83 : vector<2x32xf32>
    %85 = math.exp %84 : vector<2x32xf32>
    %cst_39 = arith.constant 1.000000e+00 : f32
    %86 = vector.broadcast %cst_39 : f32 to vector<2x32xf32>
    %87 = arith.addf %86, %85 : vector<2x32xf32>
    %88 = arith.divf %86, %87 : vector<2x32xf32>
    %89 = vector.extract_strided_slice %76 {offsets = [0, 64], sizes = [2, 32], strides = [1, 1]} : vector<2x128xf32> to vector<2x32xf32>
    %90 = math.tanh %89 : vector<2x32xf32>
    %91 = vector.extract_strided_slice %76 {offsets = [0, 96], sizes = [2, 32], strides = [1, 1]} : vector<2x128xf32> to vector<2x32xf32>
    %92 = arith.negf %91 : vector<2x32xf32>
    %93 = math.exp %92 : vector<2x32xf32>
    %cst_40 = arith.constant 1.000000e+00 : f32
    %94 = vector.broadcast %cst_40 : f32 to vector<2x32xf32>
    %95 = arith.addf %94, %93 : vector<2x32xf32>
    %96 = arith.divf %94, %95 : vector<2x32xf32>
    %97 = arith.mulf %88, %71 : vector<2x32xf32>
    %98 = arith.mulf %82, %90 : vector<2x32xf32>
    %99 = arith.addf %97, %98 : vector<2x32xf32>
    %100 = math.tanh %99 : vector<2x32xf32>
    %101 = arith.mulf %96, %100 : vector<2x32xf32>
    %102 = vector.extract_strided_slice %18 {offsets = [0, 0], sizes = [2, 128], strides = [1, 1]} : vector<2x256xf32> to vector<2x128xf32>
    %cst_41 = arith.constant dense<0.000000e+00> : vector<2x128xf32>
    %103 = tpu.matmul %101, %2, %cst_41 {dimension_numbers = #tpu.dot_dimension_numbers<[1], [0], [0], [1], [0, 0, 1, 1], [], []>} : vector<2x32xf32>, vector<32x128xf32>, vector<2x128xf32> -> vector<2x128xf32>
    %104 = arith.addf %102, %103 : vector<2x128xf32>
    %105 = vector.extract_strided_slice %104 {offsets = [0, 0], sizes = [2, 32], strides = [1, 1]} : vector<2x128xf32> to vector<2x32xf32>
    %106 = arith.negf %105 : vector<2x32xf32>
    %107 = math.exp %106 : vector<2x32xf32>
    %cst_42 = arith.constant 1.000000e+00 : f32
    %108 = vector.broadcast %cst_42 : f32 to vector<2x32xf32>
    %109 = arith.addf %108, %107 : vector<2x32xf32>
    %110 = arith.divf %108, %109 : vector<2x32xf32>
    %111 = vector.extract_strided_slice %104 {offsets = [0, 32], sizes = [2, 32], strides = [1, 1]} : vector<2x128xf32> to vector<2x32xf32>
    %112 = arith.negf %111 : vector<2x32xf32>
    %113 = math.exp %112 : vector<2x32xf32>
    %cst_43 = arith.constant 1.000000e+00 : f32
    %114 = vector.broadcast %cst_43 : f32 to vector<2x32xf32>
    %115 = arith.addf %114, %113 : vector<2x32xf32>
    %116 = arith.divf %114, %115 : vector<2x32xf32>
    %117 = vector.extract_strided_slice %104 {offsets = [0, 64], sizes = [2, 32], strides = [1, 1]} : vector<2x128xf32> to vector<2x32xf32>
    %118 = math.tanh %117 : vector<2x32xf32>
    %119 = vector.extract_strided_slice %104 {offsets = [0, 96], sizes = [2, 32], strides = [1, 1]} : vector<2x128xf32> to vector<2x32xf32>
    %120 = arith.negf %119 : vector<2x32xf32>
    %121 = math.exp %120 : vector<2x32xf32>
    %cst_44 = arith.constant 1.000000e+00 : f32
    %122 = vector.broadcast %cst_44 : f32 to vector<2x32xf32>
    %123 = arith.addf %122, %121 : vector<2x32xf32>
    %124 = arith.divf %122, %123 : vector<2x32xf32>
    %125 = arith.mulf %116, %99 : vector<2x32xf32>
    %126 = arith.mulf %110, %118 : vector<2x32xf32>
    %127 = arith.addf %125, %126 : vector<2x32xf32>
    %128 = math.tanh %127 : vector<2x32xf32>
    %129 = arith.mulf %124, %128 : vector<2x32xf32>
    %130 = vector.extract_strided_slice %23 {offsets = [0, 0], sizes = [2, 128], strides = [1, 1]} : vector<2x256xf32> to vector<2x128xf32>
    %cst_45 = arith.constant dense<0.000000e+00> : vector<2x128xf32>
    %131 = tpu.matmul %129, %2, %cst_45 {dimension_numbers = #tpu.dot_dimension_numbers<[1], [0], [0], [1], [0, 0, 1, 1], [], []>} : vector<2x32xf32>, vector<32x128xf32>, vector<2x128xf32> -> vector<2x128xf32>
    %132 = arith.addf %130, %131 : vector<2x128xf32>
    %133 = vector.extract_strided_slice %132 {offsets = [0, 0], sizes = [2, 32], strides = [1, 1]} : vector<2x128xf32> to vector<2x32xf32>
    %134 = arith.negf %133 : vector<2x32xf32>
    %135 = math.exp %134 : vector<2x32xf32>
    %cst_46 = arith.constant 1.000000e+00 : f32
    %136 = vector.broadcast %cst_46 : f32 to vector<2x32xf32>
    %137 = arith.addf %136, %135 : vector<2x32xf32>
    %138 = arith.divf %136, %137 : vector<2x32xf32>
    %139 = vector.extract_strided_slice %132 {offsets = [0, 32], sizes = [2, 32], strides = [1, 1]} : vector<2x128xf32> to vector<2x32xf32>
    %140 = arith.negf %139 : vector<2x32xf32>
    %141 = math.exp %140 : vector<2x32xf32>
    %cst_47 = arith.constant 1.000000e+00 : f32
    %142 = vector.broadcast %cst_47 : f32 to vector<2x32xf32>
    %143 = arith.addf %142, %141 : vector<2x32xf32>
    %144 = arith.divf %142, %143 : vector<2x32xf32>
    %145 = vector.extract_strided_slice %132 {offsets = [0, 64], sizes = [2, 32], strides = [1, 1]} : vector<2x128xf32> to vector<2x32xf32>
    %146 = math.tanh %145 : vector<2x32xf32>
    %147 = vector.extract_strided_slice %132 {offsets = [0, 96], sizes = [2, 32], strides = [1, 1]} : vector<2x128xf32> to vector<2x32xf32>
    %148 = arith.negf %147 : vector<2x32xf32>
    %149 = math.exp %148 : vector<2x32xf32>
    %cst_48 = arith.constant 1.000000e+00 : f32
    %150 = vector.broadcast %cst_48 : f32 to vector<2x32xf32>
    %151 = arith.addf %150, %149 : vector<2x32xf32>
    %152 = arith.divf %150, %151 : vector<2x32xf32>
    %153 = arith.mulf %144, %127 : vector<2x32xf32>
    %154 = arith.mulf %138, %146 : vector<2x32xf32>
    %155 = arith.addf %153, %154 : vector<2x32xf32>
    %156 = math.tanh %155 : vector<2x32xf32>
    %157 = arith.mulf %152, %156 : vector<2x32xf32>
    %158 = vector.extract_strided_slice %28 {offsets = [0, 0], sizes = [2, 128], strides = [1, 1]} : vector<2x256xf32> to vector<2x128xf32>
    %cst_49 = arith.constant dense<0.000000e+00> : vector<2x128xf32>
    %159 = tpu.matmul %157, %2, %cst_49 {dimension_numbers = #tpu.dot_dimension_numbers<[1], [0], [0], [1], [0, 0, 1, 1], [], []>} : vector<2x32xf32>, vector<32x128xf32>, vector<2x128xf32> -> vector<2x128xf32>
    %160 = arith.addf %158, %159 : vector<2x128xf32>
    %161 = vector.extract_strided_slice %160 {offsets = [0, 0], sizes = [2, 32], strides = [1, 1]} : vector<2x128xf32> to vector<2x32xf32>
    %162 = arith.negf %161 : vector<2x32xf32>
    %163 = math.exp %162 : vector<2x32xf32>
    %cst_50 = arith.constant 1.000000e+00 : f32
    %164 = vector.broadcast %cst_50 : f32 to vector<2x32xf32>
    %165 = arith.addf %164, %163 : vector<2x32xf32>
    %166 = arith.divf %164, %165 : vector<2x32xf32>
    %167 = vector.extract_strided_slice %160 {offsets = [0, 32], sizes = [2, 32], strides = [1, 1]} : vector<2x128xf32> to vector<2x32xf32>
    %168 = arith.negf %167 : vector<2x32xf32>
    %169 = math.exp %168 : vector<2x32xf32>
    %cst_51 = arith.constant 1.000000e+00 : f32
    %170 = vector.broadcast %cst_51 : f32 to vector<2x32xf32>
    %171 = arith.addf %170, %169 : vector<2x32xf32>
    %172 = arith.divf %170, %171 : vector<2x32xf32>
    %173 = vector.extract_strided_slice %160 {offsets = [0, 64], sizes = [2, 32], strides = [1, 1]} : vector<2x128xf32> to vector<2x32xf32>
    %174 = math.tanh %173 : vector<2x32xf32>
    %175 = vector.extract_strided_slice %160 {offsets = [0, 96], sizes = [2, 32], strides = [1, 1]} : vector<2x128xf32> to vector<2x32xf32>
    %176 = arith.negf %175 : vector<2x32xf32>
    %177 = math.exp %176 : vector<2x32xf32>
    %cst_52 = arith.constant 1.000000e+00 : f32
    %178 = vector.broadcast %cst_52 : f32 to vector<2x32xf32>
    %179 = arith.addf %178, %177 : vector<2x32xf32>
    %180 = arith.divf %178, %179 : vector<2x32xf32>
    %181 = arith.mulf %172, %155 : vector<2x32xf32>
    %182 = arith.mulf %166, %174 : vector<2x32xf32>
    %183 = arith.addf %181, %182 : vector<2x32xf32>
    %184 = math.tanh %183 : vector<2x32xf32>
    %185 = arith.mulf %180, %184 : vector<2x32xf32>
    %186 = vector.extract_strided_slice %33 {offsets = [0, 0], sizes = [2, 128], strides = [1, 1]} : vector<2x256xf32> to vector<2x128xf32>
    %cst_53 = arith.constant dense<0.000000e+00> : vector<2x128xf32>
    %187 = tpu.matmul %185, %2, %cst_53 {dimension_numbers = #tpu.dot_dimension_numbers<[1], [0], [0], [1], [0, 0, 1, 1], [], []>} : vector<2x32xf32>, vector<32x128xf32>, vector<2x128xf32> -> vector<2x128xf32>
    %188 = arith.addf %186, %187 : vector<2x128xf32>
    %189 = vector.extract_strided_slice %188 {offsets = [0, 0], sizes = [2, 32], strides = [1, 1]} : vector<2x128xf32> to vector<2x32xf32>
    %190 = arith.negf %189 : vector<2x32xf32>
    %191 = math.exp %190 : vector<2x32xf32>
    %cst_54 = arith.constant 1.000000e+00 : f32
    %192 = vector.broadcast %cst_54 : f32 to vector<2x32xf32>
    %193 = arith.addf %192, %191 : vector<2x32xf32>
    %194 = arith.divf %192, %193 : vector<2x32xf32>
    %195 = vector.extract_strided_slice %188 {offsets = [0, 32], sizes = [2, 32], strides = [1, 1]} : vector<2x128xf32> to vector<2x32xf32>
    %196 = arith.negf %195 : vector<2x32xf32>
    %197 = math.exp %196 : vector<2x32xf32>
    %cst_55 = arith.constant 1.000000e+00 : f32
    %198 = vector.broadcast %cst_55 : f32 to vector<2x32xf32>
    %199 = arith.addf %198, %197 : vector<2x32xf32>
    %200 = arith.divf %198, %199 : vector<2x32xf32>
    %201 = vector.extract_strided_slice %188 {offsets = [0, 64], sizes = [2, 32], strides = [1, 1]} : vector<2x128xf32> to vector<2x32xf32>
    %202 = math.tanh %201 : vector<2x32xf32>
    %203 = vector.extract_strided_slice %188 {offsets = [0, 96], sizes = [2, 32], strides = [1, 1]} : vector<2x128xf32> to vector<2x32xf32>
    %204 = arith.negf %203 : vector<2x32xf32>
    %205 = math.exp %204 : vector<2x32xf32>
    %cst_56 = arith.constant 1.000000e+00 : f32
    %206 = vector.broadcast %cst_56 : f32 to vector<2x32xf32>
    %207 = arith.addf %206, %205 : vector<2x32xf32>
    %208 = arith.divf %206, %207 : vector<2x32xf32>
    %209 = arith.mulf %200, %183 : vector<2x32xf32>
    %210 = arith.mulf %194, %202 : vector<2x32xf32>
    %211 = arith.addf %209, %210 : vector<2x32xf32>
    %212 = math.tanh %211 : vector<2x32xf32>
    %213 = arith.mulf %208, %212 : vector<2x32xf32>
    %214 = vector.extract_strided_slice %38 {offsets = [0, 0], sizes = [2, 128], strides = [1, 1]} : vector<2x256xf32> to vector<2x128xf32>
    %cst_57 = arith.constant dense<0.000000e+00> : vector<2x128xf32>
    %215 = tpu.matmul %213, %2, %cst_57 {dimension_numbers = #tpu.dot_dimension_numbers<[1], [0], [0], [1], [0, 0, 1, 1], [], []>} : vector<2x32xf32>, vector<32x128xf32>, vector<2x128xf32> -> vector<2x128xf32>
    %216 = arith.addf %214, %215 : vector<2x128xf32>
    %217 = vector.extract_strided_slice %216 {offsets = [0, 0], sizes = [2, 32], strides = [1, 1]} : vector<2x128xf32> to vector<2x32xf32>
    %218 = arith.negf %217 : vector<2x32xf32>
    %219 = math.exp %218 : vector<2x32xf32>
    %cst_58 = arith.constant 1.000000e+00 : f32
    %220 = vector.broadcast %cst_58 : f32 to vector<2x32xf32>
    %221 = arith.addf %220, %219 : vector<2x32xf32>
    %222 = arith.divf %220, %221 : vector<2x32xf32>
    %223 = vector.extract_strided_slice %216 {offsets = [0, 32], sizes = [2, 32], strides = [1, 1]} : vector<2x128xf32> to vector<2x32xf32>
    %224 = arith.negf %223 : vector<2x32xf32>
    %225 = math.exp %224 : vector<2x32xf32>
    %cst_59 = arith.constant 1.000000e+00 : f32
    %226 = vector.broadcast %cst_59 : f32 to vector<2x32xf32>
    %227 = arith.addf %226, %225 : vector<2x32xf32>
    %228 = arith.divf %226, %227 : vector<2x32xf32>
    %229 = vector.extract_strided_slice %216 {offsets = [0, 64], sizes = [2, 32], strides = [1, 1]} : vector<2x128xf32> to vector<2x32xf32>
    %230 = math.tanh %229 : vector<2x32xf32>
    %231 = vector.extract_strided_slice %216 {offsets = [0, 96], sizes = [2, 32], strides = [1, 1]} : vector<2x128xf32> to vector<2x32xf32>
    %232 = arith.negf %231 : vector<2x32xf32>
    %233 = math.exp %232 : vector<2x32xf32>
    %cst_60 = arith.constant 1.000000e+00 : f32
    %234 = vector.broadcast %cst_60 : f32 to vector<2x32xf32>
    %235 = arith.addf %234, %233 : vector<2x32xf32>
    %236 = arith.divf %234, %235 : vector<2x32xf32>
    %237 = arith.mulf %228, %211 : vector<2x32xf32>
    %238 = arith.mulf %222, %230 : vector<2x32xf32>
    %239 = arith.addf %237, %238 : vector<2x32xf32>
    %240 = math.tanh %239 : vector<2x32xf32>
    %241 = arith.mulf %236, %240 : vector<2x32xf32>
    %242 = vector.extract_strided_slice %43 {offsets = [0, 0], sizes = [2, 128], strides = [1, 1]} : vector<2x256xf32> to vector<2x128xf32>
    %cst_61 = arith.constant dense<0.000000e+00> : vector<2x128xf32>
    %243 = tpu.matmul %241, %2, %cst_61 {dimension_numbers = #tpu.dot_dimension_numbers<[1], [0], [0], [1], [0, 0, 1, 1], [], []>} : vector<2x32xf32>, vector<32x128xf32>, vector<2x128xf32> -> vector<2x128xf32>
    %244 = arith.addf %242, %243 : vector<2x128xf32>
    %245 = vector.extract_strided_slice %244 {offsets = [0, 0], sizes = [2, 32], strides = [1, 1]} : vector<2x128xf32> to vector<2x32xf32>
    %246 = arith.negf %245 : vector<2x32xf32>
    %247 = math.exp %246 : vector<2x32xf32>
    %cst_62 = arith.constant 1.000000e+00 : f32
    %248 = vector.broadcast %cst_62 : f32 to vector<2x32xf32>
    %249 = arith.addf %248, %247 : vector<2x32xf32>
    %250 = arith.divf %248, %249 : vector<2x32xf32>
    %251 = vector.extract_strided_slice %244 {offsets = [0, 32], sizes = [2, 32], strides = [1, 1]} : vector<2x128xf32> to vector<2x32xf32>
    %252 = arith.negf %251 : vector<2x32xf32>
    %253 = math.exp %252 : vector<2x32xf32>
    %cst_63 = arith.constant 1.000000e+00 : f32
    %254 = vector.broadcast %cst_63 : f32 to vector<2x32xf32>
    %255 = arith.addf %254, %253 : vector<2x32xf32>
    %256 = arith.divf %254, %255 : vector<2x32xf32>
    %257 = vector.extract_strided_slice %244 {offsets = [0, 64], sizes = [2, 32], strides = [1, 1]} : vector<2x128xf32> to vector<2x32xf32>
    %258 = math.tanh %257 : vector<2x32xf32>
    %259 = vector.extract_strided_slice %244 {offsets = [0, 96], sizes = [2, 32], strides = [1, 1]} : vector<2x128xf32> to vector<2x32xf32>
    %260 = arith.negf %259 : vector<2x32xf32>
    %261 = math.exp %260 : vector<2x32xf32>
    %cst_64 = arith.constant 1.000000e+00 : f32
    %262 = vector.broadcast %cst_64 : f32 to vector<2x32xf32>
    %263 = arith.addf %262, %261 : vector<2x32xf32>
    %264 = arith.divf %262, %263 : vector<2x32xf32>
    %265 = arith.mulf %256, %239 : vector<2x32xf32>
    %266 = arith.mulf %250, %258 : vector<2x32xf32>
    %267 = arith.addf %265, %266 : vector<2x32xf32>
    %268 = math.tanh %267 : vector<2x32xf32>
    %269 = arith.mulf %264, %268 : vector<2x32xf32>
    %cst_65 = arith.constant 0.000000e+00 : f32
    %270 = vector.broadcast %cst_65 : f32 to vector<2x32xf32>
    %cst_66 = arith.constant 0.000000e+00 : f32
    %271 = vector.broadcast %cst_66 : f32 to vector<2x32xf32>
    %272 = vector.extract_strided_slice %43 {offsets = [0, 128], sizes = [2, 128], strides = [1, 1]} : vector<2x256xf32> to vector<2x128xf32>
    %cst_67 = arith.constant dense<0.000000e+00> : vector<2x128xf32>
    %273 = tpu.matmul %270, %3, %cst_67 {dimension_numbers = #tpu.dot_dimension_numbers<[1], [0], [0], [1], [0, 0, 1, 1], [], []>} : vector<2x32xf32>, vector<32x128xf32>, vector<2x128xf32> -> vector<2x128xf32>
    %274 = arith.addf %272, %273 : vector<2x128xf32>
    %275 = vector.extract_strided_slice %274 {offsets = [0, 0], sizes = [2, 32], strides = [1, 1]} : vector<2x128xf32> to vector<2x32xf32>
    %276 = arith.negf %275 : vector<2x32xf32>
    %277 = math.exp %276 : vector<2x32xf32>
    %cst_68 = arith.constant 1.000000e+00 : f32
    %278 = vector.broadcast %cst_68 : f32 to vector<2x32xf32>
    %279 = arith.addf %278, %277 : vector<2x32xf32>
    %280 = arith.divf %278, %279 : vector<2x32xf32>
    %281 = vector.extract_strided_slice %274 {offsets = [0, 32], sizes = [2, 32], strides = [1, 1]} : vector<2x128xf32> to vector<2x32xf32>
    %282 = arith.negf %281 : vector<2x32xf32>
    %283 = math.exp %282 : vector<2x32xf32>
    %cst_69 = arith.constant 1.000000e+00 : f32
    %284 = vector.broadcast %cst_69 : f32 to vector<2x32xf32>
    %285 = arith.addf %284, %283 : vector<2x32xf32>
    %286 = arith.divf %284, %285 : vector<2x32xf32>
    %287 = vector.extract_strided_slice %274 {offsets = [0, 64], sizes = [2, 32], strides = [1, 1]} : vector<2x128xf32> to vector<2x32xf32>
    %288 = math.tanh %287 : vector<2x32xf32>
    %289 = vector.extract_strided_slice %274 {offsets = [0, 96], sizes = [2, 32], strides = [1, 1]} : vector<2x128xf32> to vector<2x32xf32>
    %290 = arith.negf %289 : vector<2x32xf32>
    %291 = math.exp %290 : vector<2x32xf32>
    %cst_70 = arith.constant 1.000000e+00 : f32
    %292 = vector.broadcast %cst_70 : f32 to vector<2x32xf32>
    %293 = arith.addf %292, %291 : vector<2x32xf32>
    %294 = arith.divf %292, %293 : vector<2x32xf32>
    %295 = arith.mulf %286, %271 : vector<2x32xf32>
    %296 = arith.mulf %280, %288 : vector<2x32xf32>
    %297 = arith.addf %295, %296 : vector<2x32xf32>
    %298 = math.tanh %297 : vector<2x32xf32>
    %299 = arith.mulf %294, %298 : vector<2x32xf32>
    %300 = vector.extract_strided_slice %38 {offsets = [0, 128], sizes = [2, 128], strides = [1, 1]} : vector<2x256xf32> to vector<2x128xf32>
    %cst_71 = arith.constant dense<0.000000e+00> : vector<2x128xf32>
    %301 = tpu.matmul %299, %3, %cst_71 {dimension_numbers = #tpu.dot_dimension_numbers<[1], [0], [0], [1], [0, 0, 1, 1], [], []>} : vector<2x32xf32>, vector<32x128xf32>, vector<2x128xf32> -> vector<2x128xf32>
    %302 = arith.addf %300, %301 : vector<2x128xf32>
    %303 = vector.extract_strided_slice %302 {offsets = [0, 0], sizes = [2, 32], strides = [1, 1]} : vector<2x128xf32> to vector<2x32xf32>
    %304 = arith.negf %303 : vector<2x32xf32>
    %305 = math.exp %304 : vector<2x32xf32>
    %cst_72 = arith.constant 1.000000e+00 : f32
    %306 = vector.broadcast %cst_72 : f32 to vector<2x32xf32>
    %307 = arith.addf %306, %305 : vector<2x32xf32>
    %308 = arith.divf %306, %307 : vector<2x32xf32>
    %309 = vector.extract_strided_slice %302 {offsets = [0, 32], sizes = [2, 32], strides = [1, 1]} : vector<2x128xf32> to vector<2x32xf32>
    %310 = arith.negf %309 : vector<2x32xf32>
    %311 = math.exp %310 : vector<2x32xf32>
    %cst_73 = arith.constant 1.000000e+00 : f32
    %312 = vector.broadcast %cst_73 : f32 to vector<2x32xf32>
    %313 = arith.addf %312, %311 : vector<2x32xf32>
    %314 = arith.divf %312, %313 : vector<2x32xf32>
    %315 = vector.extract_strided_slice %302 {offsets = [0, 64], sizes = [2, 32], strides = [1, 1]} : vector<2x128xf32> to vector<2x32xf32>
    %316 = math.tanh %315 : vector<2x32xf32>
    %317 = vector.extract_strided_slice %302 {offsets = [0, 96], sizes = [2, 32], strides = [1, 1]} : vector<2x128xf32> to vector<2x32xf32>
    %318 = arith.negf %317 : vector<2x32xf32>
    %319 = math.exp %318 : vector<2x32xf32>
    %cst_74 = arith.constant 1.000000e+00 : f32
    %320 = vector.broadcast %cst_74 : f32 to vector<2x32xf32>
    %321 = arith.addf %320, %319 : vector<2x32xf32>
    %322 = arith.divf %320, %321 : vector<2x32xf32>
    %323 = arith.mulf %314, %297 : vector<2x32xf32>
    %324 = arith.mulf %308, %316 : vector<2x32xf32>
    %325 = arith.addf %323, %324 : vector<2x32xf32>
    %326 = math.tanh %325 : vector<2x32xf32>
    %327 = arith.mulf %322, %326 : vector<2x32xf32>
    %328 = vector.extract_strided_slice %33 {offsets = [0, 128], sizes = [2, 128], strides = [1, 1]} : vector<2x256xf32> to vector<2x128xf32>
    %cst_75 = arith.constant dense<0.000000e+00> : vector<2x128xf32>
    %329 = tpu.matmul %327, %3, %cst_75 {dimension_numbers = #tpu.dot_dimension_numbers<[1], [0], [0], [1], [0, 0, 1, 1], [], []>} : vector<2x32xf32>, vector<32x128xf32>, vector<2x128xf32> -> vector<2x128xf32>
    %330 = arith.addf %328, %329 : vector<2x128xf32>
    %331 = vector.extract_strided_slice %330 {offsets = [0, 0], sizes = [2, 32], strides = [1, 1]} : vector<2x128xf32> to vector<2x32xf32>
    %332 = arith.negf %331 : vector<2x32xf32>
    %333 = math.exp %332 : vector<2x32xf32>
    %cst_76 = arith.constant 1.000000e+00 : f32
    %334 = vector.broadcast %cst_76 : f32 to vector<2x32xf32>
    %335 = arith.addf %334, %333 : vector<2x32xf32>
    %336 = arith.divf %334, %335 : vector<2x32xf32>
    %337 = vector.extract_strided_slice %330 {offsets = [0, 32], sizes = [2, 32], strides = [1, 1]} : vector<2x128xf32> to vector<2x32xf32>
    %338 = arith.negf %337 : vector<2x32xf32>
    %339 = math.exp %338 : vector<2x32xf32>
    %cst_77 = arith.constant 1.000000e+00 : f32
    %340 = vector.broadcast %cst_77 : f32 to vector<2x32xf32>
    %341 = arith.addf %340, %339 : vector<2x32xf32>
    %342 = arith.divf %340, %341 : vector<2x32xf32>
    %343 = vector.extract_strided_slice %330 {offsets = [0, 64], sizes = [2, 32], strides = [1, 1]} : vector<2x128xf32> to vector<2x32xf32>
    %344 = math.tanh %343 : vector<2x32xf32>
    %345 = vector.extract_strided_slice %330 {offsets = [0, 96], sizes = [2, 32], strides = [1, 1]} : vector<2x128xf32> to vector<2x32xf32>
    %346 = arith.negf %345 : vector<2x32xf32>
    %347 = math.exp %346 : vector<2x32xf32>
    %cst_78 = arith.constant 1.000000e+00 : f32
    %348 = vector.broadcast %cst_78 : f32 to vector<2x32xf32>
    %349 = arith.addf %348, %347 : vector<2x32xf32>
    %350 = arith.divf %348, %349 : vector<2x32xf32>
    %351 = arith.mulf %342, %325 : vector<2x32xf32>
    %352 = arith.mulf %336, %344 : vector<2x32xf32>
    %353 = arith.addf %351, %352 : vector<2x32xf32>
    %354 = math.tanh %353 : vector<2x32xf32>
    %355 = arith.mulf %350, %354 : vector<2x32xf32>
    %356 = vector.extract_strided_slice %28 {offsets = [0, 128], sizes = [2, 128], strides = [1, 1]} : vector<2x256xf32> to vector<2x128xf32>
    %cst_79 = arith.constant dense<0.000000e+00> : vector<2x128xf32>
    %357 = tpu.matmul %355, %3, %cst_79 {dimension_numbers = #tpu.dot_dimension_numbers<[1], [0], [0], [1], [0, 0, 1, 1], [], []>} : vector<2x32xf32>, vector<32x128xf32>, vector<2x128xf32> -> vector<2x128xf32>
    %358 = arith.addf %356, %357 : vector<2x128xf32>
    %359 = vector.extract_strided_slice %358 {offsets = [0, 0], sizes = [2, 32], strides = [1, 1]} : vector<2x128xf32> to vector<2x32xf32>
    %360 = arith.negf %359 : vector<2x32xf32>
    %361 = math.exp %360 : vector<2x32xf32>
    %cst_80 = arith.constant 1.000000e+00 : f32
    %362 = vector.broadcast %cst_80 : f32 to vector<2x32xf32>
    %363 = arith.addf %362, %361 : vector<2x32xf32>
    %364 = arith.divf %362, %363 : vector<2x32xf32>
    %365 = vector.extract_strided_slice %358 {offsets = [0, 32], sizes = [2, 32], strides = [1, 1]} : vector<2x128xf32> to vector<2x32xf32>
    %366 = arith.negf %365 : vector<2x32xf32>
    %367 = math.exp %366 : vector<2x32xf32>
    %cst_81 = arith.constant 1.000000e+00 : f32
    %368 = vector.broadcast %cst_81 : f32 to vector<2x32xf32>
    %369 = arith.addf %368, %367 : vector<2x32xf32>
    %370 = arith.divf %368, %369 : vector<2x32xf32>
    %371 = vector.extract_strided_slice %358 {offsets = [0, 64], sizes = [2, 32], strides = [1, 1]} : vector<2x128xf32> to vector<2x32xf32>
    %372 = math.tanh %371 : vector<2x32xf32>
    %373 = vector.extract_strided_slice %358 {offsets = [0, 96], sizes = [2, 32], strides = [1, 1]} : vector<2x128xf32> to vector<2x32xf32>
    %374 = arith.negf %373 : vector<2x32xf32>
    %375 = math.exp %374 : vector<2x32xf32>
    %cst_82 = arith.constant 1.000000e+00 : f32
    %376 = vector.broadcast %cst_82 : f32 to vector<2x32xf32>
    %377 = arith.addf %376, %375 : vector<2x32xf32>
    %378 = arith.divf %376, %377 : vector<2x32xf32>
    %379 = arith.mulf %370, %353 : vector<2x32xf32>
    %380 = arith.mulf %364, %372 : vector<2x32xf32>
    %381 = arith.addf %379, %380 : vector<2x32xf32>
    %382 = math.tanh %381 : vector<2x32xf32>
    %383 = arith.mulf %378, %382 : vector<2x32xf32>
    %384 = vector.extract_strided_slice %23 {offsets = [0, 128], sizes = [2, 128], strides = [1, 1]} : vector<2x256xf32> to vector<2x128xf32>
    %cst_83 = arith.constant dense<0.000000e+00> : vector<2x128xf32>
    %385 = tpu.matmul %383, %3, %cst_83 {dimension_numbers = #tpu.dot_dimension_numbers<[1], [0], [0], [1], [0, 0, 1, 1], [], []>} : vector<2x32xf32>, vector<32x128xf32>, vector<2x128xf32> -> vector<2x128xf32>
    %386 = arith.addf %384, %385 : vector<2x128xf32>
    %387 = vector.extract_strided_slice %386 {offsets = [0, 0], sizes = [2, 32], strides = [1, 1]} : vector<2x128xf32> to vector<2x32xf32>
    %388 = arith.negf %387 : vector<2x32xf32>
    %389 = math.exp %388 : vector<2x32xf32>
    %cst_84 = arith.constant 1.000000e+00 : f32
    %390 = vector.broadcast %cst_84 : f32 to vector<2x32xf32>
    %391 = arith.addf %390, %389 : vector<2x32xf32>
    %392 = arith.divf %390, %391 : vector<2x32xf32>
    %393 = vector.extract_strided_slice %386 {offsets = [0, 32], sizes = [2, 32], strides = [1, 1]} : vector<2x128xf32> to vector<2x32xf32>
    %394 = arith.negf %393 : vector<2x32xf32>
    %395 = math.exp %394 : vector<2x32xf32>
    %cst_85 = arith.constant 1.000000e+00 : f32
    %396 = vector.broadcast %cst_85 : f32 to vector<2x32xf32>
    %397 = arith.addf %396, %395 : vector<2x32xf32>
    %398 = arith.divf %396, %397 : vector<2x32xf32>
    %399 = vector.extract_strided_slice %386 {offsets = [0, 64], sizes = [2, 32], strides = [1, 1]} : vector<2x128xf32> to vector<2x32xf32>
    %400 = math.tanh %399 : vector<2x32xf32>
    %401 = vector.extract_strided_slice %386 {offsets = [0, 96], sizes = [2, 32], strides = [1, 1]} : vector<2x128xf32> to vector<2x32xf32>
    %402 = arith.negf %401 : vector<2x32xf32>
    %403 = math.exp %402 : vector<2x32xf32>
    %cst_86 = arith.constant 1.000000e+00 : f32
    %404 = vector.broadcast %cst_86 : f32 to vector<2x32xf32>
    %405 = arith.addf %404, %403 : vector<2x32xf32>
    %406 = arith.divf %404, %405 : vector<2x32xf32>
    %407 = arith.mulf %398, %381 : vector<2x32xf32>
    %408 = arith.mulf %392, %400 : vector<2x32xf32>
    %409 = arith.addf %407, %408 : vector<2x32xf32>
    %410 = math.tanh %409 : vector<2x32xf32>
    %411 = arith.mulf %406, %410 : vector<2x32xf32>
    %412 = vector.extract_strided_slice %18 {offsets = [0, 128], sizes = [2, 128], strides = [1, 1]} : vector<2x256xf32> to vector<2x128xf32>
    %cst_87 = arith.constant dense<0.000000e+00> : vector<2x128xf32>
    %413 = tpu.matmul %411, %3, %cst_87 {dimension_numbers = #tpu.dot_dimension_numbers<[1], [0], [0], [1], [0, 0, 1, 1], [], []>} : vector<2x32xf32>, vector<32x128xf32>, vector<2x128xf32> -> vector<2x128xf32>
    %414 = arith.addf %412, %413 : vector<2x128xf32>
    %415 = vector.extract_strided_slice %414 {offsets = [0, 0], sizes = [2, 32], strides = [1, 1]} : vector<2x128xf32> to vector<2x32xf32>
    %416 = arith.negf %415 : vector<2x32xf32>
    %417 = math.exp %416 : vector<2x32xf32>
    %cst_88 = arith.constant 1.000000e+00 : f32
    %418 = vector.broadcast %cst_88 : f32 to vector<2x32xf32>
    %419 = arith.addf %418, %417 : vector<2x32xf32>
    %420 = arith.divf %418, %419 : vector<2x32xf32>
    %421 = vector.extract_strided_slice %414 {offsets = [0, 32], sizes = [2, 32], strides = [1, 1]} : vector<2x128xf32> to vector<2x32xf32>
    %422 = arith.negf %421 : vector<2x32xf32>
    %423 = math.exp %422 : vector<2x32xf32>
    %cst_89 = arith.constant 1.000000e+00 : f32
    %424 = vector.broadcast %cst_89 : f32 to vector<2x32xf32>
    %425 = arith.addf %424, %423 : vector<2x32xf32>
    %426 = arith.divf %424, %425 : vector<2x32xf32>
    %427 = vector.extract_strided_slice %414 {offsets = [0, 64], sizes = [2, 32], strides = [1, 1]} : vector<2x128xf32> to vector<2x32xf32>
    %428 = math.tanh %427 : vector<2x32xf32>
    %429 = vector.extract_strided_slice %414 {offsets = [0, 96], sizes = [2, 32], strides = [1, 1]} : vector<2x128xf32> to vector<2x32xf32>
    %430 = arith.negf %429 : vector<2x32xf32>
    %431 = math.exp %430 : vector<2x32xf32>
    %cst_90 = arith.constant 1.000000e+00 : f32
    %432 = vector.broadcast %cst_90 : f32 to vector<2x32xf32>
    %433 = arith.addf %432, %431 : vector<2x32xf32>
    %434 = arith.divf %432, %433 : vector<2x32xf32>
    %435 = arith.mulf %426, %409 : vector<2x32xf32>
    %436 = arith.mulf %420, %428 : vector<2x32xf32>
    %437 = arith.addf %435, %436 : vector<2x32xf32>
    %438 = math.tanh %437 : vector<2x32xf32>
    %439 = arith.mulf %434, %438 : vector<2x32xf32>
    %440 = vector.extract_strided_slice %13 {offsets = [0, 128], sizes = [2, 128], strides = [1, 1]} : vector<2x256xf32> to vector<2x128xf32>
    %cst_91 = arith.constant dense<0.000000e+00> : vector<2x128xf32>
    %441 = tpu.matmul %439, %3, %cst_91 {dimension_numbers = #tpu.dot_dimension_numbers<[1], [0], [0], [1], [0, 0, 1, 1], [], []>} : vector<2x32xf32>, vector<32x128xf32>, vector<2x128xf32> -> vector<2x128xf32>
    %442 = arith.addf %440, %441 : vector<2x128xf32>
    %443 = vector.extract_strided_slice %442 {offsets = [0, 0], sizes = [2, 32], strides = [1, 1]} : vector<2x128xf32> to vector<2x32xf32>
    %444 = arith.negf %443 : vector<2x32xf32>
    %445 = math.exp %444 : vector<2x32xf32>
    %cst_92 = arith.constant 1.000000e+00 : f32
    %446 = vector.broadcast %cst_92 : f32 to vector<2x32xf32>
    %447 = arith.addf %446, %445 : vector<2x32xf32>
    %448 = arith.divf %446, %447 : vector<2x32xf32>
    %449 = vector.extract_strided_slice %442 {offsets = [0, 32], sizes = [2, 32], strides = [1, 1]} : vector<2x128xf32> to vector<2x32xf32>
    %450 = arith.negf %449 : vector<2x32xf32>
    %451 = math.exp %450 : vector<2x32xf32>
    %cst_93 = arith.constant 1.000000e+00 : f32
    %452 = vector.broadcast %cst_93 : f32 to vector<2x32xf32>
    %453 = arith.addf %452, %451 : vector<2x32xf32>
    %454 = arith.divf %452, %453 : vector<2x32xf32>
    %455 = vector.extract_strided_slice %442 {offsets = [0, 64], sizes = [2, 32], strides = [1, 1]} : vector<2x128xf32> to vector<2x32xf32>
    %456 = math.tanh %455 : vector<2x32xf32>
    %457 = vector.extract_strided_slice %442 {offsets = [0, 96], sizes = [2, 32], strides = [1, 1]} : vector<2x128xf32> to vector<2x32xf32>
    %458 = arith.negf %457 : vector<2x32xf32>
    %459 = math.exp %458 : vector<2x32xf32>
    %cst_94 = arith.constant 1.000000e+00 : f32
    %460 = vector.broadcast %cst_94 : f32 to vector<2x32xf32>
    %461 = arith.addf %460, %459 : vector<2x32xf32>
    %462 = arith.divf %460, %461 : vector<2x32xf32>
    %463 = arith.mulf %454, %437 : vector<2x32xf32>
    %464 = arith.mulf %448, %456 : vector<2x32xf32>
    %465 = arith.addf %463, %464 : vector<2x32xf32>
    %466 = math.tanh %465 : vector<2x32xf32>
    %467 = arith.mulf %462, %466 : vector<2x32xf32>
    %468 = vector.extract_strided_slice %8 {offsets = [0, 128], sizes = [2, 128], strides = [1, 1]} : vector<2x256xf32> to vector<2x128xf32>
    %cst_95 = arith.constant dense<0.000000e+00> : vector<2x128xf32>
    %469 = tpu.matmul %467, %3, %cst_95 {dimension_numbers = #tpu.dot_dimension_numbers<[1], [0], [0], [1], [0, 0, 1, 1], [], []>} : vector<2x32xf32>, vector<32x128xf32>, vector<2x128xf32> -> vector<2x128xf32>
    %470 = arith.addf %468, %469 : vector<2x128xf32>
    %471 = vector.extract_strided_slice %470 {offsets = [0, 0], sizes = [2, 32], strides = [1, 1]} : vector<2x128xf32> to vector<2x32xf32>
    %472 = arith.negf %471 : vector<2x32xf32>
    %473 = math.exp %472 : vector<2x32xf32>
    %cst_96 = arith.constant 1.000000e+00 : f32
    %474 = vector.broadcast %cst_96 : f32 to vector<2x32xf32>
    %475 = arith.addf %474, %473 : vector<2x32xf32>
    %476 = arith.divf %474, %475 : vector<2x32xf32>
    %477 = vector.extract_strided_slice %470 {offsets = [0, 32], sizes = [2, 32], strides = [1, 1]} : vector<2x128xf32> to vector<2x32xf32>
    %478 = arith.negf %477 : vector<2x32xf32>
    %479 = math.exp %478 : vector<2x32xf32>
    %cst_97 = arith.constant 1.000000e+00 : f32
    %480 = vector.broadcast %cst_97 : f32 to vector<2x32xf32>
    %481 = arith.addf %480, %479 : vector<2x32xf32>
    %482 = arith.divf %480, %481 : vector<2x32xf32>
    %483 = vector.extract_strided_slice %470 {offsets = [0, 64], sizes = [2, 32], strides = [1, 1]} : vector<2x128xf32> to vector<2x32xf32>
    %484 = math.tanh %483 : vector<2x32xf32>
    %485 = vector.extract_strided_slice %470 {offsets = [0, 96], sizes = [2, 32], strides = [1, 1]} : vector<2x128xf32> to vector<2x32xf32>
    %486 = arith.negf %485 : vector<2x32xf32>
    %487 = math.exp %486 : vector<2x32xf32>
    %cst_98 = arith.constant 1.000000e+00 : f32
    %488 = vector.broadcast %cst_98 : f32 to vector<2x32xf32>
    %489 = arith.addf %488, %487 : vector<2x32xf32>
    %490 = arith.divf %488, %489 : vector<2x32xf32>
    %491 = arith.mulf %482, %465 : vector<2x32xf32>
    %492 = arith.mulf %476, %484 : vector<2x32xf32>
    %493 = arith.addf %491, %492 : vector<2x32xf32>
    %494 = math.tanh %493 : vector<2x32xf32>
    %495 = arith.mulf %490, %494 : vector<2x32xf32>
    %c0_99 = arith.constant 0 : index
    %c0_100 = arith.constant 0 : index
    %496 = vector.load %arg6[%c0_99, %c0_100] : memref<32x5xf32, #tpu.memory_space<vmem>>, vector<32x5xf32>
    %c0_101 = arith.constant 0 : index
    %c0_102 = arith.constant 0 : index
    %497 = vector.load %arg7[%c0_101, %c0_102] : memref<32x5xf32, #tpu.memory_space<vmem>>, vector<32x5xf32>
    %c0_103 = arith.constant 0 : index
    %c0_104 = arith.constant 0 : index
    %498 = vector.load %arg8[%c0_103, %c0_104] : memref<1x5xf32, #tpu.memory_space<vmem>>, vector<1x5xf32>
    %cst_105 = arith.constant dense<0.000000e+00> : vector<2x5xf32>
    %499 = tpu.matmul %73, %496, %cst_105 {dimension_numbers = #tpu.dot_dimension_numbers<[1], [0], [0], [1], [0, 0, 1, 1], [], []>} : vector<2x32xf32>, vector<32x5xf32>, vector<2x5xf32> -> vector<2x5xf32>
    %cst_106 = arith.constant dense<0.000000e+00> : vector<2x5xf32>
    %500 = tpu.matmul %495, %497, %cst_106 {dimension_numbers = #tpu.dot_dimension_numbers<[1], [0], [0], [1], [0, 0, 1, 1], [], []>} : vector<2x32xf32>, vector<32x5xf32>, vector<2x5xf32> -> vector<2x5xf32>
    %501 = arith.addf %499, %500 : vector<2x5xf32>
    %502 = vector.broadcast %498 : vector<1x5xf32> to vector<2x5xf32>
    %503 = arith.addf %501, %502 : vector<2x5xf32>
    %c0_107 = arith.constant 0 : index
    %c0_108 = arith.constant 0 : index
    %c0_109 = arith.constant 0 : index
    %504 = vector.load %arg13[%c0_107, %c0_108, %c0_109] : memref<8x2x5xf32, #tpu.memory_space<vmem>>, vector<1x2x5xf32>
    %505 = vector.shape_cast %504 : vector<1x2x5xf32> to vector<2x5xf32>
    %506 = vector.shape_cast %503 : vector<2x5xf32> to vector<1x2x5xf32>
    tpu.vector_store %arg13[%c0_107, %c0_108, %c0_109], %506 {strides = array<i32>} : memref<8x2x5xf32, #tpu.memory_space<vmem>>, vector<1x2x5xf32>,
    %cst_110 = arith.constant dense<0.000000e+00> : vector<2x5xf32>
    %507 = tpu.matmul %101, %496, %cst_110 {dimension_numbers = #tpu.dot_dimension_numbers<[1], [0], [0], [1], [0, 0, 1, 1], [], []>} : vector<2x32xf32>, vector<32x5xf32>, vector<2x5xf32> -> vector<2x5xf32>
    %cst_111 = arith.constant dense<0.000000e+00> : vector<2x5xf32>
    %508 = tpu.matmul %467, %497, %cst_111 {dimension_numbers = #tpu.dot_dimension_numbers<[1], [0], [0], [1], [0, 0, 1, 1], [], []>} : vector<2x32xf32>, vector<32x5xf32>, vector<2x5xf32> -> vector<2x5xf32>
    %509 = arith.addf %507, %508 : vector<2x5xf32>
    %510 = vector.broadcast %498 : vector<1x5xf32> to vector<2x5xf32>
    %511 = arith.addf %509, %510 : vector<2x5xf32>
    %c1_112 = arith.constant 1 : index
    %c0_113 = arith.constant 0 : index
    %c0_114 = arith.constant 0 : index
    %512 = vector.load %arg13[%c1_112, %c0_113, %c0_114] : memref<8x2x5xf32, #tpu.memory_space<vmem>>, vector<1x2x5xf32>
    %513 = vector.shape_cast %512 : vector<1x2x5xf32> to vector<2x5xf32>
    %514 = vector.shape_cast %511 : vector<2x5xf32> to vector<1x2x5xf32>
    tpu.vector_store %arg13[%c1_112, %c0_113, %c0_114], %514 {strides = array<i32>} : memref<8x2x5xf32, #tpu.memory_space<vmem>>, vector<1x2x5xf32>,
    %cst_115 = arith.constant dense<0.000000e+00> : vector<2x5xf32>
    %515 = tpu.matmul %129, %496, %cst_115 {dimension_numbers = #tpu.dot_dimension_numbers<[1], [0], [0], [1], [0, 0, 1, 1], [], []>} : vector<2x32xf32>, vector<32x5xf32>, vector<2x5xf32> -> vector<2x5xf32>
    %cst_116 = arith.constant dense<0.000000e+00> : vector<2x5xf32>
    %516 = tpu.matmul %439, %497, %cst_116 {dimension_numbers = #tpu.dot_dimension_numbers<[1], [0], [0], [1], [0, 0, 1, 1], [], []>} : vector<2x32xf32>, vector<32x5xf32>, vector<2x5xf32> -> vector<2x5xf32>
    %517 = arith.addf %515, %516 : vector<2x5xf32>
    %518 = vector.broadcast %498 : vector<1x5xf32> to vector<2x5xf32>
    %519 = arith.addf %517, %518 : vector<2x5xf32>
    %c2_117 = arith.constant 2 : index
    %c0_118 = arith.constant 0 : index
    %c0_119 = arith.constant 0 : index
    %520 = vector.load %arg13[%c2_117, %c0_118, %c0_119] : memref<8x2x5xf32, #tpu.memory_space<vmem>>, vector<1x2x5xf32>
    %521 = vector.shape_cast %520 : vector<1x2x5xf32> to vector<2x5xf32>
    %522 = vector.shape_cast %519 : vector<2x5xf32> to vector<1x2x5xf32>
    tpu.vector_store %arg13[%c2_117, %c0_118, %c0_119], %522 {strides = array<i32>} : memref<8x2x5xf32, #tpu.memory_space<vmem>>, vector<1x2x5xf32>,
    %cst_120 = arith.constant dense<0.000000e+00> : vector<2x5xf32>
    %523 = tpu.matmul %157, %496, %cst_120 {dimension_numbers = #tpu.dot_dimension_numbers<[1], [0], [0], [1], [0, 0, 1, 1], [], []>} : vector<2x32xf32>, vector<32x5xf32>, vector<2x5xf32> -> vector<2x5xf32>
    %cst_121 = arith.constant dense<0.000000e+00> : vector<2x5xf32>
    %524 = tpu.matmul %411, %497, %cst_121 {dimension_numbers = #tpu.dot_dimension_numbers<[1], [0], [0], [1], [0, 0, 1, 1], [], []>} : vector<2x32xf32>, vector<32x5xf32>, vector<2x5xf32> -> vector<2x5xf32>
    %525 = arith.addf %523, %524 : vector<2x5xf32>
    %526 = vector.broadcast %498 : vector<1x5xf32> to vector<2x5xf32>
    %527 = arith.addf %525, %526 : vector<2x5xf32>
    %c3_122 = arith.constant 3 : index
    %c0_123 = arith.constant 0 : index
    %c0_124 = arith.constant 0 : index
    %528 = vector.load %arg13[%c3_122, %c0_123, %c0_124] : memref<8x2x5xf32, #tpu.memory_space<vmem>>, vector<1x2x5xf32>
    %529 = vector.shape_cast %528 : vector<1x2x5xf32> to vector<2x5xf32>
    %530 = vector.shape_cast %527 : vector<2x5xf32> to vector<1x2x5xf32>
    tpu.vector_store %arg13[%c3_122, %c0_123, %c0_124], %530 {strides = array<i32>} : memref<8x2x5xf32, #tpu.memory_space<vmem>>, vector<1x2x5xf32>,
    %cst_125 = arith.constant dense<0.000000e+00> : vector<2x5xf32>
    %531 = tpu.matmul %185, %496, %cst_125 {dimension_numbers = #tpu.dot_dimension_numbers<[1], [0], [0], [1], [0, 0, 1, 1], [], []>} : vector<2x32xf32>, vector<32x5xf32>, vector<2x5xf32> -> vector<2x5xf32>
    %cst_126 = arith.constant dense<0.000000e+00> : vector<2x5xf32>
    %532 = tpu.matmul %383, %497, %cst_126 {dimension_numbers = #tpu.dot_dimension_numbers<[1], [0], [0], [1], [0, 0, 1, 1], [], []>} : vector<2x32xf32>, vector<32x5xf32>, vector<2x5xf32> -> vector<2x5xf32>
    %533 = arith.addf %531, %532 : vector<2x5xf32>
    %534 = vector.broadcast %498 : vector<1x5xf32> to vector<2x5xf32>
    %535 = arith.addf %533, %534 : vector<2x5xf32>
    %c4_127 = arith.constant 4 : index
    %c0_128 = arith.constant 0 : index
    %c0_129 = arith.constant 0 : index
    %536 = vector.load %arg13[%c4_127, %c0_128, %c0_129] : memref<8x2x5xf32, #tpu.memory_space<vmem>>, vector<1x2x5xf32>
    %537 = vector.shape_cast %536 : vector<1x2x5xf32> to vector<2x5xf32>
    %538 = vector.shape_cast %535 : vector<2x5xf32> to vector<1x2x5xf32>
    tpu.vector_store %arg13[%c4_127, %c0_128, %c0_129], %538 {strides = array<i32>} : memref<8x2x5xf32, #tpu.memory_space<vmem>>, vector<1x2x5xf32>,
    %cst_130 = arith.constant dense<0.000000e+00> : vector<2x5xf32>
    %539 = tpu.matmul %213, %496, %cst_130 {dimension_numbers = #tpu.dot_dimension_numbers<[1], [0], [0], [1], [0, 0, 1, 1], [], []>} : vector<2x32xf32>, vector<32x5xf32>, vector<2x5xf32> -> vector<2x5xf32>
    %cst_131 = arith.constant dense<0.000000e+00> : vector<2x5xf32>
    %540 = tpu.matmul %355, %497, %cst_131 {dimension_numbers = #tpu.dot_dimension_numbers<[1], [0], [0], [1], [0, 0, 1, 1], [], []>} : vector<2x32xf32>, vector<32x5xf32>, vector<2x5xf32> -> vector<2x5xf32>
    %541 = arith.addf %539, %540 : vector<2x5xf32>
    %542 = vector.broadcast %498 : vector<1x5xf32> to vector<2x5xf32>
    %543 = arith.addf %541, %542 : vector<2x5xf32>
    %c5_132 = arith.constant 5 : index
    %c0_133 = arith.constant 0 : index
    %c0_134 = arith.constant 0 : index
    %544 = vector.load %arg13[%c5_132, %c0_133, %c0_134] : memref<8x2x5xf32, #tpu.memory_space<vmem>>, vector<1x2x5xf32>
    %545 = vector.shape_cast %544 : vector<1x2x5xf32> to vector<2x5xf32>
    %546 = vector.shape_cast %543 : vector<2x5xf32> to vector<1x2x5xf32>
    tpu.vector_store %arg13[%c5_132, %c0_133, %c0_134], %546 {strides = array<i32>} : memref<8x2x5xf32, #tpu.memory_space<vmem>>, vector<1x2x5xf32>,
    %cst_135 = arith.constant dense<0.000000e+00> : vector<2x5xf32>
    %547 = tpu.matmul %241, %496, %cst_135 {dimension_numbers = #tpu.dot_dimension_numbers<[1], [0], [0], [1], [0, 0, 1, 1], [], []>} : vector<2x32xf32>, vector<32x5xf32>, vector<2x5xf32> -> vector<2x5xf32>
    %cst_136 = arith.constant dense<0.000000e+00> : vector<2x5xf32>
    %548 = tpu.matmul %327, %497, %cst_136 {dimension_numbers = #tpu.dot_dimension_numbers<[1], [0], [0], [1], [0, 0, 1, 1], [], []>} : vector<2x32xf32>, vector<32x5xf32>, vector<2x5xf32> -> vector<2x5xf32>
    %549 = arith.addf %547, %548 : vector<2x5xf32>
    %550 = vector.broadcast %498 : vector<1x5xf32> to vector<2x5xf32>
    %551 = arith.addf %549, %550 : vector<2x5xf32>
    %c6_137 = arith.constant 6 : index
    %c0_138 = arith.constant 0 : index
    %c0_139 = arith.constant 0 : index
    %552 = vector.load %arg13[%c6_137, %c0_138, %c0_139] : memref<8x2x5xf32, #tpu.memory_space<vmem>>, vector<1x2x5xf32>
    %553 = vector.shape_cast %552 : vector<1x2x5xf32> to vector<2x5xf32>
    %554 = vector.shape_cast %551 : vector<2x5xf32> to vector<1x2x5xf32>
    tpu.vector_store %arg13[%c6_137, %c0_138, %c0_139], %554 {strides = array<i32>} : memref<8x2x5xf32, #tpu.memory_space<vmem>>, vector<1x2x5xf32>,
    %cst_140 = arith.constant dense<0.000000e+00> : vector<2x5xf32>
    %555 = tpu.matmul %269, %496, %cst_140 {dimension_numbers = #tpu.dot_dimension_numbers<[1], [0], [0], [1], [0, 0, 1, 1], [], []>} : vector<2x32xf32>, vector<32x5xf32>, vector<2x5xf32> -> vector<2x5xf32>
    %cst_141 = arith.constant dense<0.000000e+00> : vector<2x5xf32>
    %556 = tpu.matmul %299, %497, %cst_141 {dimension_numbers = #tpu.dot_dimension_numbers<[1], [0], [0], [1], [0, 0, 1, 1], [], []>} : vector<2x32xf32>, vector<32x5xf32>, vector<2x5xf32> -> vector<2x5xf32>
    %557 = arith.addf %555, %556 : vector<2x5xf32>
    %558 = vector.broadcast %498 : vector<1x5xf32> to vector<2x5xf32>
    %559 = arith.addf %557, %558 : vector<2x5xf32>
    %c7_142 = arith.constant 7 : index
    %c0_143 = arith.constant 0 : index
    %c0_144 = arith.constant 0 : index
    %560 = vector.load %arg13[%c7_142, %c0_143, %c0_144] : memref<8x2x5xf32, #tpu.memory_space<vmem>>, vector<1x2x5xf32>
    %561 = vector.shape_cast %560 : vector<1x2x5xf32> to vector<2x5xf32>
    %562 = vector.shape_cast %559 : vector<2x5xf32> to vector<1x2x5xf32>
    tpu.vector_store %arg13[%c7_142, %c0_143, %c0_144], %562 {strides = array<i32>} : memref<8x2x5xf32, #tpu.memory_space<vmem>>, vector<1x2x5xf32>,
    %c0_145 = arith.constant 0 : index
    %c0_146 = arith.constant 0 : index
    %563 = vector.load %arg12[%c0_145, %c0_146] : memref<5x5xf32, #tpu.memory_space<vmem>>, vector<5x5xf32>
    %c0_147 = arith.constant 0 : index
    %c0_148 = arith.constant 0 : index
    %564 = vector.load %arg10[%c0_147, %c0_148] : memref<1x5xf32, #tpu.memory_space<vmem>>, vector<1x5xf32>
    %565 = vector.broadcast %564 : vector<1x5xf32> to vector<2x5xf32>
    %566 = arith.addf %565, %503 : vector<2x5xf32>
    %c1_149 = arith.constant 1 : index
    %c0_150 = arith.constant 0 : index
    %c0_151 = arith.constant 0 : index
    %567 = vector.load %arg9[%c1_149, %c0_150, %c0_151] : memref<8x2x1xf32, #tpu.memory_space<vmem>>, vector<1x2x1xf32>
    %568 = vector.shape_cast %567 : vector<1x2x1xf32> to vector<2x1xf32>
    %569 = vector.shape_cast %566 : vector<2x5xf32> to vector<2x1x5xf32>
    %570 = vector.shape_cast %563 : vector<5x5xf32> to vector<1x5x5xf32>
    %571 = vector.broadcast %569 : vector<2x1x5xf32> to vector<2x5x5xf32>
    %572 = vector.broadcast %570 : vector<1x5x5xf32> to vector<2x5x5xf32>
    %573 = arith.addf %571, %572 : vector<2x5x5xf32>
    %cst_152 = arith.constant dense<0xFF800000> : vector<2x5xf32>
    %574 = vector.multi_reduction <maximumf>, %573, %cst_152 [2] : vector<2x5x5xf32> to vector<2x5xf32>
    %575 = vector.shape_cast %574 : vector<2x5xf32> to vector<2x5x1xf32>
    %576 = vector.broadcast %575 : vector<2x5x1xf32> to vector<2x5x5xf32>
    %577 = arith.subf %573, %576 : vector<2x5x5xf32>
    %578 = math.exp %577 : vector<2x5x5xf32>
    %cst_153 = arith.constant dense<0.000000e+00> : vector<2x5xf32>
    %579 = vector.multi_reduction <add>, %578, %cst_153 [2] : vector<2x5x5xf32> to vector<2x5xf32>
    %580 = math.log %579 : vector<2x5xf32>
    %581 = arith.addf %574, %580 : vector<2x5xf32>
    %cst_154 = arith.constant 0.000000e+00 : f32
    %582 = vector.broadcast %cst_154 : f32 to vector<2x1xf32>
    %583 = arith.cmpf ogt, %568, %582 : vector<2x1xf32>
    %584 = arith.addf %581, %511 : vector<2x5xf32>
    %585 = vector.shape_cast %583 : vector<2x1xi1> to vector<2x1xi1>
    %586 = vector.broadcast %585 : vector<2x1xi1> to vector<2x5xi1>
    %587 = arith.select %586, %584, %566 : vector<2x5xi1>, vector<2x5xf32>
    %c2_155 = arith.constant 2 : index
    %c0_156 = arith.constant 0 : index
    %c0_157 = arith.constant 0 : index
    %588 = vector.load %arg9[%c2_155, %c0_156, %c0_157] : memref<8x2x1xf32, #tpu.memory_space<vmem>>, vector<1x2x1xf32>
    %589 = vector.shape_cast %588 : vector<1x2x1xf32> to vector<2x1xf32>
    %590 = vector.shape_cast %587 : vector<2x5xf32> to vector<2x1x5xf32>
    %591 = vector.shape_cast %563 : vector<5x5xf32> to vector<1x5x5xf32>
    %592 = vector.broadcast %590 : vector<2x1x5xf32> to vector<2x5x5xf32>
    %593 = vector.broadcast %591 : vector<1x5x5xf32> to vector<2x5x5xf32>
    %594 = arith.addf %592, %593 : vector<2x5x5xf32>
    %cst_158 = arith.constant dense<0xFF800000> : vector<2x5xf32>
    %595 = vector.multi_reduction <maximumf>, %594, %cst_158 [2] : vector<2x5x5xf32> to vector<2x5xf32>
    %596 = vector.shape_cast %595 : vector<2x5xf32> to vector<2x5x1xf32>
    %597 = vector.broadcast %596 : vector<2x5x1xf32> to vector<2x5x5xf32>
    %598 = arith.subf %594, %597 : vector<2x5x5xf32>
    %599 = math.exp %598 : vector<2x5x5xf32>
    %cst_159 = arith.constant dense<0.000000e+00> : vector<2x5xf32>
    %600 = vector.multi_reduction <add>, %599, %cst_159 [2] : vector<2x5x5xf32> to vector<2x5xf32>
    %601 = math.log %600 : vector<2x5xf32>
    %602 = arith.addf %595, %601 : vector<2x5xf32>
    %cst_160 = arith.constant 0.000000e+00 : f32
    %603 = vector.broadcast %cst_160 : f32 to vector<2x1xf32>
    %604 = arith.cmpf ogt, %589, %603 : vector<2x1xf32>
    %605 = arith.addf %602, %519 : vector<2x5xf32>
    %606 = vector.shape_cast %604 : vector<2x1xi1> to vector<2x1xi1>
    %607 = vector.broadcast %606 : vector<2x1xi1> to vector<2x5xi1>
    %608 = arith.select %607, %605, %587 : vector<2x5xi1>, vector<2x5xf32>
    %c3_161 = arith.constant 3 : index
    %c0_162 = arith.constant 0 : index
    %c0_163 = arith.constant 0 : index
    %609 = vector.load %arg9[%c3_161, %c0_162, %c0_163] : memref<8x2x1xf32, #tpu.memory_space<vmem>>, vector<1x2x1xf32>
    %610 = vector.shape_cast %609 : vector<1x2x1xf32> to vector<2x1xf32>
    %611 = vector.shape_cast %608 : vector<2x5xf32> to vector<2x1x5xf32>
    %612 = vector.shape_cast %563 : vector<5x5xf32> to vector<1x5x5xf32>
    %613 = vector.broadcast %611 : vector<2x1x5xf32> to vector<2x5x5xf32>
    %614 = vector.broadcast %612 : vector<1x5x5xf32> to vector<2x5x5xf32>
    %615 = arith.addf %613, %614 : vector<2x5x5xf32>
    %cst_164 = arith.constant dense<0xFF800000> : vector<2x5xf32>
    %616 = vector.multi_reduction <maximumf>, %615, %cst_164 [2] : vector<2x5x5xf32> to vector<2x5xf32>
    %617 = vector.shape_cast %616 : vector<2x5xf32> to vector<2x5x1xf32>
    %618 = vector.broadcast %617 : vector<2x5x1xf32> to vector<2x5x5xf32>
    %619 = arith.subf %615, %618 : vector<2x5x5xf32>
    %620 = math.exp %619 : vector<2x5x5xf32>
    %cst_165 = arith.constant dense<0.000000e+00> : vector<2x5xf32>
    %621 = vector.multi_reduction <add>, %620, %cst_165 [2] : vector<2x5x5xf32> to vector<2x5xf32>
    %622 = math.log %621 : vector<2x5xf32>
    %623 = arith.addf %616, %622 : vector<2x5xf32>
    %cst_166 = arith.constant 0.000000e+00 : f32
    %624 = vector.broadcast %cst_166 : f32 to vector<2x1xf32>
    %625 = arith.cmpf ogt, %610, %624 : vector<2x1xf32>
    %626 = arith.addf %623, %527 : vector<2x5xf32>
    %627 = vector.shape_cast %625 : vector<2x1xi1> to vector<2x1xi1>
    %628 = vector.broadcast %627 : vector<2x1xi1> to vector<2x5xi1>
    %629 = arith.select %628, %626, %608 : vector<2x5xi1>, vector<2x5xf32>
    %c4_167 = arith.constant 4 : index
    %c0_168 = arith.constant 0 : index
    %c0_169 = arith.constant 0 : index
    %630 = vector.load %arg9[%c4_167, %c0_168, %c0_169] : memref<8x2x1xf32, #tpu.memory_space<vmem>>, vector<1x2x1xf32>
    %631 = vector.shape_cast %630 : vector<1x2x1xf32> to vector<2x1xf32>
    %632 = vector.shape_cast %629 : vector<2x5xf32> to vector<2x1x5xf32>
    %633 = vector.shape_cast %563 : vector<5x5xf32> to vector<1x5x5xf32>
    %634 = vector.broadcast %632 : vector<2x1x5xf32> to vector<2x5x5xf32>
    %635 = vector.broadcast %633 : vector<1x5x5xf32> to vector<2x5x5xf32>
    %636 = arith.addf %634, %635 : vector<2x5x5xf32>
    %cst_170 = arith.constant dense<0xFF800000> : vector<2x5xf32>
    %637 = vector.multi_reduction <maximumf>, %636, %cst_170 [2] : vector<2x5x5xf32> to vector<2x5xf32>
    %638 = vector.shape_cast %637 : vector<2x5xf32> to vector<2x5x1xf32>
    %639 = vector.broadcast %638 : vector<2x5x1xf32> to vector<2x5x5xf32>
    %640 = arith.subf %636, %639 : vector<2x5x5xf32>
    %641 = math.exp %640 : vector<2x5x5xf32>
    %cst_171 = arith.constant dense<0.000000e+00> : vector<2x5xf32>
    %642 = vector.multi_reduction <add>, %641, %cst_171 [2] : vector<2x5x5xf32> to vector<2x5xf32>
    %643 = math.log %642 : vector<2x5xf32>
    %644 = arith.addf %637, %643 : vector<2x5xf32>
    %cst_172 = arith.constant 0.000000e+00 : f32
    %645 = vector.broadcast %cst_172 : f32 to vector<2x1xf32>
    %646 = arith.cmpf ogt, %631, %645 : vector<2x1xf32>
    %647 = arith.addf %644, %535 : vector<2x5xf32>
    %648 = vector.shape_cast %646 : vector<2x1xi1> to vector<2x1xi1>
    %649 = vector.broadcast %648 : vector<2x1xi1> to vector<2x5xi1>
    %650 = arith.select %649, %647, %629 : vector<2x5xi1>, vector<2x5xf32>
    %c5_173 = arith.constant 5 : index
    %c0_174 = arith.constant 0 : index
    %c0_175 = arith.constant 0 : index
    %651 = vector.load %arg9[%c5_173, %c0_174, %c0_175] : memref<8x2x1xf32, #tpu.memory_space<vmem>>, vector<1x2x1xf32>
    %652 = vector.shape_cast %651 : vector<1x2x1xf32> to vector<2x1xf32>
    %653 = vector.shape_cast %650 : vector<2x5xf32> to vector<2x1x5xf32>
    %654 = vector.shape_cast %563 : vector<5x5xf32> to vector<1x5x5xf32>
    %655 = vector.broadcast %653 : vector<2x1x5xf32> to vector<2x5x5xf32>
    %656 = vector.broadcast %654 : vector<1x5x5xf32> to vector<2x5x5xf32>
    %657 = arith.addf %655, %656 : vector<2x5x5xf32>
    %cst_176 = arith.constant dense<0xFF800000> : vector<2x5xf32>
    %658 = vector.multi_reduction <maximumf>, %657, %cst_176 [2] : vector<2x5x5xf32> to vector<2x5xf32>
    %659 = vector.shape_cast %658 : vector<2x5xf32> to vector<2x5x1xf32>
    %660 = vector.broadcast %659 : vector<2x5x1xf32> to vector<2x5x5xf32>
    %661 = arith.subf %657, %660 : vector<2x5x5xf32>
    %662 = math.exp %661 : vector<2x5x5xf32>
    %cst_177 = arith.constant dense<0.000000e+00> : vector<2x5xf32>
    %663 = vector.multi_reduction <add>, %662, %cst_177 [2] : vector<2x5x5xf32> to vector<2x5xf32>
    %664 = math.log %663 : vector<2x5xf32>
    %665 = arith.addf %658, %664 : vector<2x5xf32>
    %cst_178 = arith.constant 0.000000e+00 : f32
    %666 = vector.broadcast %cst_178 : f32 to vector<2x1xf32>
    %667 = arith.cmpf ogt, %652, %666 : vector<2x1xf32>
    %668 = arith.addf %665, %543 : vector<2x5xf32>
    %669 = vector.shape_cast %667 : vector<2x1xi1> to vector<2x1xi1>
    %670 = vector.broadcast %669 : vector<2x1xi1> to vector<2x5xi1>
    %671 = arith.select %670, %668, %650 : vector<2x5xi1>, vector<2x5xf32>
    %c6_179 = arith.constant 6 : index
    %c0_180 = arith.constant 0 : index
    %c0_181 = arith.constant 0 : index
    %672 = vector.load %arg9[%c6_179, %c0_180, %c0_181] : memref<8x2x1xf32, #tpu.memory_space<vmem>>, vector<1x2x1xf32>
    %673 = vector.shape_cast %672 : vector<1x2x1xf32> to vector<2x1xf32>
    %674 = vector.shape_cast %671 : vector<2x5xf32> to vector<2x1x5xf32>
    %675 = vector.shape_cast %563 : vector<5x5xf32> to vector<1x5x5xf32>
    %676 = vector.broadcast %674 : vector<2x1x5xf32> to vector<2x5x5xf32>
    %677 = vector.broadcast %675 : vector<1x5x5xf32> to vector<2x5x5xf32>
    %678 = arith.addf %676, %677 : vector<2x5x5xf32>
    %cst_182 = arith.constant dense<0xFF800000> : vector<2x5xf32>
    %679 = vector.multi_reduction <maximumf>, %678, %cst_182 [2] : vector<2x5x5xf32> to vector<2x5xf32>
    %680 = vector.shape_cast %679 : vector<2x5xf32> to vector<2x5x1xf32>
    %681 = vector.broadcast %680 : vector<2x5x1xf32> to vector<2x5x5xf32>
    %682 = arith.subf %678, %681 : vector<2x5x5xf32>
    %683 = math.exp %682 : vector<2x5x5xf32>
    %cst_183 = arith.constant dense<0.000000e+00> : vector<2x5xf32>
    %684 = vector.multi_reduction <add>, %683, %cst_183 [2] : vector<2x5x5xf32> to vector<2x5xf32>
    %685 = math.log %684 : vector<2x5xf32>
    %686 = arith.addf %679, %685 : vector<2x5xf32>
    %cst_184 = arith.constant 0.000000e+00 : f32
    %687 = vector.broadcast %cst_184 : f32 to vector<2x1xf32>
    %688 = arith.cmpf ogt, %673, %687 : vector<2x1xf32>
    %689 = arith.addf %686, %551 : vector<2x5xf32>
    %690 = vector.shape_cast %688 : vector<2x1xi1> to vector<2x1xi1>
    %691 = vector.broadcast %690 : vector<2x1xi1> to vector<2x5xi1>
    %692 = arith.select %691, %689, %671 : vector<2x5xi1>, vector<2x5xf32>
    %c7_185 = arith.constant 7 : index
    %c0_186 = arith.constant 0 : index
    %c0_187 = arith.constant 0 : index
    %693 = vector.load %arg9[%c7_185, %c0_186, %c0_187] : memref<8x2x1xf32, #tpu.memory_space<vmem>>, vector<1x2x1xf32>
    %694 = vector.shape_cast %693 : vector<1x2x1xf32> to vector<2x1xf32>
    %695 = vector.shape_cast %692 : vector<2x5xf32> to vector<2x1x5xf32>
    %696 = vector.shape_cast %563 : vector<5x5xf32> to vector<1x5x5xf32>
    %697 = vector.broadcast %695 : vector<2x1x5xf32> to vector<2x5x5xf32>
    %698 = vector.broadcast %696 : vector<1x5x5xf32> to vector<2x5x5xf32>
    %699 = arith.addf %697, %698 : vector<2x5x5xf32>
    %cst_188 = arith.constant dense<0xFF800000> : vector<2x5xf32>
    %700 = vector.multi_reduction <maximumf>, %699, %cst_188 [2] : vector<2x5x5xf32> to vector<2x5xf32>
    %701 = vector.shape_cast %700 : vector<2x5xf32> to vector<2x5x1xf32>
    %702 = vector.broadcast %701 : vector<2x5x1xf32> to vector<2x5x5xf32>
    %703 = arith.subf %699, %702 : vector<2x5x5xf32>
    %704 = math.exp %703 : vector<2x5x5xf32>
    %cst_189 = arith.constant dense<0.000000e+00> : vector<2x5xf32>
    %705 = vector.multi_reduction <add>, %704, %cst_189 [2] : vector<2x5x5xf32> to vector<2x5xf32>
    %706 = math.log %705 : vector<2x5xf32>
    %707 = arith.addf %700, %706 : vector<2x5xf32>
    %cst_190 = arith.constant 0.000000e+00 : f32
    %708 = vector.broadcast %cst_190 : f32 to vector<2x1xf32>
    %709 = arith.cmpf ogt, %694, %708 : vector<2x1xf32>
    %710 = arith.addf %707, %559 : vector<2x5xf32>
    %711 = vector.shape_cast %709 : vector<2x1xi1> to vector<2x1xi1>
    %712 = vector.broadcast %711 : vector<2x1xi1> to vector<2x5xi1>
    %713 = arith.select %712, %710, %692 : vector<2x5xi1>, vector<2x5xf32>
    %c0_191 = arith.constant 0 : index
    %c0_192 = arith.constant 0 : index
    %714 = vector.load %arg11[%c0_191, %c0_192] : memref<1x5xf32, #tpu.memory_space<vmem>>, vector<1x5xf32>
    %715 = vector.broadcast %714 : vector<1x5xf32> to vector<2x5xf32>
    %716 = arith.addf %713, %715 : vector<2x5xf32>
    %cst_193 = arith.constant dense<0xFF800000> : vector<2xf32>
    %717 = vector.multi_reduction <maximumf>, %716, %cst_193 [1] : vector<2x5xf32> to vector<2xf32>
    %718 = vector.shape_cast %717 : vector<2xf32> to vector<2x1xf32>
    %719 = vector.broadcast %718 : vector<2x1xf32> to vector<2x5xf32>
    %720 = arith.subf %716, %719 : vector<2x5xf32>
    %721 = math.exp %720 : vector<2x5xf32>
    %cst_194 = arith.constant dense<0.000000e+00> : vector<2xf32>
    %722 = vector.multi_reduction <add>, %721, %cst_194 [1] : vector<2x5xf32> to vector<2xf32>
    %723 = vector.shape_cast %722 : vector<2xf32> to vector<2x1xf32>
    %724 = math.log %723 : vector<2x1xf32>
    %725 = arith.addf %718, %724 : vector<2x1xf32>
    %c0_195 = arith.constant 0 : index
    %c0_196 = arith.constant 0 : index
    %726 = vector.load %arg14[%c0_195, %c0_196] : memref<2x1xf32, #tpu.memory_space<vmem>>, vector<2x1xf32>
    tpu.vector_store %arg14[%c0_195, %c0_196], %725 {strides = array<i32>} : memref<2x1xf32, #tpu.memory_space<vmem>>, vector<2x1xf32>,
    return
  }
  func.func @transform_0(%arg0: i32) -> (i32, i32, i32) {
    %c0_i32 = arith.constant 0 : i32
    %c0_i32_0 = arith.constant 0 : i32
    %c0_i32_1 = arith.constant 0 : i32
    %c0_i32_2 = arith.constant 0 : i32
    return %c0_i32, %c0_i32_0, %c0_i32_1 : i32, i32, i32
  }
  func.func @transform_1(%arg0: i32) -> (i32, i32) {
    %c0_i32 = arith.constant 0 : i32
    %c0_i32_0 = arith.constant 0 : i32
    %c0_i32_1 = arith.constant 0 : i32
    return %c0_i32, %c0_i32_0 : i32, i32
  }
  func.func @transform_2(%arg0: i32) -> (i32, i32) {
    %c0_i32 = arith.constant 0 : i32
    %c0_i32_0 = arith.constant 0 : i32
    %c0_i32_1 = arith.constant 0 : i32
    return %c0_i32, %c0_i32_0 : i32, i32
  }
  func.func @transform_3(%arg0: i32) -> (i32, i32) {
    %c0_i32 = arith.constant 0 : i32
    %c0_i32_0 = arith.constant 0 : i32
    %c0_i32_1 = arith.constant 0 : i32
    return %c0_i32, %c0_i32_0 : i32, i32
  }
  func.func @transform_4(%arg0: i32) -> (i32, i32) {
    %c0_i32 = arith.constant 0 : i32
    %c0_i32_0 = arith.constant 0 : i32
    %c0_i32_1 = arith.constant 0 : i32
    return %c0_i32, %c0_i32_0 : i32, i32
  }
  func.func @transform_5(%arg0: i32) -> (i32, i32) {
    %c0_i32 = arith.constant 0 : i32
    %c0_i32_0 = arith.constant 0 : i32
    %c0_i32_1 = arith.constant 0 : i32
    return %c0_i32, %c0_i32_0 : i32, i32
  }
  func.func @transform_6(%arg0: i32) -> (i32, i32) {
    %c0_i32 = arith.constant 0 : i32
    %c0_i32_0 = arith.constant 0 : i32
    %c0_i32_1 = arith.constant 0 : i32
    return %c0_i32, %c0_i32_0 : i32, i32
  }
  func.func @transform_7(%arg0: i32) -> (i32, i32) {
    %c0_i32 = arith.constant 0 : i32
    %c0_i32_0 = arith.constant 0 : i32
    %c0_i32_1 = arith.constant 0 : i32
    return %c0_i32, %c0_i32_0 : i32, i32
  }
  func.func @transform_8(%arg0: i32) -> (i32, i32, i32) {
    %c0_i32 = arith.constant 0 : i32
    %c0_i32_0 = arith.constant 0 : i32
    %c0_i32_1 = arith.constant 0 : i32
    %c0_i32_2 = arith.constant 0 : i32
    return %c0_i32, %c0_i32_0, %c0_i32_1 : i32, i32, i32
  }
  func.func @transform_9(%arg0: i32) -> (i32, i32) {
    %c0_i32 = arith.constant 0 : i32
    %c0_i32_0 = arith.constant 0 : i32
    %c0_i32_1 = arith.constant 0 : i32
    return %c0_i32, %c0_i32_0 : i32, i32
  }
  func.func @transform_10(%arg0: i32) -> (i32, i32) {
    %c0_i32 = arith.constant 0 : i32
    %c0_i32_0 = arith.constant 0 : i32
    %c0_i32_1 = arith.constant 0 : i32
    return %c0_i32, %c0_i32_0 : i32, i32
  }
  func.func @transform_11(%arg0: i32) -> (i32, i32) {
    %c0_i32 = arith.constant 0 : i32
    %c0_i32_0 = arith.constant 0 : i32
    %c0_i32_1 = arith.constant 0 : i32
    return %c0_i32, %c0_i32_0 : i32, i32
  }
  func.func @transform_12(%arg0: i32) -> (i32, i32, i32) {
    %c0_i32 = arith.constant 0 : i32
    %c0_i32_0 = arith.constant 0 : i32
    %c0_i32_1 = arith.constant 0 : i32
    %c0_i32_2 = arith.constant 0 : i32
    return %c0_i32, %c0_i32_0, %c0_i32_1 : i32, i32, i32
  }
  func.func @transform_13(%arg0: i32) -> (i32, i32) {
    %c0_i32 = arith.constant 0 : i32
    %c0_i32_0 = arith.constant 0 : i32
    %c0_i32_1 = arith.constant 0 : i32
    return %c0_i32, %c0_i32_0 : i32, i32
  }
}

</mosaic_0001>

<llo_original>
// kernel: tpu_custom_call.1
$region0: #{tpu_custom_call.1}
  #allocation0 [shape = 'u32[]', space=smem, size = 0x4, offset = 0x4, fixed_abs, tag = 'smem constant byte address 0x4 - core index']
  #allocation1 [shape = 'u32[144,128]{1,0:T(1,128)}', space=vmem, size = 0x12000, scoped, tag = 'internal scratch']
  %s0 = inlined_call_operand.hbm [shape: f32[8,2,16], index: 0, kind: input, shape index: {}]
  %s1 = inlined_call_operand.vmem [shape: f32[16,256], index: 1, kind: input, shape index: {}]
  %s2 = inlined_call_operand.vmem [shape: f32[32,128], index: 2, kind: input, shape index: {}]
  %s3 = inlined_call_operand.vmem [shape: f32[32,128], index: 3, kind: input, shape index: {}]
  %s4 = inlined_call_operand.hbm [shape: f32[1,256], index: 4, kind: input, shape index: {}]
  %s5 = inlined_call_operand.vmem [shape: f32[32,5], index: 5, kind: input, shape index: {}]
  %s6 = inlined_call_operand.vmem [shape: f32[32,5], index: 6, kind: input, shape index: {}]
  %s7 = inlined_call_operand.hbm [shape: f32[1,5], index: 7, kind: input, shape index: {}]
  %s8 = inlined_call_operand.vmem [shape: f32[8,2,1], index: 8, kind: input, shape index: {}]
  %s9 = inlined_call_operand.vmem [shape: f32[1,5], index: 9, kind: input, shape index: {}]
  %s10 = inlined_call_operand.vmem [shape: f32[1,5], index: 10, kind: input, shape index: {}]
  %s11 = inlined_call_operand.vmem [shape: f32[5,5], index: 11, kind: input, shape index: {}]
  %s12 = inlined_call_operand.vmem [shape: f32[8,2,5], index: 12, kind: output, shape index: {0}]
  %s13 = inlined_call_operand.vmem [shape: f32[2,1], index: 13, kind: output, shape index: {1}]
  %14 = xla_tuple %s12, %s13
  %s15 = sld [smem:[#allocation0]]
  $region78: #{tpu_custom_call.1} parent=0
    _
  %s17 = ssub.s32 1, %s15
  %s18 = scalar_select 0, %s17, %s15
  $region1: #{tpu_custom_call.1} parent=0
    #allocation2 [shape = 'u8[8192]{0}', space=vmem, size = 0x2000, scoped, tag = 'input window, operand 0, single buffered']
    #allocation3 [shape = 's32[1]{0}', space=sflag, size = 0x4, scoped, tag = 'scoped memory for tpu_custom_call.1']
    #allocation4 [shape = 'u8[1024]{0}', space=vmem, size = 0x400, scoped, tag = 'input window, operand 4, single buffered']
    #allocation5 [shape = 's32[1]{0}', space=sflag, size = 0x4, scoped, tag = 'scoped memory for tpu_custom_call.1']
    #allocation6 [shape = 'u8[512]{0}', space=vmem, size = 0x400, scoped, tag = 'input window, operand 7, single buffered']
    %19 = vsyncpa [#allocation3], 0
    %20 = vsyncpa [#allocation5], 0
    // Predicated region
    $region2: #{tpu_custom_call.1} parent=1 // pred_check
      _
    $region3: #{tpu_custom_call.1} parent=1 // pred_check_branch
      %22 = sbr.rel (0) target = $region5
    $region4: #{tpu_custom_call.1} parent=1 // pred_region
      %s24 = ssub.s32 256, 256
      %25 = vsyncadd [#allocation3], %s24
      %s26 = sshll.u32 [#allocation2], 4
      %s27 = int_to_ptr.vmem [resolvable:$true] %s26
      %32 = dma.hbm_to_vmem [thread:$0]  %s0, 256, %s27, [#allocation3], 32, 32, 2
    $region5: #{tpu_custom_call.1} parent=1 // pred_fallthru
      _
    // Predicated region
    $region6: #{tpu_custom_call.1} parent=1 // pred_check
      _
    $region7: #{tpu_custom_call.1} parent=1 // pred_check_branch
      %34 = sbr.rel (0) target = $region9
    $region8: #{tpu_custom_call.1} parent=1 // pred_region
      _
    $region9: #{tpu_custom_call.1} parent=1 // pred_fallthru
      _
    // Predicated region
    $region10: #{tpu_custom_call.1} parent=1 // pred_check
      _
    $region11: #{tpu_custom_call.1} parent=1 // pred_check_branch
      %36 = sbr.rel (0) target = $region13
    $region12: #{tpu_custom_call.1} parent=1 // pred_region
      _
    $region13: #{tpu_custom_call.1} parent=1 // pred_fallthru
      _
    // Predicated region
    $region14: #{tpu_custom_call.1} parent=1 // pred_check
      _
    $region15: #{tpu_custom_call.1} parent=1 // pred_check_branch
      %38 = sbr.rel (0) target = $region17
    $region16: #{tpu_custom_call.1} parent=1 // pred_region
      _
    $region17: #{tpu_custom_call.1} parent=1 // pred_fallthru
      _
    // Predicated region
    $region18: #{tpu_custom_call.1} parent=1 // pred_check
      _
    $region19: #{tpu_custom_call.1} parent=1 // pred_check_branch
      %40 = sbr.rel (0) target = $region21
    $region20: #{tpu_custom_call.1} parent=1 // pred_region
      %s42 = ssub.s32 32, 32
      %43 = vsyncadd [#allocation5], %s42
      %s45 = sshll.u32 [#allocation4], 4
      %s46 = int_to_ptr.vmem [resolvable:$true] %s45
      %48 = dma.hbm_to_vmem [thread:$0]  %s4, 32, %s46, [#allocation5]
    $region21: #{tpu_custom_call.1} parent=1 // pred_fallthru
      _
    // Predicated region
    $region22: #{tpu_custom_call.1} parent=1 // pred_check
      _
    $region23: #{tpu_custom_call.1} parent=1 // pred_check_branch
      %50 = sbr.rel (0) target = $region25
    $region24: #{tpu_custom_call.1} parent=1 // pred_region
      _
    $region25: #{tpu_custom_call.1} parent=1 // pred_fallthru
      _
    // Predicated region
    $region26: #{tpu_custom_call.1} parent=1 // pred_check
      _
    $region27: #{tpu_custom_call.1} parent=1 // pred_check_branch
      %52 = sbr.rel (0) target = $region29
    $region28: #{tpu_custom_call.1} parent=1 // pred_region
      _
    $region29: #{tpu_custom_call.1} parent=1 // pred_fallthru
      _
    // Predicated region
    $region30: #{tpu_custom_call.1} parent=1 // pred_check
      _
    $region31: #{tpu_custom_call.1} parent=1 // pred_check_branch
      %54 = sbr.rel (0) target = $region33
    $region32: #{tpu_custom_call.1} parent=1 // pred_region
      %s56 = ssub.s32 16, 16
      %57 = vsyncadd [#allocation5], %s56
      %s59 = sshll.u32 [#allocation6], 4
      %s60 = int_to_ptr.vmem [resolvable:$true] %s59
      %62 = dma.hbm_to_vmem [thread:$0]  %s7, 16, %s60, [#allocation5]
    $region33: #{tpu_custom_call.1} parent=1 // pred_fallthru
      _
    // Predicated region
    $region34: #{tpu_custom_call.1} parent=1 // pred_check
      _
    $region35: #{tpu_custom_call.1} parent=1 // pred_check_branch
      %64 = sbr.rel (0) target = $region37
    $region36: #{tpu_custom_call.1} parent=1 // pred_region
      _
    $region37: #{tpu_custom_call.1} parent=1 // pred_fallthru
      _
    // Predicated region
    $region38: #{tpu_custom_call.1} parent=1 // pred_check
      _
    $region39: #{tpu_custom_call.1} parent=1 // pred_check_branch
      %66 = sbr.rel (0) target = $region41
    $region40: #{tpu_custom_call.1} parent=1 // pred_region
      _
    $region41: #{tpu_custom_call.1} parent=1 // pred_fallthru
      _
    // Predicated region
    $region42: #{tpu_custom_call.1} parent=1 // pred_check
      _
    $region43: #{tpu_custom_call.1} parent=1 // pred_check_branch
      %68 = sbr.rel (0) target = $region45
    $region44: #{tpu_custom_call.1} parent=1 // pred_region
      _
    $region45: #{tpu_custom_call.1} parent=1 // pred_fallthru
      _
    // Predicated region
    $region46: #{tpu_custom_call.1} parent=1 // pred_check
      _
    $region47: #{tpu_custom_call.1} parent=1 // pred_check_branch
      %70 = sbr.rel (0) target = $region49
    $region48: #{tpu_custom_call.1} parent=1 // pred_region
      _
    $region49: #{tpu_custom_call.1} parent=1 // pred_fallthru
      _
    // Predicated region
    $region50: #{tpu_custom_call.1} parent=1 // pred_check
      _
    $region51: #{tpu_custom_call.1} parent=1 // pred_check_branch
      %72 = sbr.rel (0) target = $region53
    $region52: #{tpu_custom_call.1} parent=1 // pred_region
      %73 = dma.done [#allocation3], 256
    $region53: #{tpu_custom_call.1} parent=1 // pred_fallthru
      _
    // Predicated region
    $region54: #{tpu_custom_call.1} parent=1 // pred_check
      _
    $region55: #{tpu_custom_call.1} parent=1 // pred_check_branch
      %75 = sbr.rel (0) target = $region57
    $region56: #{tpu_custom_call.1} parent=1 // pred_region
      %76 = dma.done [#allocation5], 32
    $region57: #{tpu_custom_call.1} parent=1 // pred_fallthru
      _
    // Predicated region
    $region58: #{tpu_custom_call.1} parent=1 // pred_check
      _
    $region59: #{tpu_custom_call.1} parent=1 // pred_check_branch
      %78 = sbr.rel (0) target = $region61
    $region60: #{tpu_custom_call.1} parent=1 // pred_region
      %79 = dma.done [#allocation5], 16
    $region61: #{tpu_custom_call.1} parent=1 // pred_fallthru
      _
    %v80 = vld [vmem:[%s1] sm:$0xff]
    %v81 = vld [vmem:[%s1 + $0x8] sm:$0xff]
    %v82 = vld [vmem:[%s1 + $0x10] sm:$0xff]
    %v83 = vld [vmem:[%s1 + $0x18] sm:$0xff]
    %v84 = vld [vmem:[#allocation4] sm:$0x3]
    %v85 = vld [vmem:[%s2] sm:$0xff]
    %v86 = vld [vmem:[%s2 + $0x8] sm:$0xff]
    %v87 = vld [vmem:[%s2 + $0x10] sm:$0xff]
    %v88 = vld [vmem:[%s2 + $0x18] sm:$0xff]
    %v89 = vld [vmem:[%s3] sm:$0xff]
    %v90 = vld [vmem:[%s3 + $0x8] sm:$0xff]
    %v91 = vld [vmem:[%s3 + $0x10] sm:$0xff]
    %v92 = vld [vmem:[%s3 + $0x18] sm:$0xff]
    %v93 = vld [vmem:[#allocation2] sm:$0x3]
    %v95 = vlaneseq
    %v96 = vshrl.u32 %v95, 7
    %v97 = vsub.s32 0, %v96
    %v98 = vrot.slane %v84, %v97
    %v99 = vlaneseq
    %v100 = vshrl.u32 %v99, 7
    %v101 = vsub.s32 1, %v100
    %v102 = vrot.slane %v84, %v101
    %vm105 = vcmask 130048
    %v107 = vsel %vm105, %v93, 0
    %109 = vmatprep.subr.mxu0 0.0
    %110 = vmatpush1.msra.mxu0 0.0
    %111 = vmatprep.subr.mxu0 0.0
    %112 = vmatpush1.msra.mxu0 0.0
    %113 = vmatprep.subr.mxu0 0.0
    %114 = vmatpush1.msra.mxu0 0.0
    %115 = vmatprep.subr.mxu0 0.0
    %116 = vmatpush1.msra.mxu0 0.0
    %117 = vmatprep.subr.mxu0 0.0
    %118 = vmatpush1.msra.mxu0 0.0
    %119 = vmatprep.subr.mxu0 0.0
    %120 = vmatpush1.msra.mxu0 0.0
    %121 = vmatprep.subr.mxu0 0.0
    %122 = vmatpush1.msra.mxu0 0.0
    %123 = vmatprep.subr.mxu0 0.0
    %124 = vmatpush1.msra.mxu0 0.0
    %125 = vmatprep.subr.mxu0 0.0
    %126 = vmatpush1.msra.mxu0 0.0
    %127 = vmatprep.subr.mxu0 0.0
    %128 = vmatpush1.msra.mxu0 0.0
    %129 = vmatprep.subr.mxu0 0.0
    %130 = vmatpush1.msra.mxu0 0.0
    %131 = vmatprep.subr.mxu0 0.0
    %132 = vmatpush1.msra.mxu0 0.0
    %133 = vmatprep.subr.mxu0 0.0
    %134 = vmatpush1.msra.mxu0 0.0
    %135 = vmatprep.subr.mxu0 0.0
    %136 = vmatpush1.msra.mxu0 0.0
    %137 = vmatprep.subr.mxu0 %v83
    %138 = vmatpush1.msra.mxu0 %v82
    %139 = vmatprep.subr.mxu0 %v81
    %140 = vmatpush1.msra.mxu0 %v80
    %141 = vmatprep.subr.mxu0 0.0
    %142 = vmatpush2.msra.mxu0 0.0
    %143 = vmatprep.subr.mxu0 0.0
    %144 = vmatpush2.msra.mxu0 0.0
    %145 = vmatprep.subr.mxu0 0.0
    %146 = vmatpush2.msra.mxu0 0.0
    %147 = vmatprep.subr.mxu0 0.0
    %148 = vmatpush2.msra.mxu0 0.0
    %149 = vmatprep.subr.mxu0 0.0
    %150 = vmatpush2.msra.mxu0 0.0
    %151 = vmatprep.subr.mxu0 0.0
    %152 = vmatpush2.msra.mxu0 0.0
    %153 = vmatprep.subr.mxu0 0.0
    %154 = vmatpush2.msra.mxu0 0.0
    %155 = vmatprep.subr.mxu0 0.0
    %156 = vmatpush2.msra.mxu0 0.0
    %157 = vmatprep.subr.mxu0 0.0
    %158 = vmatpush2.msra.mxu0 0.0
    %159 = vmatprep.subr.mxu0 0.0
    %160 = vmatpush2.msra.mxu0 0.0
    %161 = vmatprep.subr.mxu0 0.0
    %162 = vmatpush2.msra.mxu0 0.0
    %163 = vmatprep.subr.mxu0 0.0
    %164 = vmatpush2.msra.mxu0 0.0
    %165 = vmatprep.subr.mxu0 0.0
    %166 = vmatpush2.msra.mxu0 0.0
    %167 = vmatprep.subr.mxu0 0.0
    %168 = vmatpush2.msra.mxu0 0.0
    %169 = vmatprep.subr.mxu0 0.0
    %170 = vmatpush2.msra.mxu0 0.0
    %171 = vmatprep.subr.mxu0 0.0
    %172 = vmatpush2.msra.mxu0 0.0
    %173 = vmatprep.mubr.f32.mxu0 0.0
    %174 = vmatmul.mubr.f32.gmra.mxu0 %v107
    %v175 = vpop.f32.mrf.mxu0
    %v176 = vadd.f32 %v98, %v175
    %v177 = vpop.f32.mrf.mxu0
    %v178 = vadd.f32 %v102, %v177
    %179 = vdwg.mxu0
    %s180 = scalar_lea.vmem [#allocation2], 2
    %v181 = vld [vmem:[%s180] sm:$0x3]
    %v183 = vsel %vm105, %v181, 0
    %185 = vmatprep.subr.mxu0 0.0
    %186 = vmatpush1.msra.mxu0 0.0
    %187 = vmatprep.subr.mxu0 0.0
    %188 = vmatpush1.msra.mxu0 0.0
    %189 = vmatprep.subr.mxu0 0.0
    %190 = vmatpush1.msra.mxu0 0.0
    %191 = vmatprep.subr.mxu0 0.0
    %192 = vmatpush1.msra.mxu0 0.0
    %193 = vmatprep.subr.mxu0 0.0
    %194 = vmatpush1.msra.mxu0 0.0
    %195 = vmatprep.subr.mxu0 0.0
    %196 = vmatpush1.msra.mxu0 0.0
    %197 = vmatprep.subr.mxu0 0.0
    %198 = vmatpush1.msra.mxu0 0.0
    %199 = vmatprep.subr.mxu0 0.0
    %200 = vmatpush1.msra.mxu0 0.0
    %201 = vmatprep.subr.mxu0 0.0
    %202 = vmatpush1.msra.mxu0 0.0
    %203 = vmatprep.subr.mxu0 0.0
    %204 = vmatpush1.msra.mxu0 0.0
    %205 = vmatprep.subr.mxu0 0.0
    %206 = vmatpush1.msra.mxu0 0.0
    %207 = vmatprep.subr.mxu0 0.0
    %208 = vmatpush1.msra.mxu0 0.0
    %209 = vmatprep.subr.mxu0 0.0
    %210 = vmatpush1.msra.mxu0 0.0
    %211 = vmatprep.subr.mxu0 0.0
    %212 = vmatpush1.msra.mxu0 0.0
    %213 = vmatprep.subr.mxu0 %v83
    %214 = vmatpush1.msra.mxu0 %v82
    %215 = vmatprep.subr.mxu0 %v81
    %216 = vmatpush1.msra.mxu0 %v80
    %217 = vmatprep.subr.mxu0 0.0
    %218 = vmatpush2.msra.mxu0 0.0
    %219 = vmatprep.subr.mxu0 0.0
    %220 = vmatpush2.msra.mxu0 0.0
    %221 = vmatprep.subr.mxu0 0.0
    %222 = vmatpush2.msra.mxu0 0.0
    %223 = vmatprep.subr.mxu0 0.0
    %224 = vmatpush2.msra.mxu0 0.0
    %225 = vmatprep.subr.mxu0 0.0
    %226 = vmatpush2.msra.mxu0 0.0
    %227 = vmatprep.subr.mxu0 0.0
    %228 = vmatpush2.msra.mxu0 0.0
    %229 = vmatprep.subr.mxu0 0.0
    %230 = vmatpush2.msra.mxu0 0.0
    %231 = vmatprep.subr.mxu0 0.0
    %232 = vmatpush2.msra.mxu0 0.0
    %233 = vmatprep.subr.mxu0 0.0
    %234 = vmatpush2.msra.mxu0 0.0
    %235 = vmatprep.subr.mxu0 0.0
    %236 = vmatpush2.msra.mxu0 0.0
    %237 = vmatprep.subr.mxu0 0.0
    %238 = vmatpush2.msra.mxu0 0.0
    %239 = vmatprep.subr.mxu0 0.0
    %240 = vmatpush2.msra.mxu0 0.0
    %241 = vmatprep.subr.mxu0 0.0
    %242 = vmatpush2.msra.mxu0 0.0
    %243 = vmatprep.subr.mxu0 0.0
    %244 = vmatpush2.msra.mxu0 0.0
    %245 = vmatprep.subr.mxu0 0.0
    %246 = vmatpush2.msra.mxu0 0.0
    %247 = vmatprep.subr.mxu0 0.0
    %248 = vmatpush2.msra.mxu0 0.0
    %249 = vmatprep.mubr.f32.mxu0 0.0
    %250 = vmatmul.mubr.f32.gmra.mxu0 %v183
    %v251 = vpop.f32.mrf.mxu0
    %v252 = vadd.f32 %v98, %v251
    %v253 = vpop.f32.mrf.mxu0
    %v254 = vadd.f32 %v102, %v253
    %255 = vdwg.mxu0
    %s256 = scalar_lea.vmem [#allocation2], 4
    %v257 = vld [vmem:[%s256] sm:$0x3]
    %v259 = vsel %vm105, %v257, 0
    %261 = vmatprep.subr.mxu0 0.0
    %262 = vmatpush1.msra.mxu0 0.0
    %263 = vmatprep.subr.mxu0 0.0
    %264 = vmatpush1.msra.mxu0 0.0
    %265 = vmatprep.subr.mxu0 0.0
    %266 = vmatpush1.msra.mxu0 0.0
    %267 = vmatprep.subr.mxu0 0.0
    %268 = vmatpush1.msra.mxu0 0.0
    %269 = vmatprep.subr.mxu0 0.0
    %270 = vmatpush1.msra.mxu0 0.0
    %271 = vmatprep.subr.mxu0 0.0
    %272 = vmatpush1.msra.mxu0 0.0
    %273 = vmatprep.subr.mxu0 0.0
    %274 = vmatpush1.msra.mxu0 0.0
    %275 = vmatprep.subr.mxu0 0.0
    %276 = vmatpush1.msra.mxu0 0.0
    %277 = vmatprep.subr.mxu0 0.0
    %278 = vmatpush1.msra.mxu0 0.0
    %279 = vmatprep.subr.mxu0 0.0
    %280 = vmatpush1.msra.mxu0 0.0
    %281 = vmatprep.subr.mxu0 0.0
    %282 = vmatpush1.msra.mxu0 0.0
    %283 = vmatprep.subr.mxu0 0.0
    %284 = vmatpush1.msra.mxu0 0.0
    %285 = vmatprep.subr.mxu0 0.0
    %286 = vmatpush1.msra.mxu0 0.0
    %287 = vmatprep.subr.mxu0 0.0
    %288 = vmatpush1.msra.mxu0 0.0
    %289 = vmatprep.subr.mxu0 %v83
    %290 = vmatpush1.msra.mxu0 %v82
    %291 = vmatprep.subr.mxu0 %v81
    %292 = vmatpush1.msra.mxu0 %v80
    %293 = vmatprep.subr.mxu0 0.0
    %294 = vmatpush2.msra.mxu0 0.0
    %295 = vmatprep.subr.mxu0 0.0
    %296 = vmatpush2.msra.mxu0 0.0
    %297 = vmatprep.subr.mxu0 0.0
    %298 = vmatpush2.msra.mxu0 0.0
    %299 = vmatprep.subr.mxu0 0.0
    %300 = vmatpush2.msra.mxu0 0.0
    %301 = vmatprep.subr.mxu0 0.0
    %302 = vmatpush2.msra.mxu0 0.0
    %303 = vmatprep.subr.mxu0 0.0
    %304 = vmatpush2.msra.mxu0 0.0
    %305 = vmatprep.subr.mxu0 0.0
    %306 = vmatpush2.msra.mxu0 0.0
    %307 = vmatprep.subr.mxu0 0.0
    %308 = vmatpush2.msra.mxu0 0.0
    %309 = vmatprep.subr.mxu0 0.0
    %310 = vmatpush2.msra.mxu0 0.0
    %311 = vmatprep.subr.mxu0 0.0
    %312 = vmatpush2.msra.mxu0 0.0
    %313 = vmatprep.subr.mxu0 0.0
    %314 = vmatpush2.msra.mxu0 0.0
    %315 = vmatprep.subr.mxu0 0.0
    %316 = vmatpush2.msra.mxu0 0.0
    %317 = vmatprep.subr.mxu0 0.0
    %318 = vmatpush2.msra.mxu0 0.0
    %319 = vmatprep.subr.mxu0 0.0
    %320 = vmatpush2.msra.mxu0 0.0
    %321 = vmatprep.subr.mxu0 0.0
    %322 = vmatpush2.msra.mxu0 0.0
    %323 = vmatprep.subr.mxu0 0.0
    %324 = vmatpush2.msra.mxu0 0.0
    %325 = vmatprep.mubr.f32.mxu0 0.0
    %326 = vmatmul.mubr.f32.gmra.mxu0 %v259
    %v327 = vpop.f32.mrf.mxu0
    %v328 = vadd.f32 %v98, %v327
    %v329 = vpop.f32.mrf.mxu0
    %v330 = vadd.f32 %v102, %v329
    %331 = vdwg.mxu0
    %s332 = scalar_lea.vmem [#allocation2], 6
    %v333 = vld [vmem:[%s332] sm:$0x3]
    %v335 = vsel %vm105, %v333, 0
    %337 = vmatprep.subr.mxu0 0.0
    %338 = vmatpush1.msra.mxu0 0.0
    %339 = vmatprep.subr.mxu0 0.0
    %340 = vmatpush1.msra.mxu0 0.0
    %341 = vmatprep.subr.mxu0 0.0
    %342 = vmatpush1.msra.mxu0 0.0
    %343 = vmatprep.subr.mxu0 0.0
    %344 = vmatpush1.msra.mxu0 0.0
    %345 = vmatprep.subr.mxu0 0.0
    %346 = vmatpush1.msra.mxu0 0.0
    %347 = vmatprep.subr.mxu0 0.0
    %348 = vmatpush1.msra.mxu0 0.0
    %349 = vmatprep.subr.mxu0 0.0
    %350 = vmatpush1.msra.mxu0 0.0
    %351 = vmatprep.subr.mxu0 0.0
    %352 = vmatpush1.msra.mxu0 0.0
    %353 = vmatprep.subr.mxu0 0.0
    %354 = vmatpush1.msra.mxu0 0.0
    %355 = vmatprep.subr.mxu0 0.0
    %356 = vmatpush1.msra.mxu0 0.0
    %357 = vmatprep.subr.mxu0 0.0
    %358 = vmatpush1.msra.mxu0 0.0
    %359 = vmatprep.subr.mxu0 0.0
    %360 = vmatpush1.msra.mxu0 0.0
    %361 = vmatprep.subr.mxu0 0.0
    %362 = vmatpush1.msra.mxu0 0.0
    %363 = vmatprep.subr.mxu0 0.0
    %364 = vmatpush1.msra.mxu0 0.0
    %365 = vmatprep.subr.mxu0 %v83
    %366 = vmatpush1.msra.mxu0 %v82
    %367 = vmatprep.subr.mxu0 %v81
    %368 = vmatpush1.msra.mxu0 %v80
    %369 = vmatprep.subr.mxu0 0.0
    %370 = vmatpush2.msra.mxu0 0.0
    %371 = vmatprep.subr.mxu0 0.0
    %372 = vmatpush2.msra.mxu0 0.0
    %373 = vmatprep.subr.mxu0 0.0
    %374 = vmatpush2.msra.mxu0 0.0
    %375 = vmatprep.subr.mxu0 0.0
    %376 = vmatpush2.msra.mxu0 0.0
    %377 = vmatprep.subr.mxu0 0.0
    %378 = vmatpush2.msra.mxu0 0.0
    %379 = vmatprep.subr.mxu0 0.0
    %380 = vmatpush2.msra.mxu0 0.0
    %381 = vmatprep.subr.mxu0 0.0
    %382 = vmatpush2.msra.mxu0 0.0
    %383 = vmatprep.subr.mxu0 0.0
    %384 = vmatpush2.msra.mxu0 0.0
    %385 = vmatprep.subr.mxu0 0.0
    %386 = vmatpush2.msra.mxu0 0.0
    %387 = vmatprep.subr.mxu0 0.0
    %388 = vmatpush2.msra.mxu0 0.0
    %389 = vmatprep.subr.mxu0 0.0
    %390 = vmatpush2.msra.mxu0 0.0
    %391 = vmatprep.subr.mxu0 0.0
    %392 = vmatpush2.msra.mxu0 0.0
    %393 = vmatprep.subr.mxu0 0.0
    %394 = vmatpush2.msra.mxu0 0.0
    %395 = vmatprep.subr.mxu0 0.0
    %396 = vmatpush2.msra.mxu0 0.0
    %397 = vmatprep.subr.mxu0 0.0
    %398 = vmatpush2.msra.mxu0 0.0
    %399 = vmatprep.subr.mxu0 0.0
    %400 = vmatpush2.msra.mxu0 0.0
    %401 = vmatprep.mubr.f32.mxu0 0.0
    %402 = vmatmul.mubr.f32.gmra.mxu0 %v335
    %v403 = vpop.f32.mrf.mxu0
    %v404 = vadd.f32 %v98, %v403
    %v405 = vpop.f32.mrf.mxu0
    %v406 = vadd.f32 %v102, %v405
    %407 = vdwg.mxu0
    %s408 = scalar_lea.vmem [#allocation2], 8
    %v409 = vld [vmem:[%s408] sm:$0x3]
    %v411 = vsel %vm105, %v409, 0
    %413 = vmatprep.subr.mxu0 0.0
    %414 = vmatpush1.msra.mxu0 0.0
    %415 = vmatprep.subr.mxu0 0.0
    %416 = vmatpush1.msra.mxu0 0.0
    %417 = vmatprep.subr.mxu0 0.0
    %418 = vmatpush1.msra.mxu0 0.0
    %419 = vmatprep.subr.mxu0 0.0
    %420 = vmatpush1.msra.mxu0 0.0
    %421 = vmatprep.subr.mxu0 0.0
    %422 = vmatpush1.msra.mxu0 0.0
    %423 = vmatprep.subr.mxu0 0.0
    %424 = vmatpush1.msra.mxu0 0.0
    %425 = vmatprep.subr.mxu0 0.0
    %426 = vmatpush1.msra.mxu0 0.0
    %427 = vmatprep.subr.mxu0 0.0
    %428 = vmatpush1.msra.mxu0 0.0
    %429 = vmatprep.subr.mxu0 0.0
    %430 = vmatpush1.msra.mxu0 0.0
    %431 = vmatprep.subr.mxu0 0.0
    %432 = vmatpush1.msra.mxu0 0.0
    %433 = vmatprep.subr.mxu0 0.0
    %434 = vmatpush1.msra.mxu0 0.0
    %435 = vmatprep.subr.mxu0 0.0
    %436 = vmatpush1.msra.mxu0 0.0
    %437 = vmatprep.subr.mxu0 0.0
    %438 = vmatpush1.msra.mxu0 0.0
    %439 = vmatprep.subr.mxu0 0.0
    %440 = vmatpush1.msra.mxu0 0.0
    %441 = vmatprep.subr.mxu0 %v83
    %442 = vmatpush1.msra.mxu0 %v82
    %443 = vmatprep.subr.mxu0 %v81
    %444 = vmatpush1.msra.mxu0 %v80
    %445 = vmatprep.subr.mxu0 0.0
    %446 = vmatpush2.msra.mxu0 0.0
    %447 = vmatprep.subr.mxu0 0.0
    %448 = vmatpush2.msra.mxu0 0.0
    %449 = vmatprep.subr.mxu0 0.0
    %450 = vmatpush2.msra.mxu0 0.0
    %451 = vmatprep.subr.mxu0 0.0
    %452 = vmatpush2.msra.mxu0 0.0
    %453 = vmatprep.subr.mxu0 0.0
    %454 = vmatpush2.msra.mxu0 0.0
    %455 = vmatprep.subr.mxu0 0.0
    %456 = vmatpush2.msra.mxu0 0.0
    %457 = vmatprep.subr.mxu0 0.0
    %458 = vmatpush2.msra.mxu0 0.0
    %459 = vmatprep.subr.mxu0 0.0
    %460 = vmatpush2.msra.mxu0 0.0
    %461 = vmatprep.subr.mxu0 0.0
    %462 = vmatpush2.msra.mxu0 0.0
    %463 = vmatprep.subr.mxu0 0.0
    %464 = vmatpush2.msra.mxu0 0.0
    %465 = vmatprep.subr.mxu0 0.0
    %466 = vmatpush2.msra.mxu0 0.0
    %467 = vmatprep.subr.mxu0 0.0
    %468 = vmatpush2.msra.mxu0 0.0
    %469 = vmatprep.subr.mxu0 0.0
    %470 = vmatpush2.msra.mxu0 0.0
    %471 = vmatprep.subr.mxu0 0.0
    %472 = vmatpush2.msra.mxu0 0.0
    %473 = vmatprep.subr.mxu0 0.0
    %474 = vmatpush2.msra.mxu0 0.0
    %475 = vmatprep.subr.mxu0 0.0
    %476 = vmatpush2.msra.mxu0 0.0
    %477 = vmatprep.mubr.f32.mxu0 0.0
    %478 = vmatmul.mubr.f32.gmra.mxu0 %v411
    %v479 = vpop.f32.mrf.mxu0
    %v480 = vadd.f32 %v98, %v479
    %v481 = vpop.f32.mrf.mxu0
    %v482 = vadd.f32 %v102, %v481
    %483 = vdwg.mxu0
    %s484 = scalar_lea.vmem [#allocation2], 10
    %v485 = vld [vmem:[%s484] sm:$0x3]
    %v487 = vsel %vm105, %v485, 0
    %489 = vmatprep.subr.mxu0 0.0
    %490 = vmatpush1.msra.mxu0 0.0
    %491 = vmatprep.subr.mxu0 0.0
    %492 = vmatpush1.msra.mxu0 0.0
    %493 = vmatprep.subr.mxu0 0.0
    %494 = vmatpush1.msra.mxu0 0.0
    %495 = vmatprep.subr.mxu0 0.0
    %496 = vmatpush1.msra.mxu0 0.0
    %497 = vmatprep.subr.mxu0 0.0
    %498 = vmatpush1.msra.mxu0 0.0
    %499 = vmatprep.subr.mxu0 0.0
    %500 = vmatpush1.msra.mxu0 0.0
    %501 = vmatprep.subr.mxu0 0.0
    %502 = vmatpush1.msra.mxu0 0.0
    %503 = vmatprep.subr.mxu0 0.0
    %504 = vmatpush1.msra.mxu0 0.0
    %505 = vmatprep.subr.mxu0 0.0
    %506 = vmatpush1.msra.mxu0 0.0
    %507 = vmatprep.subr.mxu0 0.0
    %508 = vmatpush1.msra.mxu0 0.0
    %509 = vmatprep.subr.mxu0 0.0
    %510 = vmatpush1.msra.mxu0 0.0
    %511 = vmatprep.subr.mxu0 0.0
    %512 = vmatpush1.msra.mxu0 0.0
    %513 = vmatprep.subr.mxu0 0.0
    %514 = vmatpush1.msra.mxu0 0.0
    %515 = vmatprep.subr.mxu0 0.0
    %516 = vmatpush1.msra.mxu0 0.0
    %517 = vmatprep.subr.mxu0 %v83
    %518 = vmatpush1.msra.mxu0 %v82
    %519 = vmatprep.subr.mxu0 %v81
    %520 = vmatpush1.msra.mxu0 %v80
    %521 = vmatprep.subr.mxu0 0.0
    %522 = vmatpush2.msra.mxu0 0.0
    %523 = vmatprep.subr.mxu0 0.0
    %524 = vmatpush2.msra.mxu0 0.0
    %525 = vmatprep.subr.mxu0 0.0
    %526 = vmatpush2.msra.mxu0 0.0
    %527 = vmatprep.subr.mxu0 0.0
    %528 = vmatpush2.msra.mxu0 0.0
    %529 = vmatprep.subr.mxu0 0.0
    %530 = vmatpush2.msra.mxu0 0.0
    %531 = vmatprep.subr.mxu0 0.0
    %532 = vmatpush2.msra.mxu0 0.0
    %533 = vmatprep.subr.mxu0 0.0
    %534 = vmatpush2.msra.mxu0 0.0
    %535 = vmatprep.subr.mxu0 0.0
    %536 = vmatpush2.msra.mxu0 0.0
    %537 = vmatprep.subr.mxu0 0.0
    %538 = vmatpush2.msra.mxu0 0.0
    %539 = vmatprep.subr.mxu0 0.0
    %540 = vmatpush2.msra.mxu0 0.0
    %541 = vmatprep.subr.mxu0 0.0
    %542 = vmatpush2.msra.mxu0 0.0
    %543 = vmatprep.subr.mxu0 0.0
    %544 = vmatpush2.msra.mxu0 0.0
    %545 = vmatprep.subr.mxu0 0.0
    %546 = vmatpush2.msra.mxu0 0.0
    %547 = vmatprep.subr.mxu0 0.0
    %548 = vmatpush2.msra.mxu0 0.0
    %549 = vmatprep.subr.mxu0 0.0
    %550 = vmatpush2.msra.mxu0 0.0
    %551 = vmatprep.subr.mxu0 0.0
    %552 = vmatpush2.msra.mxu0 0.0
    %553 = vmatprep.mubr.f32.mxu0 0.0
    %554 = vmatmul.mubr.f32.gmra.mxu0 %v487
    %v555 = vpop.f32.mrf.mxu0
    %v556 = vadd.f32 %v98, %v555
    %v557 = vpop.f32.mrf.mxu0
    %v558 = vadd.f32 %v102, %v557
    %559 = vdwg.mxu0
    %s560 = scalar_lea.vmem [#allocation2], 12
    %v561 = vld [vmem:[%s560] sm:$0x3]
    %v563 = vsel %vm105, %v561, 0
    %565 = vmatprep.subr.mxu0 0.0
    %566 = vmatpush1.msra.mxu0 0.0
    %567 = vmatprep.subr.mxu0 0.0
    %568 = vmatpush1.msra.mxu0 0.0
    %569 = vmatprep.subr.mxu0 0.0
    %570 = vmatpush1.msra.mxu0 0.0
    %571 = vmatprep.subr.mxu0 0.0
    %572 = vmatpush1.msra.mxu0 0.0
    %573 = vmatprep.subr.mxu0 0.0
    %574 = vmatpush1.msra.mxu0 0.0
    %575 = vmatprep.subr.mxu0 0.0
    %576 = vmatpush1.msra.mxu0 0.0
    %577 = vmatprep.subr.mxu0 0.0
    %578 = vmatpush1.msra.mxu0 0.0
    %579 = vmatprep.subr.mxu0 0.0
    %580 = vmatpush1.msra.mxu0 0.0
    %581 = vmatprep.subr.mxu0 0.0
    %582 = vmatpush1.msra.mxu0 0.0
    %583 = vmatprep.subr.mxu0 0.0
    %584 = vmatpush1.msra.mxu0 0.0
    %585 = vmatprep.subr.mxu0 0.0
    %586 = vmatpush1.msra.mxu0 0.0
    %587 = vmatprep.subr.mxu0 0.0
    %588 = vmatpush1.msra.mxu0 0.0
    %589 = vmatprep.subr.mxu0 0.0
    %590 = vmatpush1.msra.mxu0 0.0
    %591 = vmatprep.subr.mxu0 0.0
    %592 = vmatpush1.msra.mxu0 0.0
    %593 = vmatprep.subr.mxu0 %v83
    %594 = vmatpush1.msra.mxu0 %v82
    %595 = vmatprep.subr.mxu0 %v81
    %596 = vmatpush1.msra.mxu0 %v80
    %597 = vmatprep.subr.mxu0 0.0
    %598 = vmatpush2.msra.mxu0 0.0
    %599 = vmatprep.subr.mxu0 0.0
    %600 = vmatpush2.msra.mxu0 0.0
    %601 = vmatprep.subr.mxu0 0.0
    %602 = vmatpush2.msra.mxu0 0.0
    %603 = vmatprep.subr.mxu0 0.0
    %604 = vmatpush2.msra.mxu0 0.0
    %605 = vmatprep.subr.mxu0 0.0
    %606 = vmatpush2.msra.mxu0 0.0
    %607 = vmatprep.subr.mxu0 0.0
    %608 = vmatpush2.msra.mxu0 0.0
    %609 = vmatprep.subr.mxu0 0.0
    %610 = vmatpush2.msra.mxu0 0.0
    %611 = vmatprep.subr.mxu0 0.0
    %612 = vmatpush2.msra.mxu0 0.0
    %613 = vmatprep.subr.mxu0 0.0
    %614 = vmatpush2.msra.mxu0 0.0
    %615 = vmatprep.subr.mxu0 0.0
    %616 = vmatpush2.msra.mxu0 0.0
    %617 = vmatprep.subr.mxu0 0.0
    %618 = vmatpush2.msra.mxu0 0.0
    %619 = vmatprep.subr.mxu0 0.0
    %620 = vmatpush2.msra.mxu0 0.0
    %621 = vmatprep.subr.mxu0 0.0
    %622 = vmatpush2.msra.mxu0 0.0
    %623 = vmatprep.subr.mxu0 0.0
    %624 = vmatpush2.msra.mxu0 0.0
    %625 = vmatprep.subr.mxu0 0.0
    %626 = vmatpush2.msra.mxu0 0.0
    %627 = vmatprep.subr.mxu0 0.0
    %628 = vmatpush2.msra.mxu0 0.0
    %629 = vmatprep.mubr.f32.mxu0 0.0
    %630 = vmatmul.mubr.f32.gmra.mxu0 %v563
    %v631 = vpop.f32.mrf.mxu0
    %v632 = vadd.f32 %v98, %v631
    %v633 = vpop.f32.mrf.mxu0
    %v634 = vadd.f32 %v102, %v633
    %635 = vdwg.mxu0
    %s636 = scalar_lea.vmem [#allocation2], 14
    %v637 = vld [vmem:[%s636] sm:$0x3]
    %v639 = vsel %vm105, %v637, 0
    %641 = vmatprep.subr.mxu0 0.0
    %642 = vmatpush1.msra.mxu0 0.0
    %643 = vmatprep.subr.mxu0 0.0
    %644 = vmatpush1.msra.mxu0 0.0
    %645 = vmatprep.subr.mxu0 0.0
    %646 = vmatpush1.msra.mxu0 0.0
    %647 = vmatprep.subr.mxu0 0.0
    %648 = vmatpush1.msra.mxu0 0.0
    %649 = vmatprep.subr.mxu0 0.0
    %650 = vmatpush1.msra.mxu0 0.0
    %651 = vmatprep.subr.mxu0 0.0
    %652 = vmatpush1.msra.mxu0 0.0
    %653 = vmatprep.subr.mxu0 0.0
    %654 = vmatpush1.msra.mxu0 0.0
    %655 = vmatprep.subr.mxu0 0.0
    %656 = vmatpush1.msra.mxu0 0.0
    %657 = vmatprep.subr.mxu0 0.0
    %658 = vmatpush1.msra.mxu0 0.0
    %659 = vmatprep.subr.mxu0 0.0
    %660 = vmatpush1.msra.mxu0 0.0
    %661 = vmatprep.subr.mxu0 0.0
    %662 = vmatpush1.msra.mxu0 0.0
    %663 = vmatprep.subr.mxu0 0.0
    %664 = vmatpush1.msra.mxu0 0.0
    %665 = vmatprep.subr.mxu0 0.0
    %666 = vmatpush1.msra.mxu0 0.0
    %667 = vmatprep.subr.mxu0 0.0
    %668 = vmatpush1.msra.mxu0 0.0
    %669 = vmatprep.subr.mxu0 %v83
    %670 = vmatpush1.msra.mxu0 %v82
    %671 = vmatprep.subr.mxu0 %v81
    %672 = vmatpush1.msra.mxu0 %v80
    %673 = vmatprep.subr.mxu0 0.0
    %674 = vmatpush2.msra.mxu0 0.0
    %675 = vmatprep.subr.mxu0 0.0
    %676 = vmatpush2.msra.mxu0 0.0
    %677 = vmatprep.subr.mxu0 0.0
    %678 = vmatpush2.msra.mxu0 0.0
    %679 = vmatprep.subr.mxu0 0.0
    %680 = vmatpush2.msra.mxu0 0.0
    %681 = vmatprep.subr.mxu0 0.0
    %682 = vmatpush2.msra.mxu0 0.0
    %683 = vmatprep.subr.mxu0 0.0
    %684 = vmatpush2.msra.mxu0 0.0
    %685 = vmatprep.subr.mxu0 0.0
    %686 = vmatpush2.msra.mxu0 0.0
    %687 = vmatprep.subr.mxu0 0.0
    %688 = vmatpush2.msra.mxu0 0.0
    %689 = vmatprep.subr.mxu0 0.0
    %690 = vmatpush2.msra.mxu0 0.0
    %691 = vmatprep.subr.mxu0 0.0
    %692 = vmatpush2.msra.mxu0 0.0
    %693 = vmatprep.subr.mxu0 0.0
    %694 = vmatpush2.msra.mxu0 0.0
    %695 = vmatprep.subr.mxu0 0.0
    %696 = vmatpush2.msra.mxu0 0.0
    %697 = vmatprep.subr.mxu0 0.0
    %698 = vmatpush2.msra.mxu0 0.0
    %699 = vmatprep.subr.mxu0 0.0
    %700 = vmatpush2.msra.mxu0 0.0
    %701 = vmatprep.subr.mxu0 0.0
    %702 = vmatpush2.msra.mxu0 0.0
    %703 = vmatprep.subr.mxu0 0.0
    %704 = vmatpush2.msra.mxu0 0.0
    %705 = vmatprep.mubr.f32.mxu0 0.0
    %706 = vmatmul.mubr.f32.gmra.mxu0 %v639
    %v707 = vpop.f32.mrf.mxu0
    %v708 = vadd.f32 %v98, %v707
    %v709 = vpop.f32.mrf.mxu0
    %v710 = vadd.f32 %v102, %v709
    %711 = vdwg.mxu0
    %vm712 = vcmask 261120
    %v714 = vsel %vm712, 0.0, 0
    %716 = vmatprep.subr.mxu0 0.0
    %717 = vmatpush1.msra.mxu0 0.0
    %718 = vmatprep.subr.mxu0 0.0
    %719 = vmatpush1.msra.mxu0 0.0
    %720 = vmatprep.subr.mxu0 0.0
    %721 = vmatpush1.msra.mxu0 0.0
    %722 = vmatprep.subr.mxu0 0.0
    %723 = vmatpush1.msra.mxu0 0.0
    %724 = vmatprep.subr.mxu0 0.0
    %725 = vmatpush1.msra.mxu0 0.0
    %726 = vmatprep.subr.mxu0 0.0
    %727 = vmatpush1.msra.mxu0 0.0
    %728 = vmatprep.subr.mxu0 0.0
    %729 = vmatpush1.msra.mxu0 0.0
    %730 = vmatprep.subr.mxu0 0.0
    %731 = vmatpush1.msra.mxu0 0.0
    %732 = vmatprep.subr.mxu0 0.0
    %733 = vmatpush1.msra.mxu0 0.0
    %734 = vmatprep.subr.mxu0 0.0
    %735 = vmatpush1.msra.mxu0 0.0
    %736 = vmatprep.subr.mxu0 0.0
    %737 = vmatpush1.msra.mxu0 0.0
    %738 = vmatprep.subr.mxu0 0.0
    %739 = vmatpush1.msra.mxu0 0.0
    %740 = vmatprep.subr.mxu0 0.0
    %741 = vmatpush1.msra.mxu0 %v88
    %742 = vmatprep.subr.mxu0 0.0
    %743 = vmatpush1.msra.mxu0 %v87
    %744 = vmatprep.subr.mxu0 0.0
    %745 = vmatpush1.msra.mxu0 %v86
    %746 = vmatprep.subr.mxu0 0.0
    %747 = vmatpush1.msra.mxu0 %v85
    %748 = vmatprep.subr.mxu0 0.0
    %749 = vmatpush2.msra.mxu0 0.0
    %750 = vmatprep.subr.mxu0 0.0
    %751 = vmatpush2.msra.mxu0 0.0
    %752 = vmatprep.subr.mxu0 0.0
    %753 = vmatpush2.msra.mxu0 0.0
    %754 = vmatprep.subr.mxu0 0.0
    %755 = vmatpush2.msra.mxu0 0.0
    %756 = vmatprep.subr.mxu0 0.0
    %757 = vmatpush2.msra.mxu0 0.0
    %758 = vmatprep.subr.mxu0 0.0
    %759 = vmatpush2.msra.mxu0 0.0
    %760 = vmatprep.subr.mxu0 0.0
    %761 = vmatpush2.msra.mxu0 0.0
    %762 = vmatprep.subr.mxu0 0.0
    %763 = vmatpush2.msra.mxu0 0.0
    %764 = vmatprep.subr.mxu0 0.0
    %765 = vmatpush2.msra.mxu0 0.0
    %766 = vmatprep.subr.mxu0 0.0
    %767 = vmatpush2.msra.mxu0 0.0
    %768 = vmatprep.subr.mxu0 0.0
    %769 = vmatpush2.msra.mxu0 0.0
    %770 = vmatprep.subr.mxu0 0.0
    %771 = vmatpush2.msra.mxu0 0.0
    %772 = vmatprep.subr.mxu0 0.0
    %773 = vmatpush2.msra.mxu0 0.0
    %774 = vmatprep.subr.mxu0 0.0
    %775 = vmatpush2.msra.mxu0 0.0
    %776 = vmatprep.subr.mxu0 0.0
    %777 = vmatpush2.msra.mxu0 0.0
    %778 = vmatprep.subr.mxu0 0.0
    %779 = vmatpush2.msra.mxu0 0.0
    %780 = vmatprep.mubr.f32.mxu0 0.0
    %781 = vmatmul.mubr.f32.gmra.mxu0 %v714
    %v782 = vpop.f32.mrf.mxu0
    %v783 = vadd.f32 0.0, %v782
    %v784 = vpop.f32.mrf.mxu0
    %785 = vdwg.mxu0
    %v786 = vadd.f32 %v176, %v783
    %v787 = vxor.u32 %v786, 2147483648
    %v788 = vmul.f32 %v787, 1.442695
    %v789 = vpow.pop %v788
    %v790 = vadd.f32 %v789, 1.0
    %v791 = vrcp.pop %v790
    %v792 = vmul.f32 1.0, %v791
    %v793 = vtanh.pop %v786
    %v794 = vmul.f32 %v792, 0.0
    %796 = vrot.lane.b32.xlu0 %v793, 64
    %v797 = vpop.permute.xlu0 %796
    %v799 = vmul.f32 %v792, %v797
    %801 = vrot.lane.b32.xlu0 %v799, 32
    %v802 = vpop.permute.xlu0 %801
    %v804 = vadd.f32 %v794, %v802
    %v805 = vtanh.pop %v804
    %807 = vrot.lane.b32.xlu0 %v805, 64
    %v808 = vpop.permute.xlu0 %807
    %v810 = vmul.f32 %v792, %v808
    %812 = vrot.lane.b32.xlu0 %v810, 32
    %v813 = vpop.permute.xlu0 %812
    %v814 = vsel %vm712, %v813, 0
    %816 = vmatprep.subr.mxu0 0.0
    %817 = vmatpush1.msra.mxu0 0.0
    %818 = vmatprep.subr.mxu0 0.0
    %819 = vmatpush1.msra.mxu0 0.0
    %820 = vmatprep.subr.mxu0 0.0
    %821 = vmatpush1.msra.mxu0 0.0
    %822 = vmatprep.subr.mxu0 0.0
    %823 = vmatpush1.msra.mxu0 0.0
    %824 = vmatprep.subr.mxu0 0.0
    %825 = vmatpush1.msra.mxu0 0.0
    %826 = vmatprep.subr.mxu0 0.0
    %827 = vmatpush1.msra.mxu0 0.0
    %828 = vmatprep.subr.mxu0 0.0
    %829 = vmatpush1.msra.mxu0 0.0
    %830 = vmatprep.subr.mxu0 0.0
    %831 = vmatpush1.msra.mxu0 0.0
    %832 = vmatprep.subr.mxu0 0.0
    %833 = vmatpush1.msra.mxu0 0.0
    %834 = vmatprep.subr.mxu0 0.0
    %835 = vmatpush1.msra.mxu0 0.0
    %836 = vmatprep.subr.mxu0 0.0
    %837 = vmatpush1.msra.mxu0 0.0
    %838 = vmatprep.subr.mxu0 0.0
    %839 = vmatpush1.msra.mxu0 0.0
    %840 = vmatprep.subr.mxu0 0.0
    %841 = vmatpush1.msra.mxu0 %v88
    %842 = vmatprep.subr.mxu0 0.0
    %843 = vmatpush1.msra.mxu0 %v87
    %844 = vmatprep.subr.mxu0 0.0
    %845 = vmatpush1.msra.mxu0 %v86
    %846 = vmatprep.subr.mxu0 0.0
    %847 = vmatpush1.msra.mxu0 %v85
    %848 = vmatprep.subr.mxu0 0.0
    %849 = vmatpush2.msra.mxu0 0.0
    %850 = vmatprep.subr.mxu0 0.0
    %851 = vmatpush2.msra.mxu0 0.0
    %852 = vmatprep.subr.mxu0 0.0
    %853 = vmatpush2.msra.mxu0 0.0
    %854 = vmatprep.subr.mxu0 0.0
    %855 = vmatpush2.msra.mxu0 0.0
    %856 = vmatprep.subr.mxu0 0.0
    %857 = vmatpush2.msra.mxu0 0.0
    %858 = vmatprep.subr.mxu0 0.0
    %859 = vmatpush2.msra.mxu0 0.0
    %860 = vmatprep.subr.mxu0 0.0
    %861 = vmatpush2.msra.mxu0 0.0
    %862 = vmatprep.subr.mxu0 0.0
    %863 = vmatpush2.msra.mxu0 0.0
    %864 = vmatprep.subr.mxu0 0.0
    %865 = vmatpush2.msra.mxu0 0.0
    %866 = vmatprep.subr.mxu0 0.0
    %867 = vmatpush2.msra.mxu0 0.0
    %868 = vmatprep.subr.mxu0 0.0
    %869 = vmatpush2.msra.mxu0 0.0
    %870 = vmatprep.subr.mxu0 0.0
    %871 = vmatpush2.msra.mxu0 0.0
    %872 = vmatprep.subr.mxu0 0.0
    %873 = vmatpush2.msra.mxu0 0.0
    %874 = vmatprep.subr.mxu0 0.0
    %875 = vmatpush2.msra.mxu0 0.0
    %876 = vmatprep.subr.mxu0 0.0
    %877 = vmatpush2.msra.mxu0 0.0
    %878 = vmatprep.subr.mxu0 0.0
    %879 = vmatpush2.msra.mxu0 0.0
    %880 = vmatprep.mubr.f32.mxu0 0.0
    %881 = vmatmul.mubr.f32.gmra.mxu0 %v814
    %v882 = vpop.f32.mrf.mxu0
    %v883 = vadd.f32 0.0, %v882
    %v884 = vpop.f32.mrf.mxu0
    %885 = vdwg.mxu0
    %v886 = vadd.f32 %v252, %v883
    %v887 = vxor.u32 %v886, 2147483648
    %v888 = vmul.f32 %v887, 1.442695
    %v889 = vpow.pop %v888
    %v890 = vadd.f32 %v889, 1.0
    %v891 = vrcp.pop %v890
    %v892 = vmul.f32 1.0, %v891
    %v893 = vtanh.pop %v886
    %v894 = vmul.f32 %v892, %v804
    %896 = vrot.lane.b32.xlu0 %v893, 64
    %v897 = vpop.permute.xlu0 %896
    %v899 = vmul.f32 %v892, %v897
    %901 = vrot.lane.b32.xlu0 %v899, 32
    %v902 = vpop.permute.xlu0 %901
    %v904 = vadd.f32 %v894, %v902
    %v905 = vtanh.pop %v904
    %907 = vrot.lane.b32.xlu0 %v905, 64
    %v908 = vpop.permute.xlu0 %907
    %v910 = vmul.f32 %v892, %v908
    %912 = vrot.lane.b32.xlu0 %v910, 32
    %v913 = vpop.permute.xlu0 %912
    %v914 = vsel %vm712, %v913, 0
    %916 = vmatprep.subr.mxu0 0.0
    %917 = vmatpush1.msra.mxu0 0.0
    %918 = vmatprep.subr.mxu0 0.0
    %919 = vmatpush1.msra.mxu0 0.0
    %920 = vmatprep.subr.mxu0 0.0
    %921 = vmatpush1.msra.mxu0 0.0
    %922 = vmatprep.subr.mxu0 0.0
    %923 = vmatpush1.msra.mxu0 0.0
    %924 = vmatprep.subr.mxu0 0.0
    %925 = vmatpush1.msra.mxu0 0.0
    %926 = vmatprep.subr.mxu0 0.0
    %927 = vmatpush1.msra.mxu0 0.0
    %928 = vmatprep.subr.mxu0 0.0
    %929 = vmatpush1.msra.mxu0 0.0
    %930 = vmatprep.subr.mxu0 0.0
    %931 = vmatpush1.msra.mxu0 0.0
    %932 = vmatprep.subr.mxu0 0.0
    %933 = vmatpush1.msra.mxu0 0.0
    %934 = vmatprep.subr.mxu0 0.0
    %935 = vmatpush1.msra.mxu0 0.0
    %936 = vmatprep.subr.mxu0 0.0
    %937 = vmatpush1.msra.mxu0 0.0
    %938 = vmatprep.subr.mxu0 0.0
    %939 = vmatpush1.msra.mxu0 0.0
    %940 = vmatprep.subr.mxu0 0.0
    %941 = vmatpush1.msra.mxu0 %v88
    %942 = vmatprep.subr.mxu0 0.0
    %943 = vmatpush1.msra.mxu0 %v87
    %944 = vmatprep.subr.mxu0 0.0
    %945 = vmatpush1.msra.mxu0 %v86
    %946 = vmatprep.subr.mxu0 0.0
    %947 = vmatpush1.msra.mxu0 %v85
    %948 = vmatprep.subr.mxu0 0.0
    %949 = vmatpush2.msra.mxu0 0.0
    %950 = vmatprep.subr.mxu0 0.0
    %951 = vmatpush2.msra.mxu0 0.0
    %952 = vmatprep.subr.mxu0 0.0
    %953 = vmatpush2.msra.mxu0 0.0
    %954 = vmatprep.subr.mxu0 0.0
    %955 = vmatpush2.msra.mxu0 0.0
    %956 = vmatprep.subr.mxu0 0.0
    %957 = vmatpush2.msra.mxu0 0.0
    %958 = vmatprep.subr.mxu0 0.0
    %959 = vmatpush2.msra.mxu0 0.0
    %960 = vmatprep.subr.mxu0 0.0
    %961 = vmatpush2.msra.mxu0 0.0
    %962 = vmatprep.subr.mxu0 0.0
    %963 = vmatpush2.msra.mxu0 0.0
    %964 = vmatprep.subr.mxu0 0.0
    %965 = vmatpush2.msra.mxu0 0.0
    %966 = vmatprep.subr.mxu0 0.0
    %967 = vmatpush2.msra.mxu0 0.0
    %968 = vmatprep.subr.mxu0 0.0
    %969 = vmatpush2.msra.mxu0 0.0
    %970 = vmatprep.subr.mxu0 0.0
    %971 = vmatpush2.msra.mxu0 0.0
    %972 = vmatprep.subr.mxu0 0.0
    %973 = vmatpush2.msra.mxu0 0.0
    %974 = vmatprep.subr.mxu0 0.0
    %975 = vmatpush2.msra.mxu0 0.0
    %976 = vmatprep.subr.mxu0 0.0
    %977 = vmatpush2.msra.mxu0 0.0
    %978 = vmatprep.subr.mxu0 0.0
    %979 = vmatpush2.msra.mxu0 0.0
    %980 = vmatprep.mubr.f32.mxu0 0.0
    %981 = vmatmul.mubr.f32.gmra.mxu0 %v914
    %v982 = vpop.f32.mrf.mxu0
    %v983 = vadd.f32 0.0, %v982
    %v984 = vpop.f32.mrf.mxu0
    %985 = vdwg.mxu0
    %v986 = vadd.f32 %v328, %v983
    %v987 = vxor.u32 %v986, 2147483648
    %v988 = vmul.f32 %v987, 1.442695
    %v989 = vpow.pop %v988
    %v990 = vadd.f32 %v989, 1.0
    %v991 = vrcp.pop %v990
    %v992 = vmul.f32 1.0, %v991
    %v993 = vtanh.pop %v986
    %v994 = vmul.f32 %v992, %v904
    %996 = vrot.lane.b32.xlu0 %v993, 64
    %v997 = vpop.permute.xlu0 %996
    %v999 = vmul.f32 %v992, %v997
    %1001 = vrot.lane.b32.xlu0 %v999, 32
    %v1002 = vpop.permute.xlu0 %1001
    %v1004 = vadd.f32 %v994, %v1002
    %v1005 = vtanh.pop %v1004
    %1007 = vrot.lane.b32.xlu0 %v1005, 64
    %v1008 = vpop.permute.xlu0 %1007
    %v1010 = vmul.f32 %v992, %v1008
    %1012 = vrot.lane.b32.xlu0 %v1010, 32
    %v1013 = vpop.permute.xlu0 %1012
    %v1014 = vsel %vm712, %v1013, 0
    %1016 = vmatprep.subr.mxu0 0.0
    %1017 = vmatpush1.msra.mxu0 0.0
    %1018 = vmatprep.subr.mxu0 0.0
    %1019 = vmatpush1.msra.mxu0 0.0
    %1020 = vmatprep.subr.mxu0 0.0
    %1021 = vmatpush1.msra.mxu0 0.0
    %1022 = vmatprep.subr.mxu0 0.0
    %1023 = vmatpush1.msra.mxu0 0.0
    %1024 = vmatprep.subr.mxu0 0.0
    %1025 = vmatpush1.msra.mxu0 0.0
    %1026 = vmatprep.subr.mxu0 0.0
    %1027 = vmatpush1.msra.mxu0 0.0
    %1028 = vmatprep.subr.mxu0 0.0
    %1029 = vmatpush1.msra.mxu0 0.0
    %1030 = vmatprep.subr.mxu0 0.0
    %1031 = vmatpush1.msra.mxu0 0.0
    %1032 = vmatprep.subr.mxu0 0.0
    %1033 = vmatpush1.msra.mxu0 0.0
    %1034 = vmatprep.subr.mxu0 0.0
    %1035 = vmatpush1.msra.mxu0 0.0
    %1036 = vmatprep.subr.mxu0 0.0
    %1037 = vmatpush1.msra.mxu0 0.0
    %1038 = vmatprep.subr.mxu0 0.0
    %1039 = vmatpush1.msra.mxu0 0.0
    %1040 = vmatprep.subr.mxu0 0.0
    %1041 = vmatpush1.msra.mxu0 %v88
    %1042 = vmatprep.subr.mxu0 0.0
    %1043 = vmatpush1.msra.mxu0 %v87
    %1044 = vmatprep.subr.mxu0 0.0
    %1045 = vmatpush1.msra.mxu0 %v86
    %1046 = vmatprep.subr.mxu0 0.0
    %1047 = vmatpush1.msra.mxu0 %v85
    %1048 = vmatprep.subr.mxu0 0.0
    %1049 = vmatpush2.msra.mxu0 0.0
    %1050 = vmatprep.subr.mxu0 0.0
    %1051 = vmatpush2.msra.mxu0 0.0
    %1052 = vmatprep.subr.mxu0 0.0
    %1053 = vmatpush2.msra.mxu0 0.0
    %1054 = vmatprep.subr.mxu0 0.0
    %1055 = vmatpush2.msra.mxu0 0.0
    %1056 = vmatprep.subr.mxu0 0.0
    %1057 = vmatpush2.msra.mxu0 0.0
    %1058 = vmatprep.subr.mxu0 0.0
    %1059 = vmatpush2.msra.mxu0 0.0
    %1060 = vmatprep.subr.mxu0 0.0
    %1061 = vmatpush2.msra.mxu0 0.0
    %1062 = vmatprep.subr.mxu0 0.0
    %1063 = vmatpush2.msra.mxu0 0.0
    %1064 = vmatprep.subr.mxu0 0.0
    %1065 = vmatpush2.msra.mxu0 0.0
    %1066 = vmatprep.subr.mxu0 0.0
    %1067 = vmatpush2.msra.mxu0 0.0
    %1068 = vmatprep.subr.mxu0 0.0
    %1069 = vmatpush2.msra.mxu0 0.0
    %1070 = vmatprep.subr.mxu0 0.0
    %1071 = vmatpush2.msra.mxu0 0.0
    %1072 = vmatprep.subr.mxu0 0.0
    %1073 = vmatpush2.msra.mxu0 0.0
    %1074 = vmatprep.subr.mxu0 0.0
    %1075 = vmatpush2.msra.mxu0 0.0
    %1076 = vmatprep.subr.mxu0 0.0
    %1077 = vmatpush2.msra.mxu0 0.0
    %1078 = vmatprep.subr.mxu0 0.0
    %1079 = vmatpush2.msra.mxu0 0.0
    %1080 = vmatprep.mubr.f32.mxu0 0.0
    %1081 = vmatmul.mubr.f32.gmra.mxu0 %v1014
    %v1082 = vpop.f32.mrf.mxu0
    %v1083 = vadd.f32 0.0, %v1082
    %v1084 = vpop.f32.mrf.mxu0
    %1085 = vdwg.mxu0
    %v1086 = vadd.f32 %v404, %v1083
    %v1087 = vxor.u32 %v1086, 2147483648
    %v1088 = vmul.f32 %v1087, 1.442695
    %v1089 = vpow.pop %v1088
    %v1090 = vadd.f32 %v1089, 1.0
    %v1091 = vrcp.pop %v1090
    %v1092 = vmul.f32 1.0, %v1091
    %v1093 = vtanh.pop %v1086
    %v1094 = vmul.f32 %v1092, %v1004
    %1096 = vrot.lane.b32.xlu0 %v1093, 64
    %v1097 = vpop.permute.xlu0 %1096
    %v1099 = vmul.f32 %v1092, %v1097
    %1101 = vrot.lane.b32.xlu0 %v1099, 32
    %v1102 = vpop.permute.xlu0 %1101
    %v1104 = vadd.f32 %v1094, %v1102
    %v1105 = vtanh.pop %v1104
    %1107 = vrot.lane.b32.xlu0 %v1105, 64
    %v1108 = vpop.permute.xlu0 %1107
    %v1110 = vmul.f32 %v1092, %v1108
    %1112 = vrot.lane.b32.xlu0 %v1110, 32
    %v1113 = vpop.permute.xlu0 %1112
    %v1114 = vsel %vm712, %v1113, 0
    %1116 = vmatprep.subr.mxu0 0.0
    %1117 = vmatpush1.msra.mxu0 0.0
    %1118 = vmatprep.subr.mxu0 0.0
    %1119 = vmatpush1.msra.mxu0 0.0
    %1120 = vmatprep.subr.mxu0 0.0
    %1121 = vmatpush1.msra.mxu0 0.0
    %1122 = vmatprep.subr.mxu0 0.0
    %1123 = vmatpush1.msra.mxu0 0.0
    %1124 = vmatprep.subr.mxu0 0.0
    %1125 = vmatpush1.msra.mxu0 0.0
    %1126 = vmatprep.subr.mxu0 0.0
    %1127 = vmatpush1.msra.mxu0 0.0
    %1128 = vmatprep.subr.mxu0 0.0
    %1129 = vmatpush1.msra.mxu0 0.0
    %1130 = vmatprep.subr.mxu0 0.0
    %1131 = vmatpush1.msra.mxu0 0.0
    %1132 = vmatprep.subr.mxu0 0.0
    %1133 = vmatpush1.msra.mxu0 0.0
    %1134 = vmatprep.subr.mxu0 0.0
    %1135 = vmatpush1.msra.mxu0 0.0
    %1136 = vmatprep.subr.mxu0 0.0
    %1137 = vmatpush1.msra.mxu0 0.0
    %1138 = vmatprep.subr.mxu0 0.0
    %1139 = vmatpush1.msra.mxu0 0.0
    %1140 = vmatprep.subr.mxu0 0.0
    %1141 = vmatpush1.msra.mxu0 %v88
    %1142 = vmatprep.subr.mxu0 0.0
    %1143 = vmatpush1.msra.mxu0 %v87
    %1144 = vmatprep.subr.mxu0 0.0
    %1145 = vmatpush1.msra.mxu0 %v86
    %1146 = vmatprep.subr.mxu0 0.0
    %1147 = vmatpush1.msra.mxu0 %v85
    %1148 = vmatprep.subr.mxu0 0.0
    %1149 = vmatpush2.msra.mxu0 0.0
    %1150 = vmatprep.subr.mxu0 0.0
    %1151 = vmatpush2.msra.mxu0 0.0
    %1152 = vmatprep.subr.mxu0 0.0
    %1153 = vmatpush2.msra.mxu0 0.0
    %1154 = vmatprep.subr.mxu0 0.0
    %1155 = vmatpush2.msra.mxu0 0.0
    %1156 = vmatprep.subr.mxu0 0.0
    %1157 = vmatpush2.msra.mxu0 0.0
    %1158 = vmatprep.subr.mxu0 0.0
    %1159 = vmatpush2.msra.mxu0 0.0
    %1160 = vmatprep.subr.mxu0 0.0
    %1161 = vmatpush2.msra.mxu0 0.0
    %1162 = vmatprep.subr.mxu0 0.0
    %1163 = vmatpush2.msra.mxu0 0.0
    %1164 = vmatprep.subr.mxu0 0.0
    %1165 = vmatpush2.msra.mxu0 0.0
    %1166 = vmatprep.subr.mxu0 0.0
    %1167 = vmatpush2.msra.mxu0 0.0
    %1168 = vmatprep.subr.mxu0 0.0
    %1169 = vmatpush2.msra.mxu0 0.0
    %1170 = vmatprep.subr.mxu0 0.0
    %1171 = vmatpush2.msra.mxu0 0.0
    %1172 = vmatprep.subr.mxu0 0.0
    %1173 = vmatpush2.msra.mxu0 0.0
    %1174 = vmatprep.subr.mxu0 0.0
    %1175 = vmatpush2.msra.mxu0 0.0
    %1176 = vmatprep.subr.mxu0 0.0
    %1177 = vmatpush2.msra.mxu0 0.0
    %1178 = vmatprep.subr.mxu0 0.0
    %1179 = vmatpush2.msra.mxu0 0.0
    %1180 = vmatprep.mubr.f32.mxu0 0.0
    %1181 = vmatmul.mubr.f32.gmra.mxu0 %v1114
    %v1182 = vpop.f32.mrf.mxu0
    %v1183 = vadd.f32 0.0, %v1182
    %v1184 = vpop.f32.mrf.mxu0
    %1185 = vdwg.mxu0
    %v1186 = vadd.f32 %v480, %v1183
    %v1187 = vxor.u32 %v1186, 2147483648
    %v1188 = vmul.f32 %v1187, 1.442695
    %v1189 = vpow.pop %v1188
    %v1190 = vadd.f32 %v1189, 1.0
    %v1191 = vrcp.pop %v1190
    %v1192 = vmul.f32 1.0, %v1191
    %v1193 = vtanh.pop %v1186
    %v1194 = vmul.f32 %v1192, %v1104
    %1196 = vrot.lane.b32.xlu0 %v1193, 64
    %v1197 = vpop.permute.xlu0 %1196
    %v1199 = vmul.f32 %v1192, %v1197
    %1201 = vrot.lane.b32.xlu0 %v1199, 32
    %v1202 = vpop.permute.xlu0 %1201
    %v1204 = vadd.f32 %v1194, %v1202
    %v1205 = vtanh.pop %v1204
    %1207 = vrot.lane.b32.xlu0 %v1205, 64
    %v1208 = vpop.permute.xlu0 %1207
    %v1210 = vmul.f32 %v1192, %v1208
    %1212 = vrot.lane.b32.xlu0 %v1210, 32
    %v1213 = vpop.permute.xlu0 %1212
    %v1214 = vsel %vm712, %v1213, 0
    %1216 = vmatprep.subr.mxu0 0.0
    %1217 = vmatpush1.msra.mxu0 0.0
    %1218 = vmatprep.subr.mxu0 0.0
    %1219 = vmatpush1.msra.mxu0 0.0
    %1220 = vmatprep.subr.mxu0 0.0
    %1221 = vmatpush1.msra.mxu0 0.0
    %1222 = vmatprep.subr.mxu0 0.0
    %1223 = vmatpush1.msra.mxu0 0.0
    %1224 = vmatprep.subr.mxu0 0.0
    %1225 = vmatpush1.msra.mxu0 0.0
    %1226 = vmatprep.subr.mxu0 0.0
    %1227 = vmatpush1.msra.mxu0 0.0
    %1228 = vmatprep.subr.mxu0 0.0
    %1229 = vmatpush1.msra.mxu0 0.0
    %1230 = vmatprep.subr.mxu0 0.0
    %1231 = vmatpush1.msra.mxu0 0.0
    %1232 = vmatprep.subr.mxu0 0.0
    %1233 = vmatpush1.msra.mxu0 0.0
    %1234 = vmatprep.subr.mxu0 0.0
    %1235 = vmatpush1.msra.mxu0 0.0
    %1236 = vmatprep.subr.mxu0 0.0
    %1237 = vmatpush1.msra.mxu0 0.0
    %1238 = vmatprep.subr.mxu0 0.0
    %1239 = vmatpush1.msra.mxu0 0.0
    %1240 = vmatprep.subr.mxu0 0.0
    %1241 = vmatpush1.msra.mxu0 %v88
    %1242 = vmatprep.subr.mxu0 0.0
    %1243 = vmatpush1.msra.mxu0 %v87
    %1244 = vmatprep.subr.mxu0 0.0
    %1245 = vmatpush1.msra.mxu0 %v86
    %1246 = vmatprep.subr.mxu0 0.0
    %1247 = vmatpush1.msra.mxu0 %v85
    %1248 = vmatprep.subr.mxu0 0.0
    %1249 = vmatpush2.msra.mxu0 0.0
    %1250 = vmatprep.subr.mxu0 0.0
    %1251 = vmatpush2.msra.mxu0 0.0
    %1252 = vmatprep.subr.mxu0 0.0
    %1253 = vmatpush2.msra.mxu0 0.0
    %1254 = vmatprep.subr.mxu0 0.0
    %1255 = vmatpush2.msra.mxu0 0.0
    %1256 = vmatprep.subr.mxu0 0.0
    %1257 = vmatpush2.msra.mxu0 0.0
    %1258 = vmatprep.subr.mxu0 0.0
    %1259 = vmatpush2.msra.mxu0 0.0
    %1260 = vmatprep.subr.mxu0 0.0
    %1261 = vmatpush2.msra.mxu0 0.0
    %1262 = vmatprep.subr.mxu0 0.0
    %1263 = vmatpush2.msra.mxu0 0.0
    %1264 = vmatprep.subr.mxu0 0.0
    %1265 = vmatpush2.msra.mxu0 0.0
    %1266 = vmatprep.subr.mxu0 0.0
    %1267 = vmatpush2.msra.mxu0 0.0
    %1268 = vmatprep.subr.mxu0 0.0
    %1269 = vmatpush2.msra.mxu0 0.0
    %1270 = vmatprep.subr.mxu0 0.0
    %1271 = vmatpush2.msra.mxu0 0.0
    %1272 = vmatprep.subr.mxu0 0.0
    %1273 = vmatpush2.msra.mxu0 0.0
    %1274 = vmatprep.subr.mxu0 0.0
    %1275 = vmatpush2.msra.mxu0 0.0
    %1276 = vmatprep.subr.mxu0 0.0
    %1277 = vmatpush2.msra.mxu0 0.0
    %1278 = vmatprep.subr.mxu0 0.0
    %1279 = vmatpush2.msra.mxu0 0.0
    %1280 = vmatprep.mubr.f32.mxu0 0.0
    %1281 = vmatmul.mubr.f32.gmra.mxu0 %v1214
    %v1282 = vpop.f32.mrf.mxu0
    %v1283 = vadd.f32 0.0, %v1282
    %v1284 = vpop.f32.mrf.mxu0
    %1285 = vdwg.mxu0
    %v1286 = vadd.f32 %v556, %v1283
    %v1287 = vxor.u32 %v1286, 2147483648
    %v1288 = vmul.f32 %v1287, 1.442695
    %v1289 = vpow.pop %v1288
    %v1290 = vadd.f32 %v1289, 1.0
    %v1291 = vrcp.pop %v1290
    %v1292 = vmul.f32 1.0, %v1291
    %v1293 = vtanh.pop %v1286
    %v1294 = vmul.f32 %v1292, %v1204
    %1296 = vrot.lane.b32.xlu0 %v1293, 64
    %v1297 = vpop.permute.xlu0 %1296
    %v1299 = vmul.f32 %v1292, %v1297
    %1301 = vrot.lane.b32.xlu0 %v1299, 32
    %v1302 = vpop.permute.xlu0 %1301
    %v1304 = vadd.f32 %v1294, %v1302
    %v1305 = vtanh.pop %v1304
    %1307 = vrot.lane.b32.xlu0 %v1305, 64
    %v1308 = vpop.permute.xlu0 %1307
    %v1310 = vmul.f32 %v1292, %v1308
    %1312 = vrot.lane.b32.xlu0 %v1310, 32
    %v1313 = vpop.permute.xlu0 %1312
    %v1314 = vsel %vm712, %v1313, 0
    %1316 = vmatprep.subr.mxu0 0.0
    %1317 = vmatpush1.msra.mxu0 0.0
    %1318 = vmatprep.subr.mxu0 0.0
    %1319 = vmatpush1.msra.mxu0 0.0
    %1320 = vmatprep.subr.mxu0 0.0
    %1321 = vmatpush1.msra.mxu0 0.0
    %1322 = vmatprep.subr.mxu0 0.0
    %1323 = vmatpush1.msra.mxu0 0.0
    %1324 = vmatprep.subr.mxu0 0.0
    %1325 = vmatpush1.msra.mxu0 0.0
    %1326 = vmatprep.subr.mxu0 0.0
    %1327 = vmatpush1.msra.mxu0 0.0
    %1328 = vmatprep.subr.mxu0 0.0
    %1329 = vmatpush1.msra.mxu0 0.0
    %1330 = vmatprep.subr.mxu0 0.0
    %1331 = vmatpush1.msra.mxu0 0.0
    %1332 = vmatprep.subr.mxu0 0.0
    %1333 = vmatpush1.msra.mxu0 0.0
    %1334 = vmatprep.subr.mxu0 0.0
    %1335 = vmatpush1.msra.mxu0 0.0
    %1336 = vmatprep.subr.mxu0 0.0
    %1337 = vmatpush1.msra.mxu0 0.0
    %1338 = vmatprep.subr.mxu0 0.0
    %1339 = vmatpush1.msra.mxu0 0.0
    %1340 = vmatprep.subr.mxu0 0.0
    %1341 = vmatpush1.msra.mxu0 %v88
    %1342 = vmatprep.subr.mxu0 0.0
    %1343 = vmatpush1.msra.mxu0 %v87
    %1344 = vmatprep.subr.mxu0 0.0
    %1345 = vmatpush1.msra.mxu0 %v86
    %1346 = vmatprep.subr.mxu0 0.0
    %1347 = vmatpush1.msra.mxu0 %v85
    %1348 = vmatprep.subr.mxu0 0.0
    %1349 = vmatpush2.msra.mxu0 0.0
    %1350 = vmatprep.subr.mxu0 0.0
    %1351 = vmatpush2.msra.mxu0 0.0
    %1352 = vmatprep.subr.mxu0 0.0
    %1353 = vmatpush2.msra.mxu0 0.0
    %1354 = vmatprep.subr.mxu0 0.0
    %1355 = vmatpush2.msra.mxu0 0.0
    %1356 = vmatprep.subr.mxu0 0.0
    %1357 = vmatpush2.msra.mxu0 0.0
    %1358 = vmatprep.subr.mxu0 0.0
    %1359 = vmatpush2.msra.mxu0 0.0
    %1360 = vmatprep.subr.mxu0 0.0
    %1361 = vmatpush2.msra.mxu0 0.0
    %1362 = vmatprep.subr.mxu0 0.0
    %1363 = vmatpush2.msra.mxu0 0.0
    %1364 = vmatprep.subr.mxu0 0.0
    %1365 = vmatpush2.msra.mxu0 0.0
    %1366 = vmatprep.subr.mxu0 0.0
    %1367 = vmatpush2.msra.mxu0 0.0
    %1368 = vmatprep.subr.mxu0 0.0
    %1369 = vmatpush2.msra.mxu0 0.0
    %1370 = vmatprep.subr.mxu0 0.0
    %1371 = vmatpush2.msra.mxu0 0.0
    %1372 = vmatprep.subr.mxu0 0.0
    %1373 = vmatpush2.msra.mxu0 0.0
    %1374 = vmatprep.subr.mxu0 0.0
    %1375 = vmatpush2.msra.mxu0 0.0
    %1376 = vmatprep.subr.mxu0 0.0
    %1377 = vmatpush2.msra.mxu0 0.0
    %1378 = vmatprep.subr.mxu0 0.0
    %1379 = vmatpush2.msra.mxu0 0.0
    %1380 = vmatprep.mubr.f32.mxu0 0.0
    %1381 = vmatmul.mubr.f32.gmra.mxu0 %v1314
    %v1382 = vpop.f32.mrf.mxu0
    %v1383 = vadd.f32 0.0, %v1382
    %v1384 = vpop.f32.mrf.mxu0
    %1385 = vdwg.mxu0
    %v1386 = vadd.f32 %v632, %v1383
    %v1387 = vxor.u32 %v1386, 2147483648
    %v1388 = vmul.f32 %v1387, 1.442695
    %v1389 = vpow.pop %v1388
    %v1390 = vadd.f32 %v1389, 1.0
    %v1391 = vrcp.pop %v1390
    %v1392 = vmul.f32 1.0, %v1391
    %v1393 = vtanh.pop %v1386
    %v1394 = vmul.f32 %v1392, %v1304
    %1396 = vrot.lane.b32.xlu0 %v1393, 64
    %v1397 = vpop.permute.xlu0 %1396
    %v1399 = vmul.f32 %v1392, %v1397
    %1401 = vrot.lane.b32.xlu0 %v1399, 32
    %v1402 = vpop.permute.xlu0 %1401
    %v1404 = vadd.f32 %v1394, %v1402
    %v1405 = vtanh.pop %v1404
    %1407 = vrot.lane.b32.xlu0 %v1405, 64
    %v1408 = vpop.permute.xlu0 %1407
    %v1410 = vmul.f32 %v1392, %v1408
    %1412 = vrot.lane.b32.xlu0 %v1410, 32
    %v1413 = vpop.permute.xlu0 %1412
    %v1414 = vsel %vm712, %v1413, 0
    %1416 = vmatprep.subr.mxu0 0.0
    %1417 = vmatpush1.msra.mxu0 0.0
    %1418 = vmatprep.subr.mxu0 0.0
    %1419 = vmatpush1.msra.mxu0 0.0
    %1420 = vmatprep.subr.mxu0 0.0
    %1421 = vmatpush1.msra.mxu0 0.0
    %1422 = vmatprep.subr.mxu0 0.0
    %1423 = vmatpush1.msra.mxu0 0.0
    %1424 = vmatprep.subr.mxu0 0.0
    %1425 = vmatpush1.msra.mxu0 0.0
    %1426 = vmatprep.subr.mxu0 0.0
    %1427 = vmatpush1.msra.mxu0 0.0
    %1428 = vmatprep.subr.mxu0 0.0
    %1429 = vmatpush1.msra.mxu0 0.0
    %1430 = vmatprep.subr.mxu0 0.0
    %1431 = vmatpush1.msra.mxu0 0.0
    %1432 = vmatprep.subr.mxu0 0.0
    %1433 = vmatpush1.msra.mxu0 0.0
    %1434 = vmatprep.subr.mxu0 0.0
    %1435 = vmatpush1.msra.mxu0 0.0
    %1436 = vmatprep.subr.mxu0 0.0
    %1437 = vmatpush1.msra.mxu0 0.0
    %1438 = vmatprep.subr.mxu0 0.0
    %1439 = vmatpush1.msra.mxu0 0.0
    %1440 = vmatprep.subr.mxu0 0.0
    %1441 = vmatpush1.msra.mxu0 %v88
    %1442 = vmatprep.subr.mxu0 0.0
    %1443 = vmatpush1.msra.mxu0 %v87
    %1444 = vmatprep.subr.mxu0 0.0
    %1445 = vmatpush1.msra.mxu0 %v86
    %1446 = vmatprep.subr.mxu0 0.0
    %1447 = vmatpush1.msra.mxu0 %v85
    %1448 = vmatprep.subr.mxu0 0.0
    %1449 = vmatpush2.msra.mxu0 0.0
    %1450 = vmatprep.subr.mxu0 0.0
    %1451 = vmatpush2.msra.mxu0 0.0
    %1452 = vmatprep.subr.mxu0 0.0
    %1453 = vmatpush2.msra.mxu0 0.0
    %1454 = vmatprep.subr.mxu0 0.0
    %1455 = vmatpush2.msra.mxu0 0.0
    %1456 = vmatprep.subr.mxu0 0.0
    %1457 = vmatpush2.msra.mxu0 0.0
    %1458 = vmatprep.subr.mxu0 0.0
    %1459 = vmatpush2.msra.mxu0 0.0
    %1460 = vmatprep.subr.mxu0 0.0
    %1461 = vmatpush2.msra.mxu0 0.0
    %1462 = vmatprep.subr.mxu0 0.0
    %1463 = vmatpush2.msra.mxu0 0.0
    %1464 = vmatprep.subr.mxu0 0.0
    %1465 = vmatpush2.msra.mxu0 0.0
    %1466 = vmatprep.subr.mxu0 0.0
    %1467 = vmatpush2.msra.mxu0 0.0
    %1468 = vmatprep.subr.mxu0 0.0
    %1469 = vmatpush2.msra.mxu0 0.0
    %1470 = vmatprep.subr.mxu0 0.0
    %1471 = vmatpush2.msra.mxu0 0.0
    %1472 = vmatprep.subr.mxu0 0.0
    %1473 = vmatpush2.msra.mxu0 0.0
    %1474 = vmatprep.subr.mxu0 0.0
    %1475 = vmatpush2.msra.mxu0 0.0
    %1476 = vmatprep.subr.mxu0 0.0
    %1477 = vmatpush2.msra.mxu0 0.0
    %1478 = vmatprep.subr.mxu0 0.0
    %1479 = vmatpush2.msra.mxu0 0.0
    %1480 = vmatprep.mubr.f32.mxu0 0.0
    %1481 = vmatmul.mubr.f32.gmra.mxu0 %v1414
    %v1482 = vpop.f32.mrf.mxu0
    %v1483 = vadd.f32 0.0, %v1482
    %v1484 = vpop.f32.mrf.mxu0
    %1485 = vdwg.mxu0
    %v1486 = vadd.f32 %v708, %v1483
    %v1487 = vxor.u32 %v1486, 2147483648
    %v1488 = vmul.f32 %v1487, 1.442695
    %v1489 = vpow.pop %v1488
    %v1490 = vadd.f32 %v1489, 1.0
    %v1491 = vrcp.pop %v1490
    %v1492 = vmul.f32 1.0, %v1491
    %v1493 = vtanh.pop %v1486
    %v1494 = vmul.f32 %v1492, %v1404
    %1496 = vrot.lane.b32.xlu0 %v1493, 64
    %v1497 = vpop.permute.xlu0 %1496
    %v1499 = vmul.f32 %v1492, %v1497
    %1501 = vrot.lane.b32.xlu0 %v1499, 32
    %v1502 = vpop.permute.xlu0 %1501
    %v1504 = vadd.f32 %v1494, %v1502
    %v1505 = vtanh.pop %v1504
    %1507 = vrot.lane.b32.xlu0 %v1505, 64
    %v1508 = vpop.permute.xlu0 %1507
    %v1510 = vmul.f32 %v1492, %v1508
    %1511 = vmatprep.subr.mxu0 0.0
    %1512 = vmatpush1.msra.mxu0 0.0
    %1513 = vmatprep.subr.mxu0 0.0
    %1514 = vmatpush1.msra.mxu0 0.0
    %1515 = vmatprep.subr.mxu0 0.0
    %1516 = vmatpush1.msra.mxu0 0.0
    %1517 = vmatprep.subr.mxu0 0.0
    %1518 = vmatpush1.msra.mxu0 0.0
    %1519 = vmatprep.subr.mxu0 0.0
    %1520 = vmatpush1.msra.mxu0 0.0
    %1521 = vmatprep.subr.mxu0 0.0
    %1522 = vmatpush1.msra.mxu0 0.0
    %1523 = vmatprep.subr.mxu0 0.0
    %1524 = vmatpush1.msra.mxu0 0.0
    %1525 = vmatprep.subr.mxu0 0.0
    %1526 = vmatpush1.msra.mxu0 0.0
    %1527 = vmatprep.subr.mxu0 0.0
    %1528 = vmatpush1.msra.mxu0 0.0
    %1529 = vmatprep.subr.mxu0 0.0
    %1530 = vmatpush1.msra.mxu0 0.0
    %1531 = vmatprep.subr.mxu0 0.0
    %1532 = vmatpush1.msra.mxu0 0.0
    %1533 = vmatprep.subr.mxu0 0.0
    %1534 = vmatpush1.msra.mxu0 0.0
    %1535 = vmatprep.subr.mxu0 0.0
    %1536 = vmatpush1.msra.mxu0 %v92
    %1537 = vmatprep.subr.mxu0 0.0
    %1538 = vmatpush1.msra.mxu0 %v91
    %1539 = vmatprep.subr.mxu0 0.0
    %1540 = vmatpush1.msra.mxu0 %v90
    %1541 = vmatprep.subr.mxu0 0.0
    %1542 = vmatpush1.msra.mxu0 %v89
    %1543 = vmatprep.subr.mxu0 0.0
    %1544 = vmatpush2.msra.mxu0 0.0
    %1545 = vmatprep.subr.mxu0 0.0
    %1546 = vmatpush2.msra.mxu0 0.0
    %1547 = vmatprep.subr.mxu0 0.0
    %1548 = vmatpush2.msra.mxu0 0.0
    %1549 = vmatprep.subr.mxu0 0.0
    %1550 = vmatpush2.msra.mxu0 0.0
    %1551 = vmatprep.subr.mxu0 0.0
    %1552 = vmatpush2.msra.mxu0 0.0
    %1553 = vmatprep.subr.mxu0 0.0
    %1554 = vmatpush2.msra.mxu0 0.0
    %1555 = vmatprep.subr.mxu0 0.0
    %1556 = vmatpush2.msra.mxu0 0.0
    %1557 = vmatprep.subr.mxu0 0.0
    %1558 = vmatpush2.msra.mxu0 0.0
    %1559 = vmatprep.subr.mxu0 0.0
    %1560 = vmatpush2.msra.mxu0 0.0
    %1561 = vmatprep.subr.mxu0 0.0
    %1562 = vmatpush2.msra.mxu0 0.0
    %1563 = vmatprep.subr.mxu0 0.0
    %1564 = vmatpush2.msra.mxu0 0.0
    %1565 = vmatprep.subr.mxu0 0.0
    %1566 = vmatpush2.msra.mxu0 0.0
    %1567 = vmatprep.subr.mxu0 0.0
    %1568 = vmatpush2.msra.mxu0 0.0
    %1569 = vmatprep.subr.mxu0 0.0
    %1570 = vmatpush2.msra.mxu0 0.0
    %1571 = vmatprep.subr.mxu0 0.0
    %1572 = vmatpush2.msra.mxu0 0.0
    %1573 = vmatprep.subr.mxu0 0.0
    %1574 = vmatpush2.msra.mxu0 0.0
    %1575 = vmatprep.mubr.f32.mxu0 0.0
    %1576 = vmatmul.mubr.f32.gmra.mxu0 %v714
    %v1577 = vpop.f32.mrf.mxu0
    %v1578 = vadd.f32 0.0, %v1577
    %v1579 = vpop.f32.mrf.mxu0
    %1580 = vdwg.mxu0
    %v1581 = vadd.f32 %v710, %v1578
    %v1582 = vxor.u32 %v1581, 2147483648
    %v1583 = vmul.f32 %v1582, 1.442695
    %v1584 = vpow.pop %v1583
    %v1585 = vadd.f32 %v1584, 1.0
    %v1586 = vrcp.pop %v1585
    %v1587 = vmul.f32 1.0, %v1586
    %v1588 = vtanh.pop %v1581
    %v1589 = vmul.f32 %v1587, 0.0
    %1591 = vrot.lane.b32.xlu0 %v1588, 64
    %v1592 = vpop.permute.xlu0 %1591
    %v1594 = vmul.f32 %v1587, %v1592
    %1596 = vrot.lane.b32.xlu0 %v1594, 32
    %v1597 = vpop.permute.xlu0 %1596
    %v1599 = vadd.f32 %v1589, %v1597
    %v1600 = vtanh.pop %v1599
    %1602 = vrot.lane.b32.xlu0 %v1600, 64
    %v1603 = vpop.permute.xlu0 %1602
    %v1605 = vmul.f32 %v1587, %v1603
    %1607 = vrot.lane.b32.xlu0 %v1605, 32
    %v1608 = vpop.permute.xlu0 %1607
    %v1609 = vsel %vm712, %v1608, 0
    %1611 = vmatprep.subr.mxu0 0.0
    %1612 = vmatpush1.msra.mxu0 0.0
    %1613 = vmatprep.subr.mxu0 0.0
    %1614 = vmatpush1.msra.mxu0 0.0
    %1615 = vmatprep.subr.mxu0 0.0
    %1616 = vmatpush1.msra.mxu0 0.0
    %1617 = vmatprep.subr.mxu0 0.0
    %1618 = vmatpush1.msra.mxu0 0.0
    %1619 = vmatprep.subr.mxu0 0.0
    %1620 = vmatpush1.msra.mxu0 0.0
    %1621 = vmatprep.subr.mxu0 0.0
    %1622 = vmatpush1.msra.mxu0 0.0
    %1623 = vmatprep.subr.mxu0 0.0
    %1624 = vmatpush1.msra.mxu0 0.0
    %1625 = vmatprep.subr.mxu0 0.0
    %1626 = vmatpush1.msra.mxu0 0.0
    %1627 = vmatprep.subr.mxu0 0.0
    %1628 = vmatpush1.msra.mxu0 0.0
    %1629 = vmatprep.subr.mxu0 0.0
    %1630 = vmatpush1.msra.mxu0 0.0
    %1631 = vmatprep.subr.mxu0 0.0
    %1632 = vmatpush1.msra.mxu0 0.0
    %1633 = vmatprep.subr.mxu0 0.0
    %1634 = vmatpush1.msra.mxu0 0.0
    %1635 = vmatprep.subr.mxu0 0.0
    %1636 = vmatpush1.msra.mxu0 %v92
    %1637 = vmatprep.subr.mxu0 0.0
    %1638 = vmatpush1.msra.mxu0 %v91
    %1639 = vmatprep.subr.mxu0 0.0
    %1640 = vmatpush1.msra.mxu0 %v90
    %1641 = vmatprep.subr.mxu0 0.0
    %1642 = vmatpush1.msra.mxu0 %v89
    %1643 = vmatprep.subr.mxu0 0.0
    %1644 = vmatpush2.msra.mxu0 0.0
    %1645 = vmatprep.subr.mxu0 0.0
    %1646 = vmatpush2.msra.mxu0 0.0
    %1647 = vmatprep.subr.mxu0 0.0
    %1648 = vmatpush2.msra.mxu0 0.0
    %1649 = vmatprep.subr.mxu0 0.0
    %1650 = vmatpush2.msra.mxu0 0.0
    %1651 = vmatprep.subr.mxu0 0.0
    %1652 = vmatpush2.msra.mxu0 0.0
    %1653 = vmatprep.subr.mxu0 0.0
    %1654 = vmatpush2.msra.mxu0 0.0
    %1655 = vmatprep.subr.mxu0 0.0
    %1656 = vmatpush2.msra.mxu0 0.0
    %1657 = vmatprep.subr.mxu0 0.0
    %1658 = vmatpush2.msra.mxu0 0.0
    %1659 = vmatprep.subr.mxu0 0.0
    %1660 = vmatpush2.msra.mxu0 0.0
    %1661 = vmatprep.subr.mxu0 0.0
    %1662 = vmatpush2.msra.mxu0 0.0
    %1663 = vmatprep.subr.mxu0 0.0
    %1664 = vmatpush2.msra.mxu0 0.0
    %1665 = vmatprep.subr.mxu0 0.0
    %1666 = vmatpush2.msra.mxu0 0.0
    %1667 = vmatprep.subr.mxu0 0.0
    %1668 = vmatpush2.msra.mxu0 0.0
    %1669 = vmatprep.subr.mxu0 0.0
    %1670 = vmatpush2.msra.mxu0 0.0
    %1671 = vmatprep.subr.mxu0 0.0
    %1672 = vmatpush2.msra.mxu0 0.0
    %1673 = vmatprep.subr.mxu0 0.0
    %1674 = vmatpush2.msra.mxu0 0.0
    %1675 = vmatprep.mubr.f32.mxu0 0.0
    %1676 = vmatmul.mubr.f32.gmra.mxu0 %v1609
    %v1677 = vpop.f32.mrf.mxu0
    %v1678 = vadd.f32 0.0, %v1677
    %v1679 = vpop.f32.mrf.mxu0
    %1680 = vdwg.mxu0
    %v1681 = vadd.f32 %v634, %v1678
    %v1682 = vxor.u32 %v1681, 2147483648
    %v1683 = vmul.f32 %v1682, 1.442695
    %v1684 = vpow.pop %v1683
    %v1685 = vadd.f32 %v1684, 1.0
    %v1686 = vrcp.pop %v1685
    %v1687 = vmul.f32 1.0, %v1686
    %v1688 = vtanh.pop %v1681
    %v1689 = vmul.f32 %v1687, %v1599
    %1691 = vrot.lane.b32.xlu0 %v1688, 64
    %v1692 = vpop.permute.xlu0 %1691
    %v1694 = vmul.f32 %v1687, %v1692
    %1696 = vrot.lane.b32.xlu0 %v1694, 32
    %v1697 = vpop.permute.xlu0 %1696
    %v1699 = vadd.f32 %v1689, %v1697
    %v1700 = vtanh.pop %v1699
    %1702 = vrot.lane.b32.xlu0 %v1700, 64
    %v1703 = vpop.permute.xlu0 %1702
    %v1705 = vmul.f32 %v1687, %v1703
    %1707 = vrot.lane.b32.xlu0 %v1705, 32
    %v1708 = vpop.permute.xlu0 %1707
    %v1709 = vsel %vm712, %v1708, 0
    %1711 = vmatprep.subr.mxu0 0.0
    %1712 = vmatpush1.msra.mxu0 0.0
    %1713 = vmatprep.subr.mxu0 0.0
    %1714 = vmatpush1.msra.mxu0 0.0
    %1715 = vmatprep.subr.mxu0 0.0
    %1716 = vmatpush1.msra.mxu0 0.0
    %1717 = vmatprep.subr.mxu0 0.0
    %1718 = vmatpush1.msra.mxu0 0.0
    %1719 = vmatprep.subr.mxu0 0.0
    %1720 = vmatpush1.msra.mxu0 0.0
    %1721 = vmatprep.subr.mxu0 0.0
    %1722 = vmatpush1.msra.mxu0 0.0
    %1723 = vmatprep.subr.mxu0 0.0
    %1724 = vmatpush1.msra.mxu0 0.0
    %1725 = vmatprep.subr.mxu0 0.0
    %1726 = vmatpush1.msra.mxu0 0.0
    %1727 = vmatprep.subr.mxu0 0.0
    %1728 = vmatpush1.msra.mxu0 0.0
    %1729 = vmatprep.subr.mxu0 0.0
    %1730 = vmatpush1.msra.mxu0 0.0
    %1731 = vmatprep.subr.mxu0 0.0
    %1732 = vmatpush1.msra.mxu0 0.0
    %1733 = vmatprep.subr.mxu0 0.0
    %1734 = vmatpush1.msra.mxu0 0.0
    %1735 = vmatprep.subr.mxu0 0.0
    %1736 = vmatpush1.msra.mxu0 %v92
    %1737 = vmatprep.subr.mxu0 0.0
    %1738 = vmatpush1.msra.mxu0 %v91
    %1739 = vmatprep.subr.mxu0 0.0
    %1740 = vmatpush1.msra.mxu0 %v90
    %1741 = vmatprep.subr.mxu0 0.0
    %1742 = vmatpush1.msra.mxu0 %v89
    %1743 = vmatprep.subr.mxu0 0.0
    %1744 = vmatpush2.msra.mxu0 0.0
    %1745 = vmatprep.subr.mxu0 0.0
    %1746 = vmatpush2.msra.mxu0 0.0
    %1747 = vmatprep.subr.mxu0 0.0
    %1748 = vmatpush2.msra.mxu0 0.0
    %1749 = vmatprep.subr.mxu0 0.0
    %1750 = vmatpush2.msra.mxu0 0.0
    %1751 = vmatprep.subr.mxu0 0.0
    %1752 = vmatpush2.msra.mxu0 0.0
    %1753 = vmatprep.subr.mxu0 0.0
    %1754 = vmatpush2.msra.mxu0 0.0
    %1755 = vmatprep.subr.mxu0 0.0
    %1756 = vmatpush2.msra.mxu0 0.0
    %1757 = vmatprep.subr.mxu0 0.0
    %1758 = vmatpush2.msra.mxu0 0.0
    %1759 = vmatprep.subr.mxu0 0.0
    %1760 = vmatpush2.msra.mxu0 0.0
    %1761 = vmatprep.subr.mxu0 0.0
    %1762 = vmatpush2.msra.mxu0 0.0
    %1763 = vmatprep.subr.mxu0 0.0
    %1764 = vmatpush2.msra.mxu0 0.0
    %1765 = vmatprep.subr.mxu0 0.0
    %1766 = vmatpush2.msra.mxu0 0.0
    %1767 = vmatprep.subr.mxu0 0.0
    %1768 = vmatpush2.msra.mxu0 0.0
    %1769 = vmatprep.subr.mxu0 0.0
    %1770 = vmatpush2.msra.mxu0 0.0
    %1771 = vmatprep.subr.mxu0 0.0
    %1772 = vmatpush2.msra.mxu0 0.0
    %1773 = vmatprep.subr.mxu0 0.0
    %1774 = vmatpush2.msra.mxu0 0.0
    %1775 = vmatprep.mubr.f32.mxu0 0.0
    %1776 = vmatmul.mubr.f32.gmra.mxu0 %v1709
    %v1777 = vpop.f32.mrf.mxu0
    %v1778 = vadd.f32 0.0, %v1777
    %v1779 = vpop.f32.mrf.mxu0
    %1780 = vdwg.mxu0
    %v1781 = vadd.f32 %v558, %v1778
    %v1782 = vxor.u32 %v1781, 2147483648
    %v1783 = vmul.f32 %v1782, 1.442695
    %v1784 = vpow.pop %v1783
    %v1785 = vadd.f32 %v1784, 1.0
    %v1786 = vrcp.pop %v1785
    %v1787 = vmul.f32 1.0, %v1786
    %v1788 = vtanh.pop %v1781
    %v1789 = vmul.f32 %v1787, %v1699
    %1791 = vrot.lane.b32.xlu0 %v1788, 64
    %v1792 = vpop.permute.xlu0 %1791
    %v1794 = vmul.f32 %v1787, %v1792
    %1796 = vrot.lane.b32.xlu0 %v1794, 32
    %v1797 = vpop.permute.xlu0 %1796
    %v1799 = vadd.f32 %v1789, %v1797
    %v1800 = vtanh.pop %v1799
    %1802 = vrot.lane.b32.xlu0 %v1800, 64
    %v1803 = vpop.permute.xlu0 %1802
    %v1805 = vmul.f32 %v1787, %v1803
    %1807 = vrot.lane.b32.xlu0 %v1805, 32
    %v1808 = vpop.permute.xlu0 %1807
    %v1809 = vsel %vm712, %v1808, 0
    %1811 = vmatprep.subr.mxu0 0.0
    %1812 = vmatpush1.msra.mxu0 0.0
    %1813 = vmatprep.subr.mxu0 0.0
    %1814 = vmatpush1.msra.mxu0 0.0
    %1815 = vmatprep.subr.mxu0 0.0
    %1816 = vmatpush1.msra.mxu0 0.0
    %1817 = vmatprep.subr.mxu0 0.0
    %1818 = vmatpush1.msra.mxu0 0.0
    %1819 = vmatprep.subr.mxu0 0.0
    %1820 = vmatpush1.msra.mxu0 0.0
    %1821 = vmatprep.subr.mxu0 0.0
    %1822 = vmatpush1.msra.mxu0 0.0
    %1823 = vmatprep.subr.mxu0 0.0
    %1824 = vmatpush1.msra.mxu0 0.0
    %1825 = vmatprep.subr.mxu0 0.0
    %1826 = vmatpush1.msra.mxu0 0.0
    %1827 = vmatprep.subr.mxu0 0.0
    %1828 = vmatpush1.msra.mxu0 0.0
    %1829 = vmatprep.subr.mxu0 0.0
    %1830 = vmatpush1.msra.mxu0 0.0
    %1831 = vmatprep.subr.mxu0 0.0
    %1832 = vmatpush1.msra.mxu0 0.0
    %1833 = vmatprep.subr.mxu0 0.0
    %1834 = vmatpush1.msra.mxu0 0.0
    %1835 = vmatprep.subr.mxu0 0.0
    %1836 = vmatpush1.msra.mxu0 %v92
    %1837 = vmatprep.subr.mxu0 0.0
    %1838 = vmatpush1.msra.mxu0 %v91
    %1839 = vmatprep.subr.mxu0 0.0
    %1840 = vmatpush1.msra.mxu0 %v90
    %1841 = vmatprep.subr.mxu0 0.0
    %1842 = vmatpush1.msra.mxu0 %v89
    %1843 = vmatprep.subr.mxu0 0.0
    %1844 = vmatpush2.msra.mxu0 0.0
    %1845 = vmatprep.subr.mxu0 0.0
    %1846 = vmatpush2.msra.mxu0 0.0
    %1847 = vmatprep.subr.mxu0 0.0
    %1848 = vmatpush2.msra.mxu0 0.0
    %1849 = vmatprep.subr.mxu0 0.0
    %1850 = vmatpush2.msra.mxu0 0.0
    %1851 = vmatprep.subr.mxu0 0.0
    %1852 = vmatpush2.msra.mxu0 0.0
    %1853 = vmatprep.subr.mxu0 0.0
    %1854 = vmatpush2.msra.mxu0 0.0
    %1855 = vmatprep.subr.mxu0 0.0
    %1856 = vmatpush2.msra.mxu0 0.0
    %1857 = vmatprep.subr.mxu0 0.0
    %1858 = vmatpush2.msra.mxu0 0.0
    %1859 = vmatprep.subr.mxu0 0.0
    %1860 = vmatpush2.msra.mxu0 0.0
    %1861 = vmatprep.subr.mxu0 0.0
    %1862 = vmatpush2.msra.mxu0 0.0
    %1863 = vmatprep.subr.mxu0 0.0
    %1864 = vmatpush2.msra.mxu0 0.0
    %1865 = vmatprep.subr.mxu0 0.0
    %1866 = vmatpush2.msra.mxu0 0.0
    %1867 = vmatprep.subr.mxu0 0.0
    %1868 = vmatpush2.msra.mxu0 0.0
    %1869 = vmatprep.subr.mxu0 0.0
    %1870 = vmatpush2.msra.mxu0 0.0
    %1871 = vmatprep.subr.mxu0 0.0
    %1872 = vmatpush2.msra.mxu0 0.0
    %1873 = vmatprep.subr.mxu0 0.0
    %1874 = vmatpush2.msra.mxu0 0.0
    %1875 = vmatprep.mubr.f32.mxu0 0.0
    %1876 = vmatmul.mubr.f32.gmra.mxu0 %v1809
    %v1877 = vpop.f32.mrf.mxu0
    %v1878 = vadd.f32 0.0, %v1877
    %v1879 = vpop.f32.mrf.mxu0
    %1880 = vdwg.mxu0
    %v1881 = vadd.f32 %v482, %v1878
    %v1882 = vxor.u32 %v1881, 2147483648
    %v1883 = vmul.f32 %v1882, 1.442695
    %v1884 = vpow.pop %v1883
    %v1885 = vadd.f32 %v1884, 1.0
    %v1886 = vrcp.pop %v1885
    %v1887 = vmul.f32 1.0, %v1886
    %v1888 = vtanh.pop %v1881
    %v1889 = vmul.f32 %v1887, %v1799
    %1891 = vrot.lane.b32.xlu0 %v1888, 64
    %v1892 = vpop.permute.xlu0 %1891
    %v1894 = vmul.f32 %v1887, %v1892
    %1896 = vrot.lane.b32.xlu0 %v1894, 32
    %v1897 = vpop.permute.xlu0 %1896
    %v1899 = vadd.f32 %v1889, %v1897
    %v1900 = vtanh.pop %v1899
    %1902 = vrot.lane.b32.xlu0 %v1900, 64
    %v1903 = vpop.permute.xlu0 %1902
    %v1905 = vmul.f32 %v1887, %v1903
    %1907 = vrot.lane.b32.xlu0 %v1905, 32
    %v1908 = vpop.permute.xlu0 %1907
    %v1909 = vsel %vm712, %v1908, 0
    %1911 = vmatprep.subr.mxu0 0.0
    %1912 = vmatpush1.msra.mxu0 0.0
    %1913 = vmatprep.subr.mxu0 0.0
    %1914 = vmatpush1.msra.mxu0 0.0
    %1915 = vmatprep.subr.mxu0 0.0
    %1916 = vmatpush1.msra.mxu0 0.0
    %1917 = vmatprep.subr.mxu0 0.0
    %1918 = vmatpush1.msra.mxu0 0.0
    %1919 = vmatprep.subr.mxu0 0.0
    %1920 = vmatpush1.msra.mxu0 0.0
    %1921 = vmatprep.subr.mxu0 0.0
    %1922 = vmatpush1.msra.mxu0 0.0
    %1923 = vmatprep.subr.mxu0 0.0
    %1924 = vmatpush1.msra.mxu0 0.0
    %1925 = vmatprep.subr.mxu0 0.0
    %1926 = vmatpush1.msra.mxu0 0.0
    %1927 = vmatprep.subr.mxu0 0.0
    %1928 = vmatpush1.msra.mxu0 0.0
    %1929 = vmatprep.subr.mxu0 0.0
    %1930 = vmatpush1.msra.mxu0 0.0
    %1931 = vmatprep.subr.mxu0 0.0
    %1932 = vmatpush1.msra.mxu0 0.0
    %1933 = vmatprep.subr.mxu0 0.0
    %1934 = vmatpush1.msra.mxu0 0.0
    %1935 = vmatprep.subr.mxu0 0.0
    %1936 = vmatpush1.msra.mxu0 %v92
    %1937 = vmatprep.subr.mxu0 0.0
    %1938 = vmatpush1.msra.mxu0 %v91
    %1939 = vmatprep.subr.mxu0 0.0
    %1940 = vmatpush1.msra.mxu0 %v90
    %1941 = vmatprep.subr.mxu0 0.0
    %1942 = vmatpush1.msra.mxu0 %v89
    %1943 = vmatprep.subr.mxu0 0.0
    %1944 = vmatpush2.msra.mxu0 0.0
    %1945 = vmatprep.subr.mxu0 0.0
    %1946 = vmatpush2.msra.mxu0 0.0
    %1947 = vmatprep.subr.mxu0 0.0
    %1948 = vmatpush2.msra.mxu0 0.0
    %1949 = vmatprep.subr.mxu0 0.0
    %1950 = vmatpush2.msra.mxu0 0.0
    %1951 = vmatprep.subr.mxu0 0.0
    %1952 = vmatpush2.msra.mxu0 0.0
    %1953 = vmatprep.subr.mxu0 0.0
    %1954 = vmatpush2.msra.mxu0 0.0
    %1955 = vmatprep.subr.mxu0 0.0
    %1956 = vmatpush2.msra.mxu0 0.0
    %1957 = vmatprep.subr.mxu0 0.0
    %1958 = vmatpush2.msra.mxu0 0.0
    %1959 = vmatprep.subr.mxu0 0.0
    %1960 = vmatpush2.msra.mxu0 0.0
    %1961 = vmatprep.subr.mxu0 0.0
    %1962 = vmatpush2.msra.mxu0 0.0
    %1963 = vmatprep.subr.mxu0 0.0
    %1964 = vmatpush2.msra.mxu0 0.0
    %1965 = vmatprep.subr.mxu0 0.0
    %1966 = vmatpush2.msra.mxu0 0.0
    %1967 = vmatprep.subr.mxu0 0.0
    %1968 = vmatpush2.msra.mxu0 0.0
    %1969 = vmatprep.subr.mxu0 0.0
    %1970 = vmatpush2.msra.mxu0 0.0
    %1971 = vmatprep.subr.mxu0 0.0
    %1972 = vmatpush2.msra.mxu0 0.0
    %1973 = vmatprep.subr.mxu0 0.0
    %1974 = vmatpush2.msra.mxu0 0.0
    %1975 = vmatprep.mubr.f32.mxu0 0.0
    %1976 = vmatmul.mubr.f32.gmra.mxu0 %v1909
    %v1977 = vpop.f32.mrf.mxu0
    %v1978 = vadd.f32 0.0, %v1977
    %v1979 = vpop.f32.mrf.mxu0
    %1980 = vdwg.mxu0
    %v1981 = vadd.f32 %v406, %v1978
    %v1982 = vxor.u32 %v1981, 2147483648
    %v1983 = vmul.f32 %v1982, 1.442695
    %v1984 = vpow.pop %v1983
    %v1985 = vadd.f32 %v1984, 1.0
    %v1986 = vrcp.pop %v1985
    %v1987 = vmul.f32 1.0, %v1986
    %v1988 = vtanh.pop %v1981
    %v1989 = vmul.f32 %v1987, %v1899
    %1991 = vrot.lane.b32.xlu0 %v1988, 64
    %v1992 = vpop.permute.xlu0 %1991
    %v1994 = vmul.f32 %v1987, %v1992
    %1996 = vrot.lane.b32.xlu0 %v1994, 32
    %v1997 = vpop.permute.xlu0 %1996
    %v1999 = vadd.f32 %v1989, %v1997
    %v2000 = vtanh.pop %v1999
    %2002 = vrot.lane.b32.xlu0 %v2000, 64
    %v2003 = vpop.permute.xlu0 %2002
    %v2005 = vmul.f32 %v1987, %v2003
    %2007 = vrot.lane.b32.xlu0 %v2005, 32
    %v2008 = vpop.permute.xlu0 %2007
    %v2009 = vsel %vm712, %v2008, 0
    %2011 = vmatprep.subr.mxu0 0.0
    %2012 = vmatpush1.msra.mxu0 0.0
    %2013 = vmatprep.subr.mxu0 0.0
    %2014 = vmatpush1.msra.mxu0 0.0
    %2015 = vmatprep.subr.mxu0 0.0
    %2016 = vmatpush1.msra.mxu0 0.0
    %2017 = vmatprep.subr.mxu0 0.0
    %2018 = vmatpush1.msra.mxu0 0.0
    %2019 = vmatprep.subr.mxu0 0.0
    %2020 = vmatpush1.msra.mxu0 0.0
    %2021 = vmatprep.subr.mxu0 0.0
    %2022 = vmatpush1.msra.mxu0 0.0
    %2023 = vmatprep.subr.mxu0 0.0
    %2024 = vmatpush1.msra.mxu0 0.0
    %2025 = vmatprep.subr.mxu0 0.0
    %2026 = vmatpush1.msra.mxu0 0.0
    %2027 = vmatprep.subr.mxu0 0.0
    %2028 = vmatpush1.msra.mxu0 0.0
    %2029 = vmatprep.subr.mxu0 0.0
    %2030 = vmatpush1.msra.mxu0 0.0
    %2031 = vmatprep.subr.mxu0 0.0
    %2032 = vmatpush1.msra.mxu0 0.0
    %2033 = vmatprep.subr.mxu0 0.0
    %2034 = vmatpush1.msra.mxu0 0.0
    %2035 = vmatprep.subr.mxu0 0.0
    %2036 = vmatpush1.msra.mxu0 %v92
    %2037 = vmatprep.subr.mxu0 0.0
    %2038 = vmatpush1.msra.mxu0 %v91
    %2039 = vmatprep.subr.mxu0 0.0
    %2040 = vmatpush1.msra.mxu0 %v90
    %2041 = vmatprep.subr.mxu0 0.0
    %2042 = vmatpush1.msra.mxu0 %v89
    %2043 = vmatprep.subr.mxu0 0.0
    %2044 = vmatpush2.msra.mxu0 0.0
    %2045 = vmatprep.subr.mxu0 0.0
    %2046 = vmatpush2.msra.mxu0 0.0
    %2047 = vmatprep.subr.mxu0 0.0
    %2048 = vmatpush2.msra.mxu0 0.0
    %2049 = vmatprep.subr.mxu0 0.0
    %2050 = vmatpush2.msra.mxu0 0.0
    %2051 = vmatprep.subr.mxu0 0.0
    %2052 = vmatpush2.msra.mxu0 0.0
    %2053 = vmatprep.subr.mxu0 0.0
    %2054 = vmatpush2.msra.mxu0 0.0
    %2055 = vmatprep.subr.mxu0 0.0
    %2056 = vmatpush2.msra.mxu0 0.0
    %2057 = vmatprep.subr.mxu0 0.0
    %2058 = vmatpush2.msra.mxu0 0.0
    %2059 = vmatprep.subr.mxu0 0.0
    %2060 = vmatpush2.msra.mxu0 0.0
    %2061 = vmatprep.subr.mxu0 0.0
    %2062 = vmatpush2.msra.mxu0 0.0
    %2063 = vmatprep.subr.mxu0 0.0
    %2064 = vmatpush2.msra.mxu0 0.0
    %2065 = vmatprep.subr.mxu0 0.0
    %2066 = vmatpush2.msra.mxu0 0.0
    %2067 = vmatprep.subr.mxu0 0.0
    %2068 = vmatpush2.msra.mxu0 0.0
    %2069 = vmatprep.subr.mxu0 0.0
    %2070 = vmatpush2.msra.mxu0 0.0
    %2071 = vmatprep.subr.mxu0 0.0
    %2072 = vmatpush2.msra.mxu0 0.0
    %2073 = vmatprep.subr.mxu0 0.0
    %2074 = vmatpush2.msra.mxu0 0.0
    %2075 = vmatprep.mubr.f32.mxu0 0.0
    %2076 = vmatmul.mubr.f32.gmra.mxu0 %v2009
    %v2077 = vpop.f32.mrf.mxu0
    %v2078 = vadd.f32 0.0, %v2077
    %v2079 = vpop.f32.mrf.mxu0
    %2080 = vdwg.mxu0
    %v2081 = vadd.f32 %v330, %v2078
    %v2082 = vxor.u32 %v2081, 2147483648
    %v2083 = vmul.f32 %v2082, 1.442695
    %v2084 = vpow.pop %v2083
    %v2085 = vadd.f32 %v2084, 1.0
    %v2086 = vrcp.pop %v2085
    %v2087 = vmul.f32 1.0, %v2086
    %v2088 = vtanh.pop %v2081
    %v2089 = vmul.f32 %v2087, %v1999
    %2091 = vrot.lane.b32.xlu0 %v2088, 64
    %v2092 = vpop.permute.xlu0 %2091
    %v2094 = vmul.f32 %v2087, %v2092
    %2096 = vrot.lane.b32.xlu0 %v2094, 32
    %v2097 = vpop.permute.xlu0 %2096
    %v2099 = vadd.f32 %v2089, %v2097
    %v2100 = vtanh.pop %v2099
    %2102 = vrot.lane.b32.xlu0 %v2100, 64
    %v2103 = vpop.permute.xlu0 %2102
    %v2105 = vmul.f32 %v2087, %v2103
    %2107 = vrot.lane.b32.xlu0 %v2105, 32
    %v2108 = vpop.permute.xlu0 %2107
    %v2109 = vsel %vm712, %v2108, 0
    %2111 = vmatprep.subr.mxu0 0.0
    %2112 = vmatpush1.msra.mxu0 0.0
    %2113 = vmatprep.subr.mxu0 0.0
    %2114 = vmatpush1.msra.mxu0 0.0
    %2115 = vmatprep.subr.mxu0 0.0
    %2116 = vmatpush1.msra.mxu0 0.0
    %2117 = vmatprep.subr.mxu0 0.0
    %2118 = vmatpush1.msra.mxu0 0.0
    %2119 = vmatprep.subr.mxu0 0.0
    %2120 = vmatpush1.msra.mxu0 0.0
    %2121 = vmatprep.subr.mxu0 0.0
    %2122 = vmatpush1.msra.mxu0 0.0
    %2123 = vmatprep.subr.mxu0 0.0
    %2124 = vmatpush1.msra.mxu0 0.0
    %2125 = vmatprep.subr.mxu0 0.0
    %2126 = vmatpush1.msra.mxu0 0.0
    %2127 = vmatprep.subr.mxu0 0.0
    %2128 = vmatpush1.msra.mxu0 0.0
    %2129 = vmatprep.subr.mxu0 0.0
    %2130 = vmatpush1.msra.mxu0 0.0
    %2131 = vmatprep.subr.mxu0 0.0
    %2132 = vmatpush1.msra.mxu0 0.0
    %2133 = vmatprep.subr.mxu0 0.0
    %2134 = vmatpush1.msra.mxu0 0.0
    %2135 = vmatprep.subr.mxu0 0.0
    %2136 = vmatpush1.msra.mxu0 %v92
    %2137 = vmatprep.subr.mxu0 0.0
    %2138 = vmatpush1.msra.mxu0 %v91
    %2139 = vmatprep.subr.mxu0 0.0
    %2140 = vmatpush1.msra.mxu0 %v90
    %2141 = vmatprep.subr.mxu0 0.0
    %2142 = vmatpush1.msra.mxu0 %v89
    %2143 = vmatprep.subr.mxu0 0.0
    %2144 = vmatpush2.msra.mxu0 0.0
    %2145 = vmatprep.subr.mxu0 0.0
    %2146 = vmatpush2.msra.mxu0 0.0
    %2147 = vmatprep.subr.mxu0 0.0
    %2148 = vmatpush2.msra.mxu0 0.0
    %2149 = vmatprep.subr.mxu0 0.0
    %2150 = vmatpush2.msra.mxu0 0.0
    %2151 = vmatprep.subr.mxu0 0.0
    %2152 = vmatpush2.msra.mxu0 0.0
    %2153 = vmatprep.subr.mxu0 0.0
    %2154 = vmatpush2.msra.mxu0 0.0
    %2155 = vmatprep.subr.mxu0 0.0
    %2156 = vmatpush2.msra.mxu0 0.0
    %2157 = vmatprep.subr.mxu0 0.0
    %2158 = vmatpush2.msra.mxu0 0.0
    %2159 = vmatprep.subr.mxu0 0.0
    %2160 = vmatpush2.msra.mxu0 0.0
    %2161 = vmatprep.subr.mxu0 0.0
    %2162 = vmatpush2.msra.mxu0 0.0
    %2163 = vmatprep.subr.mxu0 0.0
    %2164 = vmatpush2.msra.mxu0 0.0
    %2165 = vmatprep.subr.mxu0 0.0
    %2166 = vmatpush2.msra.mxu0 0.0
    %2167 = vmatprep.subr.mxu0 0.0
    %2168 = vmatpush2.msra.mxu0 0.0
    %2169 = vmatprep.subr.mxu0 0.0
    %2170 = vmatpush2.msra.mxu0 0.0
    %2171 = vmatprep.subr.mxu0 0.0
    %2172 = vmatpush2.msra.mxu0 0.0
    %2173 = vmatprep.subr.mxu0 0.0
    %2174 = vmatpush2.msra.mxu0 0.0
    %2175 = vmatprep.mubr.f32.mxu0 0.0
    %2176 = vmatmul.mubr.f32.gmra.mxu0 %v2109
    %v2177 = vpop.f32.mrf.mxu0
    %v2178 = vadd.f32 0.0, %v2177
    %v2179 = vpop.f32.mrf.mxu0
    %2180 = vdwg.mxu0
    %v2181 = vadd.f32 %v254, %v2178
    %v2182 = vxor.u32 %v2181, 2147483648
    %v2183 = vmul.f32 %v2182, 1.442695
    %v2184 = vpow.pop %v2183
    %v2185 = vadd.f32 %v2184, 1.0
    %v2186 = vrcp.pop %v2185
    %v2187 = vmul.f32 1.0, %v2186
    %v2188 = vtanh.pop %v2181
    %v2189 = vmul.f32 %v2187, %v2099
    %2191 = vrot.lane.b32.xlu0 %v2188, 64
    %v2192 = vpop.permute.xlu0 %2191
    %v2194 = vmul.f32 %v2187, %v2192
    %2196 = vrot.lane.b32.xlu0 %v2194, 32
    %v2197 = vpop.permute.xlu0 %2196
    %v2199 = vadd.f32 %v2189, %v2197
    %v2200 = vtanh.pop %v2199
    %2202 = vrot.lane.b32.xlu0 %v2200, 64
    %v2203 = vpop.permute.xlu0 %2202
    %v2205 = vmul.f32 %v2187, %v2203
    %2207 = vrot.lane.b32.xlu0 %v2205, 32
    %v2208 = vpop.permute.xlu0 %2207
    %v2209 = vsel %vm712, %v2208, 0
    %2211 = vmatprep.subr.mxu0 0.0
    %2212 = vmatpush1.msra.mxu0 0.0
    %2213 = vmatprep.subr.mxu0 0.0
    %2214 = vmatpush1.msra.mxu0 0.0
    %2215 = vmatprep.subr.mxu0 0.0
    %2216 = vmatpush1.msra.mxu0 0.0
    %2217 = vmatprep.subr.mxu0 0.0
    %2218 = vmatpush1.msra.mxu0 0.0
    %2219 = vmatprep.subr.mxu0 0.0
    %2220 = vmatpush1.msra.mxu0 0.0
    %2221 = vmatprep.subr.mxu0 0.0
    %2222 = vmatpush1.msra.mxu0 0.0
    %2223 = vmatprep.subr.mxu0 0.0
    %2224 = vmatpush1.msra.mxu0 0.0
    %2225 = vmatprep.subr.mxu0 0.0
    %2226 = vmatpush1.msra.mxu0 0.0
    %2227 = vmatprep.subr.mxu0 0.0
    %2228 = vmatpush1.msra.mxu0 0.0
    %2229 = vmatprep.subr.mxu0 0.0
    %2230 = vmatpush1.msra.mxu0 0.0
    %2231 = vmatprep.subr.mxu0 0.0
    %2232 = vmatpush1.msra.mxu0 0.0
    %2233 = vmatprep.subr.mxu0 0.0
    %2234 = vmatpush1.msra.mxu0 0.0
    %2235 = vmatprep.subr.mxu0 0.0
    %2236 = vmatpush1.msra.mxu0 %v92
    %2237 = vmatprep.subr.mxu0 0.0
    %2238 = vmatpush1.msra.mxu0 %v91
    %2239 = vmatprep.subr.mxu0 0.0
    %2240 = vmatpush1.msra.mxu0 %v90
    %2241 = vmatprep.subr.mxu0 0.0
    %2242 = vmatpush1.msra.mxu0 %v89
    %2243 = vmatprep.subr.mxu0 0.0
    %2244 = vmatpush2.msra.mxu0 0.0
    %2245 = vmatprep.subr.mxu0 0.0
    %2246 = vmatpush2.msra.mxu0 0.0
    %2247 = vmatprep.subr.mxu0 0.0
    %2248 = vmatpush2.msra.mxu0 0.0
    %2249 = vmatprep.subr.mxu0 0.0
    %2250 = vmatpush2.msra.mxu0 0.0
    %2251 = vmatprep.subr.mxu0 0.0
    %2252 = vmatpush2.msra.mxu0 0.0
    %2253 = vmatprep.subr.mxu0 0.0
    %2254 = vmatpush2.msra.mxu0 0.0
    %2255 = vmatprep.subr.mxu0 0.0
    %2256 = vmatpush2.msra.mxu0 0.0
    %2257 = vmatprep.subr.mxu0 0.0
    %2258 = vmatpush2.msra.mxu0 0.0
    %2259 = vmatprep.subr.mxu0 0.0
    %2260 = vmatpush2.msra.mxu0 0.0
    %2261 = vmatprep.subr.mxu0 0.0
    %2262 = vmatpush2.msra.mxu0 0.0
    %2263 = vmatprep.subr.mxu0 0.0
    %2264 = vmatpush2.msra.mxu0 0.0
    %2265 = vmatprep.subr.mxu0 0.0
    %2266 = vmatpush2.msra.mxu0 0.0
    %2267 = vmatprep.subr.mxu0 0.0
    %2268 = vmatpush2.msra.mxu0 0.0
    %2269 = vmatprep.subr.mxu0 0.0
    %2270 = vmatpush2.msra.mxu0 0.0
    %2271 = vmatprep.subr.mxu0 0.0
    %2272 = vmatpush2.msra.mxu0 0.0
    %2273 = vmatprep.subr.mxu0 0.0
    %2274 = vmatpush2.msra.mxu0 0.0
    %2275 = vmatprep.mubr.f32.mxu0 0.0
    %2276 = vmatmul.mubr.f32.gmra.mxu0 %v2209
    %v2277 = vpop.f32.mrf.mxu0
    %v2278 = vadd.f32 0.0, %v2277
    %v2279 = vpop.f32.mrf.mxu0
    %2280 = vdwg.mxu0
    %v2281 = vadd.f32 %v178, %v2278
    %v2282 = vxor.u32 %v2281, 2147483648
    %v2283 = vmul.f32 %v2282, 1.442695
    %v2284 = vpow.pop %v2283
    %v2285 = vadd.f32 %v2284, 1.0
    %v2286 = vrcp.pop %v2285
    %v2287 = vmul.f32 1.0, %v2286
    %v2288 = vtanh.pop %v2281
    %v2289 = vmul.f32 %v2287, %v2199
    %2291 = vrot.lane.b32.xlu0 %v2288, 64
    %v2292 = vpop.permute.xlu0 %2291
    %v2294 = vmul.f32 %v2287, %v2292
    %2296 = vrot.lane.b32.xlu0 %v2294, 32
    %v2297 = vpop.permute.xlu0 %2296
    %v2299 = vadd.f32 %v2289, %v2297
    %v2300 = vtanh.pop %v2299
    %2302 = vrot.lane.b32.xlu0 %v2300, 64
    %v2303 = vpop.permute.xlu0 %2302
    %v2305 = vmul.f32 %v2287, %v2303
    %v2306 = vld [vmem:[%s5] sm:$0xff]
    %v2307 = vld [vmem:[%s5 + $0x8] sm:$0xff]
    %v2308 = vld [vmem:[%s5 + $0x10] sm:$0xff]
    %v2309 = vld [vmem:[%s5 + $0x18] sm:$0xff]
    %v2310 = vld [vmem:[%s6] sm:$0xff]
    %v2311 = vld [vmem:[%s6 + $0x8] sm:$0xff]
    %v2312 = vld [vmem:[%s6 + $0x10] sm:$0xff]
    %v2313 = vld [vmem:[%s6 + $0x18] sm:$0xff]
    %v2314 = vld [vmem:[#allocation6] sm:$0x1]
    %2316 = vrot.lane.b32.xlu0 %v2305, 32
    %v2317 = vpop.permute.xlu0 %2316
    %v2318 = vsel %vm712, %v2317, 0
    %2320 = vmatprep.subr.mxu0 0.0
    %2321 = vmatpush1.msra.mxu0 0.0
    %2322 = vmatprep.subr.mxu0 0.0
    %2323 = vmatpush1.msra.mxu0 0.0
    %2324 = vmatprep.subr.mxu0 0.0
    %2325 = vmatpush1.msra.mxu0 0.0
    %2326 = vmatprep.subr.mxu0 0.0
    %2327 = vmatpush1.msra.mxu0 0.0
    %2328 = vmatprep.subr.mxu0 0.0
    %2329 = vmatpush1.msra.mxu0 0.0
    %2330 = vmatprep.subr.mxu0 0.0
    %2331 = vmatpush1.msra.mxu0 0.0
    %2332 = vmatprep.subr.mxu0 0.0
    %2333 = vmatpush1.msra.mxu0 0.0
    %2334 = vmatprep.subr.mxu0 0.0
    %2335 = vmatpush1.msra.mxu0 0.0
    %2336 = vmatprep.subr.mxu0 0.0
    %2337 = vmatpush1.msra.mxu0 0.0
    %2338 = vmatprep.subr.mxu0 0.0
    %2339 = vmatpush1.msra.mxu0 0.0
    %2340 = vmatprep.subr.mxu0 0.0
    %2341 = vmatpush1.msra.mxu0 0.0
    %2342 = vmatprep.subr.mxu0 0.0
    %2343 = vmatpush1.msra.mxu0 0.0
    %2344 = vmatprep.subr.mxu0 0.0
    %2345 = vmatpush1.msra.mxu0 %v2313
    %2346 = vmatprep.subr.mxu0 0.0
    %2347 = vmatpush1.msra.mxu0 %v2312
    %2348 = vmatprep.subr.mxu0 0.0
    %2349 = vmatpush1.msra.mxu0 %v2311
    %2350 = vmatprep.subr.mxu0 0.0
    %2351 = vmatpush1.msra.mxu0 %v2310
    %2352 = vmatprep.subr.mxu0 0.0
    %2353 = vmatpush2.msra.mxu0 0.0
    %2354 = vmatprep.subr.mxu0 0.0
    %2355 = vmatpush2.msra.mxu0 0.0
    %2356 = vmatprep.subr.mxu0 0.0
    %2357 = vmatpush2.msra.mxu0 0.0
    %2358 = vmatprep.subr.mxu0 0.0
    %2359 = vmatpush2.msra.mxu0 0.0
    %2360 = vmatprep.subr.mxu0 0.0
    %2361 = vmatpush2.msra.mxu0 0.0
    %2362 = vmatprep.subr.mxu0 0.0
    %2363 = vmatpush2.msra.mxu0 0.0
    %2364 = vmatprep.subr.mxu0 0.0
    %2365 = vmatpush2.msra.mxu0 0.0
    %2366 = vmatprep.subr.mxu0 0.0
    %2367 = vmatpush2.msra.mxu0 0.0
    %2368 = vmatprep.subr.mxu0 0.0
    %2369 = vmatpush2.msra.mxu0 0.0
    %2370 = vmatprep.subr.mxu0 0.0
    %2371 = vmatpush2.msra.mxu0 0.0
    %2372 = vmatprep.subr.mxu0 0.0
    %2373 = vmatpush2.msra.mxu0 0.0
    %2374 = vmatprep.subr.mxu0 0.0
    %2375 = vmatpush2.msra.mxu0 0.0
    %2376 = vmatprep.subr.mxu0 0.0
    %2377 = vmatpush2.msra.mxu0 0.0
    %2378 = vmatprep.subr.mxu0 0.0
    %2379 = vmatpush2.msra.mxu0 0.0
    %2380 = vmatprep.subr.mxu0 0.0
    %2381 = vmatpush2.msra.mxu0 0.0
    %2382 = vmatprep.subr.mxu0 0.0
    %2383 = vmatpush2.msra.mxu0 0.0
    %2384 = vmatprep.mubr.f32.mxu0 0.0
    %2385 = vmatmul.mubr.f32.gmra.mxu0 %v2318
    %v2386 = vpop.f32.mrf.mxu0
    %v2387 = vadd.f32 0.0, %v2386
    %v2388 = vpop.f32.mrf.mxu0
    %2389 = vdwg.mxu0
    %2390 = vmatprep.subr.mxu0 0.0
    %2391 = vmatpush1.msra.mxu0 0.0
    %2392 = vmatprep.subr.mxu0 0.0
    %2393 = vmatpush1.msra.mxu0 0.0
    %2394 = vmatprep.subr.mxu0 0.0
    %2395 = vmatpush1.msra.mxu0 0.0
    %2396 = vmatprep.subr.mxu0 0.0
    %2397 = vmatpush1.msra.mxu0 0.0
    %2398 = vmatprep.subr.mxu0 0.0
    %2399 = vmatpush1.msra.mxu0 0.0
    %2400 = vmatprep.subr.mxu0 0.0
    %2401 = vmatpush1.msra.mxu0 0.0
    %2402 = vmatprep.subr.mxu0 0.0
    %2403 = vmatpush1.msra.mxu0 0.0
    %2404 = vmatprep.subr.mxu0 0.0
    %2405 = vmatpush1.msra.mxu0 0.0
    %2406 = vmatprep.subr.mxu0 0.0
    %2407 = vmatpush1.msra.mxu0 0.0
    %2408 = vmatprep.subr.mxu0 0.0
    %2409 = vmatpush1.msra.mxu0 0.0
    %2410 = vmatprep.subr.mxu0 0.0
    %2411 = vmatpush1.msra.mxu0 0.0
    %2412 = vmatprep.subr.mxu0 0.0
    %2413 = vmatpush1.msra.mxu0 0.0
    %2414 = vmatprep.subr.mxu0 0.0
    %2415 = vmatpush1.msra.mxu0 %v2309
    %2416 = vmatprep.subr.mxu0 0.0
    %2417 = vmatpush1.msra.mxu0 %v2308
    %2418 = vmatprep.subr.mxu0 0.0
    %2419 = vmatpush1.msra.mxu0 %v2307
    %2420 = vmatprep.subr.mxu0 0.0
    %2421 = vmatpush1.msra.mxu0 %v2306
    %2422 = vmatprep.subr.mxu0 0.0
    %2423 = vmatpush2.msra.mxu0 0.0
    %2424 = vmatprep.subr.mxu0 0.0
    %2425 = vmatpush2.msra.mxu0 0.0
    %2426 = vmatprep.subr.mxu0 0.0
    %2427 = vmatpush2.msra.mxu0 0.0
    %2428 = vmatprep.subr.mxu0 0.0
    %2429 = vmatpush2.msra.mxu0 0.0
    %2430 = vmatprep.subr.mxu0 0.0
    %2431 = vmatpush2.msra.mxu0 0.0
    %2432 = vmatprep.subr.mxu0 0.0
    %2433 = vmatpush2.msra.mxu0 0.0
    %2434 = vmatprep.subr.mxu0 0.0
    %2435 = vmatpush2.msra.mxu0 0.0
    %2436 = vmatprep.subr.mxu0 0.0
    %2437 = vmatpush2.msra.mxu0 0.0
    %2438 = vmatprep.subr.mxu0 0.0
    %2439 = vmatpush2.msra.mxu0 0.0
    %2440 = vmatprep.subr.mxu0 0.0
    %2441 = vmatpush2.msra.mxu0 0.0
    %2442 = vmatprep.subr.mxu0 0.0
    %2443 = vmatpush2.msra.mxu0 0.0
    %2444 = vmatprep.subr.mxu0 0.0
    %2445 = vmatpush2.msra.mxu0 0.0
    %2446 = vmatprep.subr.mxu0 0.0
    %2447 = vmatpush2.msra.mxu0 0.0
    %2448 = vmatprep.subr.mxu0 0.0
    %2449 = vmatpush2.msra.mxu0 0.0
    %2450 = vmatprep.subr.mxu0 0.0
    %2451 = vmatpush2.msra.mxu0 0.0
    %2452 = vmatprep.subr.mxu0 0.0
    %2453 = vmatpush2.msra.mxu0 0.0
    %2454 = vmatprep.mubr.f32.mxu0 0.0
    %2455 = vmatmul.mubr.f32.gmra.mxu0 %v814
    %v2456 = vpop.f32.mrf.mxu0
    %v2457 = vadd.f32 %v2387, %v2456
    %v2458 = vpop.f32.mrf.mxu0
    %2459 = vdwg.mxu0
    %v2461 = vlaneseq
    %v2462 = vshrl.u32 %v2461, 7
    %v2463 = vsub.s32 0, %v2462
    %v2464 = vrot.slane %v2314, %v2463
    %v2466 = vadd.f32 %v2457, %v2464
    %vm2467 = vcmask 33792
    %2468 = vst.msk [vmem:[%s12] sm:$0x3] %vm2467, %v2466
    %2469 = vmatprep.subr.mxu0 0.0
    %2470 = vmatpush1.msra.mxu0 0.0
    %2471 = vmatprep.subr.mxu0 0.0
    %2472 = vmatpush1.msra.mxu0 0.0
    %2473 = vmatprep.subr.mxu0 0.0
    %2474 = vmatpush1.msra.mxu0 0.0
    %2475 = vmatprep.subr.mxu0 0.0
    %2476 = vmatpush1.msra.mxu0 0.0
    %2477 = vmatprep.subr.mxu0 0.0
    %2478 = vmatpush1.msra.mxu0 0.0
    %2479 = vmatprep.subr.mxu0 0.0
    %2480 = vmatpush1.msra.mxu0 0.0
    %2481 = vmatprep.subr.mxu0 0.0
    %2482 = vmatpush1.msra.mxu0 0.0
    %2483 = vmatprep.subr.mxu0 0.0
    %2484 = vmatpush1.msra.mxu0 0.0
    %2485 = vmatprep.subr.mxu0 0.0
    %2486 = vmatpush1.msra.mxu0 0.0
    %2487 = vmatprep.subr.mxu0 0.0
    %2488 = vmatpush1.msra.mxu0 0.0
    %2489 = vmatprep.subr.mxu0 0.0
    %2490 = vmatpush1.msra.mxu0 0.0
    %2491 = vmatprep.subr.mxu0 0.0
    %2492 = vmatpush1.msra.mxu0 0.0
    %2493 = vmatprep.subr.mxu0 0.0
    %2494 = vmatpush1.msra.mxu0 %v2313
    %2495 = vmatprep.subr.mxu0 0.0
    %2496 = vmatpush1.msra.mxu0 %v2312
    %2497 = vmatprep.subr.mxu0 0.0
    %2498 = vmatpush1.msra.mxu0 %v2311
    %2499 = vmatprep.subr.mxu0 0.0
    %2500 = vmatpush1.msra.mxu0 %v2310
    %2501 = vmatprep.subr.mxu0 0.0
    %2502 = vmatpush2.msra.mxu0 0.0
    %2503 = vmatprep.subr.mxu0 0.0
    %2504 = vmatpush2.msra.mxu0 0.0
    %2505 = vmatprep.subr.mxu0 0.0
    %2506 = vmatpush2.msra.mxu0 0.0
    %2507 = vmatprep.subr.mxu0 0.0
    %2508 = vmatpush2.msra.mxu0 0.0
    %2509 = vmatprep.subr.mxu0 0.0
    %2510 = vmatpush2.msra.mxu0 0.0
    %2511 = vmatprep.subr.mxu0 0.0
    %2512 = vmatpush2.msra.mxu0 0.0
    %2513 = vmatprep.subr.mxu0 0.0
    %2514 = vmatpush2.msra.mxu0 0.0
    %2515 = vmatprep.subr.mxu0 0.0
    %2516 = vmatpush2.msra.mxu0 0.0
    %2517 = vmatprep.subr.mxu0 0.0
    %2518 = vmatpush2.msra.mxu0 0.0
    %2519 = vmatprep.subr.mxu0 0.0
    %2520 = vmatpush2.msra.mxu0 0.0
    %2521 = vmatprep.subr.mxu0 0.0
    %2522 = vmatpush2.msra.mxu0 0.0
    %2523 = vmatprep.subr.mxu0 0.0
    %2524 = vmatpush2.msra.mxu0 0.0
    %2525 = vmatprep.subr.mxu0 0.0
    %2526 = vmatpush2.msra.mxu0 0.0
    %2527 = vmatprep.subr.mxu0 0.0
    %2528 = vmatpush2.msra.mxu0 0.0
    %2529 = vmatprep.subr.mxu0 0.0
    %2530 = vmatpush2.msra.mxu0 0.0
    %2531 = vmatprep.subr.mxu0 0.0
    %2532 = vmatpush2.msra.mxu0 0.0
    %2533 = vmatprep.mubr.f32.mxu0 0.0
    %2534 = vmatmul.mubr.f32.gmra.mxu0 %v2209
    %v2535 = vpop.f32.mrf.mxu0
    %v2536 = vadd.f32 0.0, %v2535
    %v2537 = vpop.f32.mrf.mxu0
    %2538 = vdwg.mxu0
    %2539 = vmatprep.subr.mxu0 0.0
    %2540 = vmatpush1.msra.mxu0 0.0
    %2541 = vmatprep.subr.mxu0 0.0
    %2542 = vmatpush1.msra.mxu0 0.0
    %2543 = vmatprep.subr.mxu0 0.0
    %2544 = vmatpush1.msra.mxu0 0.0
    %2545 = vmatprep.subr.mxu0 0.0
    %2546 = vmatpush1.msra.mxu0 0.0
    %2547 = vmatprep.subr.mxu0 0.0
    %2548 = vmatpush1.msra.mxu0 0.0
    %2549 = vmatprep.subr.mxu0 0.0
    %2550 = vmatpush1.msra.mxu0 0.0
    %2551 = vmatprep.subr.mxu0 0.0
    %2552 = vmatpush1.msra.mxu0 0.0
    %2553 = vmatprep.subr.mxu0 0.0
    %2554 = vmatpush1.msra.mxu0 0.0
    %2555 = vmatprep.subr.mxu0 0.0
    %2556 = vmatpush1.msra.mxu0 0.0
    %2557 = vmatprep.subr.mxu0 0.0
    %2558 = vmatpush1.msra.mxu0 0.0
    %2559 = vmatprep.subr.mxu0 0.0
    %2560 = vmatpush1.msra.mxu0 0.0
    %2561 = vmatprep.subr.mxu0 0.0
    %2562 = vmatpush1.msra.mxu0 0.0
    %2563 = vmatprep.subr.mxu0 0.0
    %2564 = vmatpush1.msra.mxu0 %v2309
    %2565 = vmatprep.subr.mxu0 0.0
    %2566 = vmatpush1.msra.mxu0 %v2308
    %2567 = vmatprep.subr.mxu0 0.0
    %2568 = vmatpush1.msra.mxu0 %v2307
    %2569 = vmatprep.subr.mxu0 0.0
    %2570 = vmatpush1.msra.mxu0 %v2306
    %2571 = vmatprep.subr.mxu0 0.0
    %2572 = vmatpush2.msra.mxu0 0.0
    %2573 = vmatprep.subr.mxu0 0.0
    %2574 = vmatpush2.msra.mxu0 0.0
    %2575 = vmatprep.subr.mxu0 0.0
    %2576 = vmatpush2.msra.mxu0 0.0
    %2577 = vmatprep.subr.mxu0 0.0
    %2578 = vmatpush2.msra.mxu0 0.0
    %2579 = vmatprep.subr.mxu0 0.0
    %2580 = vmatpush2.msra.mxu0 0.0
    %2581 = vmatprep.subr.mxu0 0.0
    %2582 = vmatpush2.msra.mxu0 0.0
    %2583 = vmatprep.subr.mxu0 0.0
    %2584 = vmatpush2.msra.mxu0 0.0
    %2585 = vmatprep.subr.mxu0 0.0
    %2586 = vmatpush2.msra.mxu0 0.0
    %2587 = vmatprep.subr.mxu0 0.0
    %2588 = vmatpush2.msra.mxu0 0.0
    %2589 = vmatprep.subr.mxu0 0.0
    %2590 = vmatpush2.msra.mxu0 0.0
    %2591 = vmatprep.subr.mxu0 0.0
    %2592 = vmatpush2.msra.mxu0 0.0
    %2593 = vmatprep.subr.mxu0 0.0
    %2594 = vmatpush2.msra.mxu0 0.0
    %2595 = vmatprep.subr.mxu0 0.0
    %2596 = vmatpush2.msra.mxu0 0.0
    %2597 = vmatprep.subr.mxu0 0.0
    %2598 = vmatpush2.msra.mxu0 0.0
    %2599 = vmatprep.subr.mxu0 0.0
    %2600 = vmatpush2.msra.mxu0 0.0
    %2601 = vmatprep.subr.mxu0 0.0
    %2602 = vmatpush2.msra.mxu0 0.0
    %2603 = vmatprep.mubr.f32.mxu0 0.0
    %2604 = vmatmul.mubr.f32.gmra.mxu0 %v914
    %v2605 = vpop.f32.mrf.mxu0
    %v2606 = vadd.f32 %v2536, %v2605
    %v2607 = vpop.f32.mrf.mxu0
    %2608 = vdwg.mxu0
    %v2609 = vadd.f32 %v2606, %v2464
    %s2610 = scalar_lea.vmem %s12, 2
    %2611 = vst.msk [vmem:[%s2610] sm:$0x3] %vm2467, %v2609
    %2612 = vmatprep.subr.mxu0 0.0
    %2613 = vmatpush1.msra.mxu0 0.0
    %2614 = vmatprep.subr.mxu0 0.0
    %2615 = vmatpush1.msra.mxu0 0.0
    %2616 = vmatprep.subr.mxu0 0.0
    %2617 = vmatpush1.msra.mxu0 0.0
    %2618 = vmatprep.subr.mxu0 0.0
    %2619 = vmatpush1.msra.mxu0 0.0
    %2620 = vmatprep.subr.mxu0 0.0
    %2621 = vmatpush1.msra.mxu0 0.0
    %2622 = vmatprep.subr.mxu0 0.0
    %2623 = vmatpush1.msra.mxu0 0.0
    %2624 = vmatprep.subr.mxu0 0.0
    %2625 = vmatpush1.msra.mxu0 0.0
    %2626 = vmatprep.subr.mxu0 0.0
    %2627 = vmatpush1.msra.mxu0 0.0
    %2628 = vmatprep.subr.mxu0 0.0
    %2629 = vmatpush1.msra.mxu0 0.0
    %2630 = vmatprep.subr.mxu0 0.0
    %2631 = vmatpush1.msra.mxu0 0.0
    %2632 = vmatprep.subr.mxu0 0.0
    %2633 = vmatpush1.msra.mxu0 0.0
    %2634 = vmatprep.subr.mxu0 0.0
    %2635 = vmatpush1.msra.mxu0 0.0
    %2636 = vmatprep.subr.mxu0 0.0
    %2637 = vmatpush1.msra.mxu0 %v2313
    %2638 = vmatprep.subr.mxu0 0.0
    %2639 = vmatpush1.msra.mxu0 %v2312
    %2640 = vmatprep.subr.mxu0 0.0
    %2641 = vmatpush1.msra.mxu0 %v2311
    %2642 = vmatprep.subr.mxu0 0.0
    %2643 = vmatpush1.msra.mxu0 %v2310
    %2644 = vmatprep.subr.mxu0 0.0
    %2645 = vmatpush2.msra.mxu0 0.0
    %2646 = vmatprep.subr.mxu0 0.0
    %2647 = vmatpush2.msra.mxu0 0.0
    %2648 = vmatprep.subr.mxu0 0.0
    %2649 = vmatpush2.msra.mxu0 0.0
    %2650 = vmatprep.subr.mxu0 0.0
    %2651 = vmatpush2.msra.mxu0 0.0
    %2652 = vmatprep.subr.mxu0 0.0
    %2653 = vmatpush2.msra.mxu0 0.0
    %2654 = vmatprep.subr.mxu0 0.0
    %2655 = vmatpush2.msra.mxu0 0.0
    %2656 = vmatprep.subr.mxu0 0.0
    %2657 = vmatpush2.msra.mxu0 0.0
    %2658 = vmatprep.subr.mxu0 0.0
    %2659 = vmatpush2.msra.mxu0 0.0
    %2660 = vmatprep.subr.mxu0 0.0
    %2661 = vmatpush2.msra.mxu0 0.0
    %2662 = vmatprep.subr.mxu0 0.0
    %2663 = vmatpush2.msra.mxu0 0.0
    %2664 = vmatprep.subr.mxu0 0.0
    %2665 = vmatpush2.msra.mxu0 0.0
    %2666 = vmatprep.subr.mxu0 0.0
    %2667 = vmatpush2.msra.mxu0 0.0
    %2668 = vmatprep.subr.mxu0 0.0
    %2669 = vmatpush2.msra.mxu0 0.0
    %2670 = vmatprep.subr.mxu0 0.0
    %2671 = vmatpush2.msra.mxu0 0.0
    %2672 = vmatprep.subr.mxu0 0.0
    %2673 = vmatpush2.msra.mxu0 0.0
    %2674 = vmatprep.subr.mxu0 0.0
    %2675 = vmatpush2.msra.mxu0 0.0
    %2676 = vmatprep.mubr.f32.mxu0 0.0
    %2677 = vmatmul.mubr.f32.gmra.mxu0 %v2109
    %v2678 = vpop.f32.mrf.mxu0
    %v2679 = vadd.f32 0.0, %v2678
    %v2680 = vpop.f32.mrf.mxu0
    %2681 = vdwg.mxu0
    %2682 = vmatprep.subr.mxu0 0.0
    %2683 = vmatpush1.msra.mxu0 0.0
    %2684 = vmatprep.subr.mxu0 0.0
    %2685 = vmatpush1.msra.mxu0 0.0
    %2686 = vmatprep.subr.mxu0 0.0
    %2687 = vmatpush1.msra.mxu0 0.0
    %2688 = vmatprep.subr.mxu0 0.0
    %2689 = vmatpush1.msra.mxu0 0.0
    %2690 = vmatprep.subr.mxu0 0.0
    %2691 = vmatpush1.msra.mxu0 0.0
    %2692 = vmatprep.subr.mxu0 0.0
    %2693 = vmatpush1.msra.mxu0 0.0
    %2694 = vmatprep.subr.mxu0 0.0
    %2695 = vmatpush1.msra.mxu0 0.0
    %2696 = vmatprep.subr.mxu0 0.0
    %2697 = vmatpush1.msra.mxu0 0.0
    %2698 = vmatprep.subr.mxu0 0.0
    %2699 = vmatpush1.msra.mxu0 0.0
    %2700 = vmatprep.subr.mxu0 0.0
    %2701 = vmatpush1.msra.mxu0 0.0
    %2702 = vmatprep.subr.mxu0 0.0
    %2703 = vmatpush1.msra.mxu0 0.0
    %2704 = vmatprep.subr.mxu0 0.0
    %2705 = vmatpush1.msra.mxu0 0.0
    %2706 = vmatprep.subr.mxu0 0.0
    %2707 = vmatpush1.msra.mxu0 %v2309
    %2708 = vmatprep.subr.mxu0 0.0
    %2709 = vmatpush1.msra.mxu0 %v2308
    %2710 = vmatprep.subr.mxu0 0.0
    %2711 = vmatpush1.msra.mxu0 %v2307
    %2712 = vmatprep.subr.mxu0 0.0
    %2713 = vmatpush1.msra.mxu0 %v2306
    %2714 = vmatprep.subr.mxu0 0.0
    %2715 = vmatpush2.msra.mxu0 0.0
    %2716 = vmatprep.subr.mxu0 0.0
    %2717 = vmatpush2.msra.mxu0 0.0
    %2718 = vmatprep.subr.mxu0 0.0
    %2719 = vmatpush2.msra.mxu0 0.0
    %2720 = vmatprep.subr.mxu0 0.0
    %2721 = vmatpush2.msra.mxu0 0.0
    %2722 = vmatprep.subr.mxu0 0.0
    %2723 = vmatpush2.msra.mxu0 0.0
    %2724 = vmatprep.subr.mxu0 0.0
    %2725 = vmatpush2.msra.mxu0 0.0
    %2726 = vmatprep.subr.mxu0 0.0
    %2727 = vmatpush2.msra.mxu0 0.0
    %2728 = vmatprep.subr.mxu0 0.0
    %2729 = vmatpush2.msra.mxu0 0.0
    %2730 = vmatprep.subr.mxu0 0.0
    %2731 = vmatpush2.msra.mxu0 0.0
    %2732 = vmatprep.subr.mxu0 0.0
    %2733 = vmatpush2.msra.mxu0 0.0
    %2734 = vmatprep.subr.mxu0 0.0
    %2735 = vmatpush2.msra.mxu0 0.0
    %2736 = vmatprep.subr.mxu0 0.0
    %2737 = vmatpush2.msra.mxu0 0.0
    %2738 = vmatprep.subr.mxu0 0.0
    %2739 = vmatpush2.msra.mxu0 0.0
    %2740 = vmatprep.subr.mxu0 0.0
    %2741 = vmatpush2.msra.mxu0 0.0
    %2742 = vmatprep.subr.mxu0 0.0
    %2743 = vmatpush2.msra.mxu0 0.0
    %2744 = vmatprep.subr.mxu0 0.0
    %2745 = vmatpush2.msra.mxu0 0.0
    %2746 = vmatprep.mubr.f32.mxu0 0.0
    %2747 = vmatmul.mubr.f32.gmra.mxu0 %v1014
    %v2748 = vpop.f32.mrf.mxu0
    %v2749 = vadd.f32 %v2679, %v2748
    %v2750 = vpop.f32.mrf.mxu0
    %2751 = vdwg.mxu0
    %v2752 = vadd.f32 %v2749, %v2464
    %s2753 = scalar_lea.vmem %s12, 4
    %2754 = vst.msk [vmem:[%s2753] sm:$0x3] %vm2467, %v2752
    %2755 = vmatprep.subr.mxu0 0.0
    %2756 = vmatpush1.msra.mxu0 0.0
    %2757 = vmatprep.subr.mxu0 0.0
    %2758 = vmatpush1.msra.mxu0 0.0
    %2759 = vmatprep.subr.mxu0 0.0
    %2760 = vmatpush1.msra.mxu0 0.0
    %2761 = vmatprep.subr.mxu0 0.0
    %2762 = vmatpush1.msra.mxu0 0.0
    %2763 = vmatprep.subr.mxu0 0.0
    %2764 = vmatpush1.msra.mxu0 0.0
    %2765 = vmatprep.subr.mxu0 0.0
    %2766 = vmatpush1.msra.mxu0 0.0
    %2767 = vmatprep.subr.mxu0 0.0
    %2768 = vmatpush1.msra.mxu0 0.0
    %2769 = vmatprep.subr.mxu0 0.0
    %2770 = vmatpush1.msra.mxu0 0.0
    %2771 = vmatprep.subr.mxu0 0.0
    %2772 = vmatpush1.msra.mxu0 0.0
    %2773 = vmatprep.subr.mxu0 0.0
    %2774 = vmatpush1.msra.mxu0 0.0
    %2775 = vmatprep.subr.mxu0 0.0
    %2776 = vmatpush1.msra.mxu0 0.0
    %2777 = vmatprep.subr.mxu0 0.0
    %2778 = vmatpush1.msra.mxu0 0.0
    %2779 = vmatprep.subr.mxu0 0.0
    %2780 = vmatpush1.msra.mxu0 %v2313
    %2781 = vmatprep.subr.mxu0 0.0
    %2782 = vmatpush1.msra.mxu0 %v2312
    %2783 = vmatprep.subr.mxu0 0.0
    %2784 = vmatpush1.msra.mxu0 %v2311
    %2785 = vmatprep.subr.mxu0 0.0
    %2786 = vmatpush1.msra.mxu0 %v2310
    %2787 = vmatprep.subr.mxu0 0.0
    %2788 = vmatpush2.msra.mxu0 0.0
    %2789 = vmatprep.subr.mxu0 0.0
    %2790 = vmatpush2.msra.mxu0 0.0
    %2791 = vmatprep.subr.mxu0 0.0
    %2792 = vmatpush2.msra.mxu0 0.0
    %2793 = vmatprep.subr.mxu0 0.0
    %2794 = vmatpush2.msra.mxu0 0.0
    %2795 = vmatprep.subr.mxu0 0.0
    %2796 = vmatpush2.msra.mxu0 0.0
    %2797 = vmatprep.subr.mxu0 0.0
    %2798 = vmatpush2.msra.mxu0 0.0
    %2799 = vmatprep.subr.mxu0 0.0
    %2800 = vmatpush2.msra.mxu0 0.0
    %2801 = vmatprep.subr.mxu0 0.0
    %2802 = vmatpush2.msra.mxu0 0.0
    %2803 = vmatprep.subr.mxu0 0.0
    %2804 = vmatpush2.msra.mxu0 0.0
    %2805 = vmatprep.subr.mxu0 0.0
    %2806 = vmatpush2.msra.mxu0 0.0
    %2807 = vmatprep.subr.mxu0 0.0
    %2808 = vmatpush2.msra.mxu0 0.0
    %2809 = vmatprep.subr.mxu0 0.0
    %2810 = vmatpush2.msra.mxu0 0.0
    %2811 = vmatprep.subr.mxu0 0.0
    %2812 = vmatpush2.msra.mxu0 0.0
    %2813 = vmatprep.subr.mxu0 0.0
    %2814 = vmatpush2.msra.mxu0 0.0
    %2815 = vmatprep.subr.mxu0 0.0
    %2816 = vmatpush2.msra.mxu0 0.0
    %2817 = vmatprep.subr.mxu0 0.0
    %2818 = vmatpush2.msra.mxu0 0.0
    %2819 = vmatprep.mubr.f32.mxu0 0.0
    %2820 = vmatmul.mubr.f32.gmra.mxu0 %v2009
    %v2821 = vpop.f32.mrf.mxu0
    %v2822 = vadd.f32 0.0, %v2821
    %v2823 = vpop.f32.mrf.mxu0
    %2824 = vdwg.mxu0
    %2825 = vmatprep.subr.mxu0 0.0
    %2826 = vmatpush1.msra.mxu0 0.0
    %2827 = vmatprep.subr.mxu0 0.0
    %2828 = vmatpush1.msra.mxu0 0.0
    %2829 = vmatprep.subr.mxu0 0.0
    %2830 = vmatpush1.msra.mxu0 0.0
    %2831 = vmatprep.subr.mxu0 0.0
    %2832 = vmatpush1.msra.mxu0 0.0
    %2833 = vmatprep.subr.mxu0 0.0
    %2834 = vmatpush1.msra.mxu0 0.0
    %2835 = vmatprep.subr.mxu0 0.0
    %2836 = vmatpush1.msra.mxu0 0.0
    %2837 = vmatprep.subr.mxu0 0.0
    %2838 = vmatpush1.msra.mxu0 0.0
    %2839 = vmatprep.subr.mxu0 0.0
    %2840 = vmatpush1.msra.mxu0 0.0
    %2841 = vmatprep.subr.mxu0 0.0
    %2842 = vmatpush1.msra.mxu0 0.0
    %2843 = vmatprep.subr.mxu0 0.0
    %2844 = vmatpush1.msra.mxu0 0.0
    %2845 = vmatprep.subr.mxu0 0.0
    %2846 = vmatpush1.msra.mxu0 0.0
    %2847 = vmatprep.subr.mxu0 0.0
    %2848 = vmatpush1.msra.mxu0 0.0
    %2849 = vmatprep.subr.mxu0 0.0
    %2850 = vmatpush1.msra.mxu0 %v2309
    %2851 = vmatprep.subr.mxu0 0.0
    %2852 = vmatpush1.msra.mxu0 %v2308
    %2853 = vmatprep.subr.mxu0 0.0
    %2854 = vmatpush1.msra.mxu0 %v2307
    %2855 = vmatprep.subr.mxu0 0.0
    %2856 = vmatpush1.msra.mxu0 %v2306
    %2857 = vmatprep.subr.mxu0 0.0
    %2858 = vmatpush2.msra.mxu0 0.0
    %2859 = vmatprep.subr.mxu0 0.0
    %2860 = vmatpush2.msra.mxu0 0.0
    %2861 = vmatprep.subr.mxu0 0.0
    %2862 = vmatpush2.msra.mxu0 0.0
    %2863 = vmatprep.subr.mxu0 0.0
    %2864 = vmatpush2.msra.mxu0 0.0
    %2865 = vmatprep.subr.mxu0 0.0
    %2866 = vmatpush2.msra.mxu0 0.0
    %2867 = vmatprep.subr.mxu0 0.0
    %2868 = vmatpush2.msra.mxu0 0.0
    %2869 = vmatprep.subr.mxu0 0.0
    %2870 = vmatpush2.msra.mxu0 0.0
    %2871 = vmatprep.subr.mxu0 0.0
    %2872 = vmatpush2.msra.mxu0 0.0
    %2873 = vmatprep.subr.mxu0 0.0
    %2874 = vmatpush2.msra.mxu0 0.0
    %2875 = vmatprep.subr.mxu0 0.0
    %2876 = vmatpush2.msra.mxu0 0.0
    %2877 = vmatprep.subr.mxu0 0.0
    %2878 = vmatpush2.msra.mxu0 0.0
    %2879 = vmatprep.subr.mxu0 0.0
    %2880 = vmatpush2.msra.mxu0 0.0
    %2881 = vmatprep.subr.mxu0 0.0
    %2882 = vmatpush2.msra.mxu0 0.0
    %2883 = vmatprep.subr.mxu0 0.0
    %2884 = vmatpush2.msra.mxu0 0.0
    %2885 = vmatprep.subr.mxu0 0.0
    %2886 = vmatpush2.msra.mxu0 0.0
    %2887 = vmatprep.subr.mxu0 0.0
    %2888 = vmatpush2.msra.mxu0 0.0
    %2889 = vmatprep.mubr.f32.mxu0 0.0
    %2890 = vmatmul.mubr.f32.gmra.mxu0 %v1114
    %v2891 = vpop.f32.mrf.mxu0
    %v2892 = vadd.f32 %v2822, %v2891
    %v2893 = vpop.f32.mrf.mxu0
    %2894 = vdwg.mxu0
    %v2895 = vadd.f32 %v2892, %v2464
    %s2896 = scalar_lea.vmem %s12, 6
    %2897 = vst.msk [vmem:[%s2896] sm:$0x3] %vm2467, %v2895
    %2898 = vmatprep.subr.mxu0 0.0
    %2899 = vmatpush1.msra.mxu0 0.0
    %2900 = vmatprep.subr.mxu0 0.0
    %2901 = vmatpush1.msra.mxu0 0.0
    %2902 = vmatprep.subr.mxu0 0.0
    %2903 = vmatpush1.msra.mxu0 0.0
    %2904 = vmatprep.subr.mxu0 0.0
    %2905 = vmatpush1.msra.mxu0 0.0
    %2906 = vmatprep.subr.mxu0 0.0
    %2907 = vmatpush1.msra.mxu0 0.0
    %2908 = vmatprep.subr.mxu0 0.0
    %2909 = vmatpush1.msra.mxu0 0.0
    %2910 = vmatprep.subr.mxu0 0.0
    %2911 = vmatpush1.msra.mxu0 0.0
    %2912 = vmatprep.subr.mxu0 0.0
    %2913 = vmatpush1.msra.mxu0 0.0
    %2914 = vmatprep.subr.mxu0 0.0
    %2915 = vmatpush1.msra.mxu0 0.0
    %2916 = vmatprep.subr.mxu0 0.0
    %2917 = vmatpush1.msra.mxu0 0.0
    %2918 = vmatprep.subr.mxu0 0.0
    %2919 = vmatpush1.msra.mxu0 0.0
    %2920 = vmatprep.subr.mxu0 0.0
    %2921 = vmatpush1.msra.mxu0 0.0
    %2922 = vmatprep.subr.mxu0 0.0
    %2923 = vmatpush1.msra.mxu0 %v2313
    %2924 = vmatprep.subr.mxu0 0.0
    %2925 = vmatpush1.msra.mxu0 %v2312
    %2926 = vmatprep.subr.mxu0 0.0
    %2927 = vmatpush1.msra.mxu0 %v2311
    %2928 = vmatprep.subr.mxu0 0.0
    %2929 = vmatpush1.msra.mxu0 %v2310
    %2930 = vmatprep.subr.mxu0 0.0
    %2931 = vmatpush2.msra.mxu0 0.0
    %2932 = vmatprep.subr.mxu0 0.0
    %2933 = vmatpush2.msra.mxu0 0.0
    %2934 = vmatprep.subr.mxu0 0.0
    %2935 = vmatpush2.msra.mxu0 0.0
    %2936 = vmatprep.subr.mxu0 0.0
    %2937 = vmatpush2.msra.mxu0 0.0
    %2938 = vmatprep.subr.mxu0 0.0
    %2939 = vmatpush2.msra.mxu0 0.0
    %2940 = vmatprep.subr.mxu0 0.0
    %2941 = vmatpush2.msra.mxu0 0.0
    %2942 = vmatprep.subr.mxu0 0.0
    %2943 = vmatpush2.msra.mxu0 0.0
    %2944 = vmatprep.subr.mxu0 0.0
    %2945 = vmatpush2.msra.mxu0 0.0
    %2946 = vmatprep.subr.mxu0 0.0
    %2947 = vmatpush2.msra.mxu0 0.0
    %2948 = vmatprep.subr.mxu0 0.0
    %2949 = vmatpush2.msra.mxu0 0.0
    %2950 = vmatprep.subr.mxu0 0.0
    %2951 = vmatpush2.msra.mxu0 0.0
    %2952 = vmatprep.subr.mxu0 0.0
    %2953 = vmatpush2.msra.mxu0 0.0
    %2954 = vmatprep.subr.mxu0 0.0
    %2955 = vmatpush2.msra.mxu0 0.0
    %2956 = vmatprep.subr.mxu0 0.0
    %2957 = vmatpush2.msra.mxu0 0.0
    %2958 = vmatprep.subr.mxu0 0.0
    %2959 = vmatpush2.msra.mxu0 0.0
    %2960 = vmatprep.subr.mxu0 0.0
    %2961 = vmatpush2.msra.mxu0 0.0
    %2962 = vmatprep.mubr.f32.mxu0 0.0
    %2963 = vmatmul.mubr.f32.gmra.mxu0 %v1909
    %v2964 = vpop.f32.mrf.mxu0
    %v2965 = vadd.f32 0.0, %v2964
    %v2966 = vpop.f32.mrf.mxu0
    %2967 = vdwg.mxu0
    %2968 = vmatprep.subr.mxu0 0.0
    %2969 = vmatpush1.msra.mxu0 0.0
    %2970 = vmatprep.subr.mxu0 0.0
    %2971 = vmatpush1.msra.mxu0 0.0
    %2972 = vmatprep.subr.mxu0 0.0
    %2973 = vmatpush1.msra.mxu0 0.0
    %2974 = vmatprep.subr.mxu0 0.0
    %2975 = vmatpush1.msra.mxu0 0.0
    %2976 = vmatprep.subr.mxu0 0.0
    %2977 = vmatpush1.msra.mxu0 0.0
    %2978 = vmatprep.subr.mxu0 0.0
    %2979 = vmatpush1.msra.mxu0 0.0
    %2980 = vmatprep.subr.mxu0 0.0
    %2981 = vmatpush1.msra.mxu0 0.0
    %2982 = vmatprep.subr.mxu0 0.0
    %2983 = vmatpush1.msra.mxu0 0.0
    %2984 = vmatprep.subr.mxu0 0.0
    %2985 = vmatpush1.msra.mxu0 0.0
    %2986 = vmatprep.subr.mxu0 0.0
    %2987 = vmatpush1.msra.mxu0 0.0
    %2988 = vmatprep.subr.mxu0 0.0
    %2989 = vmatpush1.msra.mxu0 0.0
    %2990 = vmatprep.subr.mxu0 0.0
    %2991 = vmatpush1.msra.mxu0 0.0
    %2992 = vmatprep.subr.mxu0 0.0
    %2993 = vmatpush1.msra.mxu0 %v2309
    %2994 = vmatprep.subr.mxu0 0.0
    %2995 = vmatpush1.msra.mxu0 %v2308
    %2996 = vmatprep.subr.mxu0 0.0
    %2997 = vmatpush1.msra.mxu0 %v2307
    %2998 = vmatprep.subr.mxu0 0.0
    %2999 = vmatpush1.msra.mxu0 %v2306
    %3000 = vmatprep.subr.mxu0 0.0
    %3001 = vmatpush2.msra.mxu0 0.0
    %3002 = vmatprep.subr.mxu0 0.0
    %3003 = vmatpush2.msra.mxu0 0.0
    %3004 = vmatprep.subr.mxu0 0.0
    %3005 = vmatpush2.msra.mxu0 0.0
    %3006 = vmatprep.subr.mxu0 0.0
    %3007 = vmatpush2.msra.mxu0 0.0
    %3008 = vmatprep.subr.mxu0 0.0
    %3009 = vmatpush2.msra.mxu0 0.0
    %3010 = vmatprep.subr.mxu0 0.0
    %3011 = vmatpush2.msra.mxu0 0.0
    %3012 = vmatprep.subr.mxu0 0.0
    %3013 = vmatpush2.msra.mxu0 0.0
    %3014 = vmatprep.subr.mxu0 0.0
    %3015 = vmatpush2.msra.mxu0 0.0
    %3016 = vmatprep.subr.mxu0 0.0
    %3017 = vmatpush2.msra.mxu0 0.0
    %3018 = vmatprep.subr.mxu0 0.0
    %3019 = vmatpush2.msra.mxu0 0.0
    %3020 = vmatprep.subr.mxu0 0.0
    %3021 = vmatpush2.msra.mxu0 0.0
    %3022 = vmatprep.subr.mxu0 0.0
    %3023 = vmatpush2.msra.mxu0 0.0
    %3024 = vmatprep.subr.mxu0 0.0
    %3025 = vmatpush2.msra.mxu0 0.0
    %3026 = vmatprep.subr.mxu0 0.0
    %3027 = vmatpush2.msra.mxu0 0.0
    %3028 = vmatprep.subr.mxu0 0.0
    %3029 = vmatpush2.msra.mxu0 0.0
    %3030 = vmatprep.subr.mxu0 0.0
    %3031 = vmatpush2.msra.mxu0 0.0
    %3032 = vmatprep.mubr.f32.mxu0 0.0
    %3033 = vmatmul.mubr.f32.gmra.mxu0 %v1214
    %v3034 = vpop.f32.mrf.mxu0
    %v3035 = vadd.f32 %v2965, %v3034
    %v3036 = vpop.f32.mrf.mxu0
    %3037 = vdwg.mxu0
    %v3038 = vadd.f32 %v3035, %v2464
    %s3039 = scalar_lea.vmem %s12, 8
    %3040 = vst.msk [vmem:[%s3039] sm:$0x3] %vm2467, %v3038
    %3041 = vmatprep.subr.mxu0 0.0
    %3042 = vmatpush1.msra.mxu0 0.0
    %3043 = vmatprep.subr.mxu0 0.0
    %3044 = vmatpush1.msra.mxu0 0.0
    %3045 = vmatprep.subr.mxu0 0.0
    %3046 = vmatpush1.msra.mxu0 0.0
    %3047 = vmatprep.subr.mxu0 0.0
    %3048 = vmatpush1.msra.mxu0 0.0
    %3049 = vmatprep.subr.mxu0 0.0
    %3050 = vmatpush1.msra.mxu0 0.0
    %3051 = vmatprep.subr.mxu0 0.0
    %3052 = vmatpush1.msra.mxu0 0.0
    %3053 = vmatprep.subr.mxu0 0.0
    %3054 = vmatpush1.msra.mxu0 0.0
    %3055 = vmatprep.subr.mxu0 0.0
    %3056 = vmatpush1.msra.mxu0 0.0
    %3057 = vmatprep.subr.mxu0 0.0
    %3058 = vmatpush1.msra.mxu0 0.0
    %3059 = vmatprep.subr.mxu0 0.0
    %3060 = vmatpush1.msra.mxu0 0.0
    %3061 = vmatprep.subr.mxu0 0.0
    %3062 = vmatpush1.msra.mxu0 0.0
    %3063 = vmatprep.subr.mxu0 0.0
    %3064 = vmatpush1.msra.mxu0 0.0
    %3065 = vmatprep.subr.mxu0 0.0
    %3066 = vmatpush1.msra.mxu0 %v2313
    %3067 = vmatprep.subr.mxu0 0.0
    %3068 = vmatpush1.msra.mxu0 %v2312
    %3069 = vmatprep.subr.mxu0 0.0
    %3070 = vmatpush1.msra.mxu0 %v2311
    %3071 = vmatprep.subr.mxu0 0.0
    %3072 = vmatpush1.msra.mxu0 %v2310
    %3073 = vmatprep.subr.mxu0 0.0
    %3074 = vmatpush2.msra.mxu0 0.0
    %3075 = vmatprep.subr.mxu0 0.0
    %3076 = vmatpush2.msra.mxu0 0.0
    %3077 = vmatprep.subr.mxu0 0.0
    %3078 = vmatpush2.msra.mxu0 0.0
    %3079 = vmatprep.subr.mxu0 0.0
    %3080 = vmatpush2.msra.mxu0 0.0
    %3081 = vmatprep.subr.mxu0 0.0
    %3082 = vmatpush2.msra.mxu0 0.0
    %3083 = vmatprep.subr.mxu0 0.0
    %3084 = vmatpush2.msra.mxu0 0.0
    %3085 = vmatprep.subr.mxu0 0.0
    %3086 = vmatpush2.msra.mxu0 0.0
    %3087 = vmatprep.subr.mxu0 0.0
    %3088 = vmatpush2.msra.mxu0 0.0
    %3089 = vmatprep.subr.mxu0 0.0
    %3090 = vmatpush2.msra.mxu0 0.0
    %3091 = vmatprep.subr.mxu0 0.0
    %3092 = vmatpush2.msra.mxu0 0.0
    %3093 = vmatprep.subr.mxu0 0.0
    %3094 = vmatpush2.msra.mxu0 0.0
    %3095 = vmatprep.subr.mxu0 0.0
    %3096 = vmatpush2.msra.mxu0 0.0
    %3097 = vmatprep.subr.mxu0 0.0
    %3098 = vmatpush2.msra.mxu0 0.0
    %3099 = vmatprep.subr.mxu0 0.0
    %3100 = vmatpush2.msra.mxu0 0.0
    %3101 = vmatprep.subr.mxu0 0.0
    %3102 = vmatpush2.msra.mxu0 0.0
    %3103 = vmatprep.subr.mxu0 0.0
    %3104 = vmatpush2.msra.mxu0 0.0
    %3105 = vmatprep.mubr.f32.mxu0 0.0
    %3106 = vmatmul.mubr.f32.gmra.mxu0 %v1809
    %v3107 = vpop.f32.mrf.mxu0
    %v3108 = vadd.f32 0.0, %v3107
    %v3109 = vpop.f32.mrf.mxu0
    %3110 = vdwg.mxu0
    %3111 = vmatprep.subr.mxu0 0.0
    %3112 = vmatpush1.msra.mxu0 0.0
    %3113 = vmatprep.subr.mxu0 0.0
    %3114 = vmatpush1.msra.mxu0 0.0
    %3115 = vmatprep.subr.mxu0 0.0
    %3116 = vmatpush1.msra.mxu0 0.0
    %3117 = vmatprep.subr.mxu0 0.0
    %3118 = vmatpush1.msra.mxu0 0.0
    %3119 = vmatprep.subr.mxu0 0.0
    %3120 = vmatpush1.msra.mxu0 0.0
    %3121 = vmatprep.subr.mxu0 0.0
    %3122 = vmatpush1.msra.mxu0 0.0
    %3123 = vmatprep.subr.mxu0 0.0
    %3124 = vmatpush1.msra.mxu0 0.0
    %3125 = vmatprep.subr.mxu0 0.0
    %3126 = vmatpush1.msra.mxu0 0.0
    %3127 = vmatprep.subr.mxu0 0.0
    %3128 = vmatpush1.msra.mxu0 0.0
    %3129 = vmatprep.subr.mxu0 0.0
    %3130 = vmatpush1.msra.mxu0 0.0
    %3131 = vmatprep.subr.mxu0 0.0
    %3132 = vmatpush1.msra.mxu0 0.0
    %3133 = vmatprep.subr.mxu0 0.0
    %3134 = vmatpush1.msra.mxu0 0.0
    %3135 = vmatprep.subr.mxu0 0.0
    %3136 = vmatpush1.msra.mxu0 %v2309
    %3137 = vmatprep.subr.mxu0 0.0
    %3138 = vmatpush1.msra.mxu0 %v2308
    %3139 = vmatprep.subr.mxu0 0.0
    %3140 = vmatpush1.msra.mxu0 %v2307
    %3141 = vmatprep.subr.mxu0 0.0
    %3142 = vmatpush1.msra.mxu0 %v2306
    %3143 = vmatprep.subr.mxu0 0.0
    %3144 = vmatpush2.msra.mxu0 0.0
    %3145 = vmatprep.subr.mxu0 0.0
    %3146 = vmatpush2.msra.mxu0 0.0
    %3147 = vmatprep.subr.mxu0 0.0
    %3148 = vmatpush2.msra.mxu0 0.0
    %3149 = vmatprep.subr.mxu0 0.0
    %3150 = vmatpush2.msra.mxu0 0.0
    %3151 = vmatprep.subr.mxu0 0.0
    %3152 = vmatpush2.msra.mxu0 0.0
    %3153 = vmatprep.subr.mxu0 0.0
    %3154 = vmatpush2.msra.mxu0 0.0
    %3155 = vmatprep.subr.mxu0 0.0
    %3156 = vmatpush2.msra.mxu0 0.0
    %3157 = vmatprep.subr.mxu0 0.0
    %3158 = vmatpush2.msra.mxu0 0.0
    %3159 = vmatprep.subr.mxu0 0.0
    %3160 = vmatpush2.msra.mxu0 0.0
    %3161 = vmatprep.subr.mxu0 0.0
    %3162 = vmatpush2.msra.mxu0 0.0
    %3163 = vmatprep.subr.mxu0 0.0
    %3164 = vmatpush2.msra.mxu0 0.0
    %3165 = vmatprep.subr.mxu0 0.0
    %3166 = vmatpush2.msra.mxu0 0.0
    %3167 = vmatprep.subr.mxu0 0.0
    %3168 = vmatpush2.msra.mxu0 0.0
    %3169 = vmatprep.subr.mxu0 0.0
    %3170 = vmatpush2.msra.mxu0 0.0
    %3171 = vmatprep.subr.mxu0 0.0
    %3172 = vmatpush2.msra.mxu0 0.0
    %3173 = vmatprep.subr.mxu0 0.0
    %3174 = vmatpush2.msra.mxu0 0.0
    %3175 = vmatprep.mubr.f32.mxu0 0.0
    %3176 = vmatmul.mubr.f32.gmra.mxu0 %v1314
    %v3177 = vpop.f32.mrf.mxu0
    %v3178 = vadd.f32 %v3108, %v3177
    %v3179 = vpop.f32.mrf.mxu0
    %3180 = vdwg.mxu0
    %v3181 = vadd.f32 %v3178, %v2464
    %s3182 = scalar_lea.vmem %s12, 10
    %3183 = vst.msk [vmem:[%s3182] sm:$0x3] %vm2467, %v3181
    %3184 = vmatprep.subr.mxu0 0.0
    %3185 = vmatpush1.msra.mxu0 0.0
    %3186 = vmatprep.subr.mxu0 0.0
    %3187 = vmatpush1.msra.mxu0 0.0
    %3188 = vmatprep.subr.mxu0 0.0
    %3189 = vmatpush1.msra.mxu0 0.0
    %3190 = vmatprep.subr.mxu0 0.0
    %3191 = vmatpush1.msra.mxu0 0.0
    %3192 = vmatprep.subr.mxu0 0.0
    %3193 = vmatpush1.msra.mxu0 0.0
    %3194 = vmatprep.subr.mxu0 0.0
    %3195 = vmatpush1.msra.mxu0 0.0
    %3196 = vmatprep.subr.mxu0 0.0
    %3197 = vmatpush1.msra.mxu0 0.0
    %3198 = vmatprep.subr.mxu0 0.0
    %3199 = vmatpush1.msra.mxu0 0.0
    %3200 = vmatprep.subr.mxu0 0.0
    %3201 = vmatpush1.msra.mxu0 0.0
    %3202 = vmatprep.subr.mxu0 0.0
    %3203 = vmatpush1.msra.mxu0 0.0
    %3204 = vmatprep.subr.mxu0 0.0
    %3205 = vmatpush1.msra.mxu0 0.0
    %3206 = vmatprep.subr.mxu0 0.0
    %3207 = vmatpush1.msra.mxu0 0.0
    %3208 = vmatprep.subr.mxu0 0.0
    %3209 = vmatpush1.msra.mxu0 %v2313
    %3210 = vmatprep.subr.mxu0 0.0
    %3211 = vmatpush1.msra.mxu0 %v2312
    %3212 = vmatprep.subr.mxu0 0.0
    %3213 = vmatpush1.msra.mxu0 %v2311
    %3214 = vmatprep.subr.mxu0 0.0
    %3215 = vmatpush1.msra.mxu0 %v2310
    %3216 = vmatprep.subr.mxu0 0.0
    %3217 = vmatpush2.msra.mxu0 0.0
    %3218 = vmatprep.subr.mxu0 0.0
    %3219 = vmatpush2.msra.mxu0 0.0
    %3220 = vmatprep.subr.mxu0 0.0
    %3221 = vmatpush2.msra.mxu0 0.0
    %3222 = vmatprep.subr.mxu0 0.0
    %3223 = vmatpush2.msra.mxu0 0.0
    %3224 = vmatprep.subr.mxu0 0.0
    %3225 = vmatpush2.msra.mxu0 0.0
    %3226 = vmatprep.subr.mxu0 0.0
    %3227 = vmatpush2.msra.mxu0 0.0
    %3228 = vmatprep.subr.mxu0 0.0
    %3229 = vmatpush2.msra.mxu0 0.0
    %3230 = vmatprep.subr.mxu0 0.0
    %3231 = vmatpush2.msra.mxu0 0.0
    %3232 = vmatprep.subr.mxu0 0.0
    %3233 = vmatpush2.msra.mxu0 0.0
    %3234 = vmatprep.subr.mxu0 0.0
    %3235 = vmatpush2.msra.mxu0 0.0
    %3236 = vmatprep.subr.mxu0 0.0
    %3237 = vmatpush2.msra.mxu0 0.0
    %3238 = vmatprep.subr.mxu0 0.0
    %3239 = vmatpush2.msra.mxu0 0.0
    %3240 = vmatprep.subr.mxu0 0.0
    %3241 = vmatpush2.msra.mxu0 0.0
    %3242 = vmatprep.subr.mxu0 0.0
    %3243 = vmatpush2.msra.mxu0 0.0
    %3244 = vmatprep.subr.mxu0 0.0
    %3245 = vmatpush2.msra.mxu0 0.0
    %3246 = vmatprep.subr.mxu0 0.0
    %3247 = vmatpush2.msra.mxu0 0.0
    %3248 = vmatprep.mubr.f32.mxu0 0.0
    %3249 = vmatmul.mubr.f32.gmra.mxu0 %v1709
    %v3250 = vpop.f32.mrf.mxu0
    %v3251 = vadd.f32 0.0, %v3250
    %v3252 = vpop.f32.mrf.mxu0
    %3253 = vdwg.mxu0
    %3254 = vmatprep.subr.mxu0 0.0
    %3255 = vmatpush1.msra.mxu0 0.0
    %3256 = vmatprep.subr.mxu0 0.0
    %3257 = vmatpush1.msra.mxu0 0.0
    %3258 = vmatprep.subr.mxu0 0.0
    %3259 = vmatpush1.msra.mxu0 0.0
    %3260 = vmatprep.subr.mxu0 0.0
    %3261 = vmatpush1.msra.mxu0 0.0
    %3262 = vmatprep.subr.mxu0 0.0
    %3263 = vmatpush1.msra.mxu0 0.0
    %3264 = vmatprep.subr.mxu0 0.0
    %3265 = vmatpush1.msra.mxu0 0.0
    %3266 = vmatprep.subr.mxu0 0.0
    %3267 = vmatpush1.msra.mxu0 0.0
    %3268 = vmatprep.subr.mxu0 0.0
    %3269 = vmatpush1.msra.mxu0 0.0
    %3270 = vmatprep.subr.mxu0 0.0
    %3271 = vmatpush1.msra.mxu0 0.0
    %3272 = vmatprep.subr.mxu0 0.0
    %3273 = vmatpush1.msra.mxu0 0.0
    %3274 = vmatprep.subr.mxu0 0.0
    %3275 = vmatpush1.msra.mxu0 0.0
    %3276 = vmatprep.subr.mxu0 0.0
    %3277 = vmatpush1.msra.mxu0 0.0
    %3278 = vmatprep.subr.mxu0 0.0
    %3279 = vmatpush1.msra.mxu0 %v2309
    %3280 = vmatprep.subr.mxu0 0.0
    %3281 = vmatpush1.msra.mxu0 %v2308
    %3282 = vmatprep.subr.mxu0 0.0
    %3283 = vmatpush1.msra.mxu0 %v2307
    %3284 = vmatprep.subr.mxu0 0.0
    %3285 = vmatpush1.msra.mxu0 %v2306
    %3286 = vmatprep.subr.mxu0 0.0
    %3287 = vmatpush2.msra.mxu0 0.0
    %3288 = vmatprep.subr.mxu0 0.0
    %3289 = vmatpush2.msra.mxu0 0.0
    %3290 = vmatprep.subr.mxu0 0.0
    %3291 = vmatpush2.msra.mxu0 0.0
    %3292 = vmatprep.subr.mxu0 0.0
    %3293 = vmatpush2.msra.mxu0 0.0
    %3294 = vmatprep.subr.mxu0 0.0
    %3295 = vmatpush2.msra.mxu0 0.0
    %3296 = vmatprep.subr.mxu0 0.0
    %3297 = vmatpush2.msra.mxu0 0.0
    %3298 = vmatprep.subr.mxu0 0.0
    %3299 = vmatpush2.msra.mxu0 0.0
    %3300 = vmatprep.subr.mxu0 0.0
    %3301 = vmatpush2.msra.mxu0 0.0
    %3302 = vmatprep.subr.mxu0 0.0
    %3303 = vmatpush2.msra.mxu0 0.0
    %3304 = vmatprep.subr.mxu0 0.0
    %3305 = vmatpush2.msra.mxu0 0.0
    %3306 = vmatprep.subr.mxu0 0.0
    %3307 = vmatpush2.msra.mxu0 0.0
    %3308 = vmatprep.subr.mxu0 0.0
    %3309 = vmatpush2.msra.mxu0 0.0
    %3310 = vmatprep.subr.mxu0 0.0
    %3311 = vmatpush2.msra.mxu0 0.0
    %3312 = vmatprep.subr.mxu0 0.0
    %3313 = vmatpush2.msra.mxu0 0.0
    %3314 = vmatprep.subr.mxu0 0.0
    %3315 = vmatpush2.msra.mxu0 0.0
    %3316 = vmatprep.subr.mxu0 0.0
    %3317 = vmatpush2.msra.mxu0 0.0
    %3318 = vmatprep.mubr.f32.mxu0 0.0
    %3319 = vmatmul.mubr.f32.gmra.mxu0 %v1414
    %v3320 = vpop.f32.mrf.mxu0
    %v3321 = vadd.f32 %v3251, %v3320
    %v3322 = vpop.f32.mrf.mxu0
    %3323 = vdwg.mxu0
    %v3324 = vadd.f32 %v3321, %v2464
    %s3325 = scalar_lea.vmem %s12, 12
    %3326 = vst.msk [vmem:[%s3325] sm:$0x3] %vm2467, %v3324
    %3327 = vmatprep.subr.mxu0 0.0
    %3328 = vmatpush1.msra.mxu0 0.0
    %3329 = vmatprep.subr.mxu0 0.0
    %3330 = vmatpush1.msra.mxu0 0.0
    %3331 = vmatprep.subr.mxu0 0.0
    %3332 = vmatpush1.msra.mxu0 0.0
    %3333 = vmatprep.subr.mxu0 0.0
    %3334 = vmatpush1.msra.mxu0 0.0
    %3335 = vmatprep.subr.mxu0 0.0
    %3336 = vmatpush1.msra.mxu0 0.0
    %3337 = vmatprep.subr.mxu0 0.0
    %3338 = vmatpush1.msra.mxu0 0.0
    %3339 = vmatprep.subr.mxu0 0.0
    %3340 = vmatpush1.msra.mxu0 0.0
    %3341 = vmatprep.subr.mxu0 0.0
    %3342 = vmatpush1.msra.mxu0 0.0
    %3343 = vmatprep.subr.mxu0 0.0
    %3344 = vmatpush1.msra.mxu0 0.0
    %3345 = vmatprep.subr.mxu0 0.0
    %3346 = vmatpush1.msra.mxu0 0.0
    %3347 = vmatprep.subr.mxu0 0.0
    %3348 = vmatpush1.msra.mxu0 0.0
    %3349 = vmatprep.subr.mxu0 0.0
    %3350 = vmatpush1.msra.mxu0 0.0
    %3351 = vmatprep.subr.mxu0 0.0
    %3352 = vmatpush1.msra.mxu0 %v2313
    %3353 = vmatprep.subr.mxu0 0.0
    %3354 = vmatpush1.msra.mxu0 %v2312
    %3355 = vmatprep.subr.mxu0 0.0
    %3356 = vmatpush1.msra.mxu0 %v2311
    %3357 = vmatprep.subr.mxu0 0.0
    %3358 = vmatpush1.msra.mxu0 %v2310
    %3359 = vmatprep.subr.mxu0 0.0
    %3360 = vmatpush2.msra.mxu0 0.0
    %3361 = vmatprep.subr.mxu0 0.0
    %3362 = vmatpush2.msra.mxu0 0.0
    %3363 = vmatprep.subr.mxu0 0.0
    %3364 = vmatpush2.msra.mxu0 0.0
    %3365 = vmatprep.subr.mxu0 0.0
    %3366 = vmatpush2.msra.mxu0 0.0
    %3367 = vmatprep.subr.mxu0 0.0
    %3368 = vmatpush2.msra.mxu0 0.0
    %3369 = vmatprep.subr.mxu0 0.0
    %3370 = vmatpush2.msra.mxu0 0.0
    %3371 = vmatprep.subr.mxu0 0.0
    %3372 = vmatpush2.msra.mxu0 0.0
    %3373 = vmatprep.subr.mxu0 0.0
    %3374 = vmatpush2.msra.mxu0 0.0
    %3375 = vmatprep.subr.mxu0 0.0
    %3376 = vmatpush2.msra.mxu0 0.0
    %3377 = vmatprep.subr.mxu0 0.0
    %3378 = vmatpush2.msra.mxu0 0.0
    %3379 = vmatprep.subr.mxu0 0.0
    %3380 = vmatpush2.msra.mxu0 0.0
    %3381 = vmatprep.subr.mxu0 0.0
    %3382 = vmatpush2.msra.mxu0 0.0
    %3383 = vmatprep.subr.mxu0 0.0
    %3384 = vmatpush2.msra.mxu0 0.0
    %3385 = vmatprep.subr.mxu0 0.0
    %3386 = vmatpush2.msra.mxu0 0.0
    %3387 = vmatprep.subr.mxu0 0.0
    %3388 = vmatpush2.msra.mxu0 0.0
    %3389 = vmatprep.subr.mxu0 0.0
    %3390 = vmatpush2.msra.mxu0 0.0
    %3391 = vmatprep.mubr.f32.mxu0 0.0
    %3392 = vmatmul.mubr.f32.gmra.mxu0 %v1609
    %v3393 = vpop.f32.mrf.mxu0
    %v3394 = vadd.f32 0.0, %v3393
    %v3395 = vpop.f32.mrf.mxu0
    %3396 = vdwg.mxu0
    %3398 = vrot.lane.b32.xlu0 %v1510, 32
    %v3399 = vpop.permute.xlu0 %3398
    %v3400 = vsel %vm712, %v3399, 0
    %3402 = vmatprep.subr.mxu0 0.0
    %3403 = vmatpush1.msra.mxu0 0.0
    %3404 = vmatprep.subr.mxu0 0.0
    %3405 = vmatpush1.msra.mxu0 0.0
    %3406 = vmatprep.subr.mxu0 0.0
    %3407 = vmatpush1.msra.mxu0 0.0
    %3408 = vmatprep.subr.mxu0 0.0
    %3409 = vmatpush1.msra.mxu0 0.0
    %3410 = vmatprep.subr.mxu0 0.0
    %3411 = vmatpush1.msra.mxu0 0.0
    %3412 = vmatprep.subr.mxu0 0.0
    %3413 = vmatpush1.msra.mxu0 0.0
    %3414 = vmatprep.subr.mxu0 0.0
    %3415 = vmatpush1.msra.mxu0 0.0
    %3416 = vmatprep.subr.mxu0 0.0
    %3417 = vmatpush1.msra.mxu0 0.0
    %3418 = vmatprep.subr.mxu0 0.0
    %3419 = vmatpush1.msra.mxu0 0.0
    %3420 = vmatprep.subr.mxu0 0.0
    %3421 = vmatpush1.msra.mxu0 0.0
    %3422 = vmatprep.subr.mxu0 0.0
    %3423 = vmatpush1.msra.mxu0 0.0
    %3424 = vmatprep.subr.mxu0 0.0
    %3425 = vmatpush1.msra.mxu0 0.0
    %3426 = vmatprep.subr.mxu0 0.0
    %3427 = vmatpush1.msra.mxu0 %v2309
    %3428 = vmatprep.subr.mxu0 0.0
    %3429 = vmatpush1.msra.mxu0 %v2308
    %3430 = vmatprep.subr.mxu0 0.0
    %3431 = vmatpush1.msra.mxu0 %v2307
    %3432 = vmatprep.subr.mxu0 0.0
    %3433 = vmatpush1.msra.mxu0 %v2306
    %3434 = vmatprep.subr.mxu0 0.0
    %3435 = vmatpush2.msra.mxu0 0.0
    %3436 = vmatprep.subr.mxu0 0.0
    %3437 = vmatpush2.msra.mxu0 0.0
    %3438 = vmatprep.subr.mxu0 0.0
    %3439 = vmatpush2.msra.mxu0 0.0
    %3440 = vmatprep.subr.mxu0 0.0
    %3441 = vmatpush2.msra.mxu0 0.0
    %3442 = vmatprep.subr.mxu0 0.0
    %3443 = vmatpush2.msra.mxu0 0.0
    %3444 = vmatprep.subr.mxu0 0.0
    %3445 = vmatpush2.msra.mxu0 0.0
    %3446 = vmatprep.subr.mxu0 0.0
    %3447 = vmatpush2.msra.mxu0 0.0
    %3448 = vmatprep.subr.mxu0 0.0
    %3449 = vmatpush2.msra.mxu0 0.0
    %3450 = vmatprep.subr.mxu0 0.0
    %3451 = vmatpush2.msra.mxu0 0.0
    %3452 = vmatprep.subr.mxu0 0.0
    %3453 = vmatpush2.msra.mxu0 0.0
    %3454 = vmatprep.subr.mxu0 0.0
    %3455 = vmatpush2.msra.mxu0 0.0
    %3456 = vmatprep.subr.mxu0 0.0
    %3457 = vmatpush2.msra.mxu0 0.0
    %3458 = vmatprep.subr.mxu0 0.0
    %3459 = vmatpush2.msra.mxu0 0.0
    %3460 = vmatprep.subr.mxu0 0.0
    %3461 = vmatpush2.msra.mxu0 0.0
    %3462 = vmatprep.subr.mxu0 0.0
    %3463 = vmatpush2.msra.mxu0 0.0
    %3464 = vmatprep.subr.mxu0 0.0
    %3465 = vmatpush2.msra.mxu0 0.0
    %3466 = vmatprep.mubr.f32.mxu0 0.0
    %3467 = vmatmul.mubr.f32.gmra.mxu0 %v3400
    %v3468 = vpop.f32.mrf.mxu0
    %v3469 = vadd.f32 %v3394, %v3468
    %v3470 = vpop.f32.mrf.mxu0
    %3471 = vdwg.mxu0
    %v3472 = vadd.f32 %v3469, %v2464
    %s3473 = scalar_lea.vmem %s12, 14
    %3474 = vst.msk [vmem:[%s3473] sm:$0x3] %vm2467, %v3472
    %v3475 = vld [vmem:[%s11] sm:$0x1f]
    %v3476 = vld [vmem:[%s9] sm:$0x1]
    %v3478 = vlaneseq
    %v3479 = vshrl.u32 %v3478, 7
    %v3480 = vsub.s32 0, %v3479
    %v3481 = vrot.slane %v3476, %v3480
    %v3483 = vadd.f32 %v3481, %v2466
    %s3484 = scalar_lea.vmem %s8, 2
    %v3485 = vld [vmem:[%s3484] sm:$0x3]
    %v3488 = vunpack.c.l.s4 1966171168
    %v3489 = vunpack.c.0.s8 %v3488
    %v3490 = vlaneseq
    %v3491 = vshrl.u32 %v3490, 7
    %v3492 = vsub.s32 %v3489, %v3491
    %v3493 = vrot.slane %v3483, %v3492
    %v3494 = vcombine.high %v3493, %v3493
    %v3496 = vunpack.c.l.s4 1966171168
    %v3497 = vunpack.c.0.s8 %v3496
    %v3498 = vlaneseq
    %v3499 = vshrl.u32 %v3498, 7
    %v3500 = vsub.s32 %v3497, %v3499
    %v3501 = vrot.slane %v3493, %v3500
    %v3503 = vunpack.c.l.s4 1966171168
    %v3504 = vunpack.c.0.s8 %v3503
    %v3505 = vlaneseq
    %v3506 = vshrl.u32 %v3505, 7
    %v3507 = vsub.s32 %v3504, %v3506
    %v3508 = vrot.slane %v3494, %v3507
    %v3509 = vlaneseq
    %v3510 = vshrl.u32 %v3509, 7
    %v3511 = vsub.s32 0, %v3510
    %v3512 = vrot.slane %v3501, %v3511
    %v3513 = vlaneseq
    %v3514 = vshrl.u32 %v3513, 7
    %v3515 = vsub.s32 0, %v3514
    %v3516 = vrot.slane %v3508, %v3515
    %v3519 = vadd.f32 %v3512, %v3475
    %v3520 = vadd.f32 %v3516, %v3475
    %vm3521 = vcmask 36864
    %v3522 = vsel %vm3521, %v3519, -inf
    %3523 = vmax.xlane.f32.xlu0 %v3522
    %v3524 = vpop.xlane.xlu0 %3523
    %v3525 = vsel %vm3521, %v3520, -inf
    %3526 = vmax.xlane.f32.xlu0 %v3525
    %v3527 = vpop.xlane.xlu0 %3526
    %v3528 = vsub.f32 %v3519, %v3524
    %v3529 = vsub.f32 %v3520, %v3527
    %v3530 = vmul.f32 %v3528, 1.442695
    %v3531 = vpow.pop %v3530
    %v3532 = vmul.f32 %v3529, 1.442695
    %v3533 = vpow.pop %v3532
    %v3534 = vsel %vm3521, %v3531, 0.0
    %3535 = vadd.xlane.f32.xlu0 %v3534
    %v3536 = vpop.xlane.xlu0 %3535
    %v3537 = vsel %vm3521, %v3533, 0.0
    %3538 = vadd.xlane.f32.xlu0 %v3537
    %v3539 = vpop.xlane.xlu0 %3538
    %v3540 = vlog2.pop %v3536
    %v3541 = vmul.f32 %v3540, 0.6931472
    %v3542 = vlog2.pop %v3539
    %v3543 = vmul.f32 %v3542, 0.6931472
    %v3544 = vadd.f32 %v3524, %v3541
    %v3545 = vadd.f32 %v3527, %v3543
    %vm3546 = vcmp.gt.f32.partialorder %v3485, 0.0
    %v3548 = vlaneseq
    %v3549 = vshrl.u32 %v3548, 7
    %v3550 = vsub.s32 0, %v3549
    %v3551 = vrot.slane %v2609, %v3550
    %3553 = vbcast.lane.b32.xlu0 %v3551, 256
    %v3554 = vpop.permute.xlu0 %3553
    %v3555 = vlaneseq
    %v3556 = vshrl.u32 %v3555, 7
    %v3557 = vsub.s32 1, %v3556
    %v3558 = vrot.slane %v2609, %v3557
    %3560 = vbcast.lane.b32.xlu0 %v3558, 256
    %v3561 = vpop.permute.xlu0 %3560
    %v3564 = vadd.f32 %v3544, %v3554
    %v3565 = vadd.f32 %v3545, %v3561
    %v3566 = vsel %vm3546, 1, 0
    %3567 = vset.pattern.permute.xlu0 0
    %3568 = vperm.xlu0 %3567, %v3566
    %v3569 = vpop.permute.xlu0 %3568
    %vm3570 = vcmp.eq.s32.totalorder %v3569, 1
    %3573 = vset.pattern.permute.xlu0 0
    %3574 = vperm.xlu0 %3573, %v3564
    %v3575 = vpop.permute.xlu0 %3574
    %3576 = vset.pattern.permute.xlu0 0
    %3577 = vperm.xlu0 %3576, %v3565
    %v3578 = vpop.permute.xlu0 %3577
    %v3579 = vlaneseq
    %v3580 = vand.u32 %v3579, 127
    %v3581 = vlaneseq
    %v3582 = vshrl.u32 %v3581, 7
    %v3583 = vsub.s32 %v3580, %v3582
    %v3584 = vrot.slane %v3575, %v3583
    %v3585 = vlaneseq
    %v3586 = vshrl.u32 %v3585, 7
    %v3587 = vsub.s32 %v3580, %v3586
    %v3588 = vrot.slane %v3578, %v3587
    %vm3589 = vcmask 1041409
    %v3590 = vsel %vm3589, %v3588, %v3584
    %v3592 = vsel %vm3570, %v3590, %v3483
    %s3593 = scalar_lea.vmem %s8, 4
    %v3594 = vld [vmem:[%s3593] sm:$0x3]
    %v3597 = vunpack.c.l.s4 1966171168
    %v3598 = vunpack.c.0.s8 %v3597
    %v3599 = vlaneseq
    %v3600 = vshrl.u32 %v3599, 7
    %v3601 = vsub.s32 %v3598, %v3600
    %v3602 = vrot.slane %v3592, %v3601
    %v3603 = vcombine.high %v3602, %v3602
    %v3605 = vunpack.c.l.s4 1966171168
    %v3606 = vunpack.c.0.s8 %v3605
    %v3607 = vlaneseq
    %v3608 = vshrl.u32 %v3607, 7
    %v3609 = vsub.s32 %v3606, %v3608
    %v3610 = vrot.slane %v3602, %v3609
    %v3612 = vunpack.c.l.s4 1966171168
    %v3613 = vunpack.c.0.s8 %v3612
    %v3614 = vlaneseq
    %v3615 = vshrl.u32 %v3614, 7
    %v3616 = vsub.s32 %v3613, %v3615
    %v3617 = vrot.slane %v3603, %v3616
    %v3618 = vlaneseq
    %v3619 = vshrl.u32 %v3618, 7
    %v3620 = vsub.s32 0, %v3619
    %v3621 = vrot.slane %v3610, %v3620
    %v3622 = vlaneseq
    %v3623 = vshrl.u32 %v3622, 7
    %v3624 = vsub.s32 0, %v3623
    %v3625 = vrot.slane %v3617, %v3624
    %v3628 = vadd.f32 %v3621, %v3475
    %v3629 = vadd.f32 %v3625, %v3475
    %v3630 = vsel %vm3521, %v3628, -inf
    %3631 = vmax.xlane.f32.xlu0 %v3630
    %v3632 = vpop.xlane.xlu0 %3631
    %v3633 = vsel %vm3521, %v3629, -inf
    %3634 = vmax.xlane.f32.xlu0 %v3633
    %v3635 = vpop.xlane.xlu0 %3634
    %v3636 = vsub.f32 %v3628, %v3632
    %v3637 = vsub.f32 %v3629, %v3635
    %v3638 = vmul.f32 %v3636, 1.442695
    %v3639 = vpow.pop %v3638
    %v3640 = vmul.f32 %v3637, 1.442695
    %v3641 = vpow.pop %v3640
    %v3642 = vsel %vm3521, %v3639, 0.0
    %3643 = vadd.xlane.f32.xlu0 %v3642
    %v3644 = vpop.xlane.xlu0 %3643
    %v3645 = vsel %vm3521, %v3641, 0.0
    %3646 = vadd.xlane.f32.xlu0 %v3645
    %v3647 = vpop.xlane.xlu0 %3646
    %v3648 = vlog2.pop %v3644
    %v3649 = vmul.f32 %v3648, 0.6931472
    %v3650 = vlog2.pop %v3647
    %v3651 = vmul.f32 %v3650, 0.6931472
    %v3652 = vadd.f32 %v3632, %v3649
    %v3653 = vadd.f32 %v3635, %v3651
    %vm3654 = vcmp.gt.f32.partialorder %v3594, 0.0
    %v3656 = vlaneseq
    %v3657 = vshrl.u32 %v3656, 7
    %v3658 = vsub.s32 0, %v3657
    %v3659 = vrot.slane %v2752, %v3658
    %3661 = vbcast.lane.b32.xlu0 %v3659, 256
    %v3662 = vpop.permute.xlu0 %3661
    %v3663 = vlaneseq
    %v3664 = vshrl.u32 %v3663, 7
    %v3665 = vsub.s32 1, %v3664
    %v3666 = vrot.slane %v2752, %v3665
    %3668 = vbcast.lane.b32.xlu0 %v3666, 256
    %v3669 = vpop.permute.xlu0 %3668
    %v3672 = vadd.f32 %v3652, %v3662
    %v3673 = vadd.f32 %v3653, %v3669
    %v3674 = vsel %vm3654, 1, 0
    %3675 = vset.pattern.permute.xlu0 0
    %3676 = vperm.xlu0 %3675, %v3674
    %v3677 = vpop.permute.xlu0 %3676
    %vm3678 = vcmp.eq.s32.totalorder %v3677, 1
    %3681 = vset.pattern.permute.xlu0 0
    %3682 = vperm.xlu0 %3681, %v3672
    %v3683 = vpop.permute.xlu0 %3682
    %3684 = vset.pattern.permute.xlu0 0
    %3685 = vperm.xlu0 %3684, %v3673
    %v3686 = vpop.permute.xlu0 %3685
    %v3687 = vlaneseq
    %v3688 = vshrl.u32 %v3687, 7
    %v3689 = vsub.s32 %v3580, %v3688
    %v3690 = vrot.slane %v3683, %v3689
    %v3691 = vlaneseq
    %v3692 = vshrl.u32 %v3691, 7
    %v3693 = vsub.s32 %v3580, %v3692
    %v3694 = vrot.slane %v3686, %v3693
    %v3695 = vsel %vm3589, %v3694, %v3690
    %v3697 = vsel %vm3678, %v3695, %v3592
    %s3698 = scalar_lea.vmem %s8, 6
    %v3699 = vld [vmem:[%s3698] sm:$0x3]
    %v3702 = vunpack.c.l.s4 1966171168
    %v3703 = vunpack.c.0.s8 %v3702
    %v3704 = vlaneseq
    %v3705 = vshrl.u32 %v3704, 7
    %v3706 = vsub.s32 %v3703, %v3705
    %v3707 = vrot.slane %v3697, %v3706
    %v3708 = vcombine.high %v3707, %v3707
    %v3710 = vunpack.c.l.s4 1966171168
    %v3711 = vunpack.c.0.s8 %v3710
    %v3712 = vlaneseq
    %v3713 = vshrl.u32 %v3712, 7
    %v3714 = vsub.s32 %v3711, %v3713
    %v3715 = vrot.slane %v3707, %v3714
    %v3717 = vunpack.c.l.s4 1966171168
    %v3718 = vunpack.c.0.s8 %v3717
    %v3719 = vlaneseq
    %v3720 = vshrl.u32 %v3719, 7
    %v3721 = vsub.s32 %v3718, %v3720
    %v3722 = vrot.slane %v3708, %v3721
    %v3723 = vlaneseq
    %v3724 = vshrl.u32 %v3723, 7
    %v3725 = vsub.s32 0, %v3724
    %v3726 = vrot.slane %v3715, %v3725
    %v3727 = vlaneseq
    %v3728 = vshrl.u32 %v3727, 7
    %v3729 = vsub.s32 0, %v3728
    %v3730 = vrot.slane %v3722, %v3729
    %v3733 = vadd.f32 %v3726, %v3475
    %v3734 = vadd.f32 %v3730, %v3475
    %v3735 = vsel %vm3521, %v3733, -inf
    %3736 = vmax.xlane.f32.xlu0 %v3735
    %v3737 = vpop.xlane.xlu0 %3736
    %v3738 = vsel %vm3521, %v3734, -inf
    %3739 = vmax.xlane.f32.xlu0 %v3738
    %v3740 = vpop.xlane.xlu0 %3739
    %v3741 = vsub.f32 %v3733, %v3737
    %v3742 = vsub.f32 %v3734, %v3740
    %v3743 = vmul.f32 %v3741, 1.442695
    %v3744 = vpow.pop %v3743
    %v3745 = vmul.f32 %v3742, 1.442695
    %v3746 = vpow.pop %v3745
    %v3747 = vsel %vm3521, %v3744, 0.0
    %3748 = vadd.xlane.f32.xlu0 %v3747
    %v3749 = vpop.xlane.xlu0 %3748
    %v3750 = vsel %vm3521, %v3746, 0.0
    %3751 = vadd.xlane.f32.xlu0 %v3750
    %v3752 = vpop.xlane.xlu0 %3751
    %v3753 = vlog2.pop %v3749
    %v3754 = vmul.f32 %v3753, 0.6931472
    %v3755 = vlog2.pop %v3752
    %v3756 = vmul.f32 %v3755, 0.6931472
    %v3757 = vadd.f32 %v3737, %v3754
    %v3758 = vadd.f32 %v3740, %v3756
    %vm3759 = vcmp.gt.f32.partialorder %v3699, 0.0
    %v3761 = vlaneseq
    %v3762 = vshrl.u32 %v3761, 7
    %v3763 = vsub.s32 0, %v3762
    %v3764 = vrot.slane %v2895, %v3763
    %3766 = vbcast.lane.b32.xlu0 %v3764, 256
    %v3767 = vpop.permute.xlu0 %3766
    %v3768 = vlaneseq
    %v3769 = vshrl.u32 %v3768, 7
    %v3770 = vsub.s32 1, %v3769
    %v3771 = vrot.slane %v2895, %v3770
    %3773 = vbcast.lane.b32.xlu0 %v3771, 256
    %v3774 = vpop.permute.xlu0 %3773
    %v3777 = vadd.f32 %v3757, %v3767
    %v3778 = vadd.f32 %v3758, %v3774
    %v3779 = vsel %vm3759, 1, 0
    %3780 = vset.pattern.permute.xlu0 0
    %3781 = vperm.xlu0 %3780, %v3779
    %v3782 = vpop.permute.xlu0 %3781
    %vm3783 = vcmp.eq.s32.totalorder %v3782, 1
    %3786 = vset.pattern.permute.xlu0 0
    %3787 = vperm.xlu0 %3786, %v3777
    %v3788 = vpop.permute.xlu0 %3787
    %3789 = vset.pattern.permute.xlu0 0
    %3790 = vperm.xlu0 %3789, %v3778
    %v3791 = vpop.permute.xlu0 %3790
    %v3792 = vlaneseq
    %v3793 = vshrl.u32 %v3792, 7
    %v3794 = vsub.s32 %v3580, %v3793
    %v3795 = vrot.slane %v3788, %v3794
    %v3796 = vlaneseq
    %v3797 = vshrl.u32 %v3796, 7
    %v3798 = vsub.s32 %v3580, %v3797
    %v3799 = vrot.slane %v3791, %v3798
    %v3800 = vsel %vm3589, %v3799, %v3795
    %v3802 = vsel %vm3783, %v3800, %v3697
    %s3803 = scalar_lea.vmem %s8, 8
    %v3804 = vld [vmem:[%s3803] sm:$0x3]
    %v3807 = vunpack.c.l.s4 1966171168
    %v3808 = vunpack.c.0.s8 %v3807
    %v3809 = vlaneseq
    %v3810 = vshrl.u32 %v3809, 7
    %v3811 = vsub.s32 %v3808, %v3810
    %v3812 = vrot.slane %v3802, %v3811
    %v3813 = vcombine.high %v3812, %v3812
    %v3815 = vunpack.c.l.s4 1966171168
    %v3816 = vunpack.c.0.s8 %v3815
    %v3817 = vlaneseq
    %v3818 = vshrl.u32 %v3817, 7
    %v3819 = vsub.s32 %v3816, %v3818
    %v3820 = vrot.slane %v3812, %v3819
    %v3822 = vunpack.c.l.s4 1966171168
    %v3823 = vunpack.c.0.s8 %v3822
    %v3824 = vlaneseq
    %v3825 = vshrl.u32 %v3824, 7
    %v3826 = vsub.s32 %v3823, %v3825
    %v3827 = vrot.slane %v3813, %v3826
    %v3828 = vlaneseq
    %v3829 = vshrl.u32 %v3828, 7
    %v3830 = vsub.s32 0, %v3829
    %v3831 = vrot.slane %v3820, %v3830
    %v3832 = vlaneseq
    %v3833 = vshrl.u32 %v3832, 7
    %v3834 = vsub.s32 0, %v3833
    %v3835 = vrot.slane %v3827, %v3834
    %v3838 = vadd.f32 %v3831, %v3475
    %v3839 = vadd.f32 %v3835, %v3475
    %v3840 = vsel %vm3521, %v3838, -inf
    %3841 = vmax.xlane.f32.xlu0 %v3840
    %v3842 = vpop.xlane.xlu0 %3841
    %v3843 = vsel %vm3521, %v3839, -inf
    %3844 = vmax.xlane.f32.xlu0 %v3843
    %v3845 = vpop.xlane.xlu0 %3844
    %v3846 = vsub.f32 %v3838, %v3842
    %v3847 = vsub.f32 %v3839, %v3845
    %v3848 = vmul.f32 %v3846, 1.442695
    %v3849 = vpow.pop %v3848
    %v3850 = vmul.f32 %v3847, 1.442695
    %v3851 = vpow.pop %v3850
    %v3852 = vsel %vm3521, %v3849, 0.0
    %3853 = vadd.xlane.f32.xlu0 %v3852
    %v3854 = vpop.xlane.xlu0 %3853
    %v3855 = vsel %vm3521, %v3851, 0.0
    %3856 = vadd.xlane.f32.xlu0 %v3855
    %v3857 = vpop.xlane.xlu0 %3856
    %v3858 = vlog2.pop %v3854
    %v3859 = vmul.f32 %v3858, 0.6931472
    %v3860 = vlog2.pop %v3857
    %v3861 = vmul.f32 %v3860, 0.6931472
    %v3862 = vadd.f32 %v3842, %v3859
    %v3863 = vadd.f32 %v3845, %v3861
    %vm3864 = vcmp.gt.f32.partialorder %v3804, 0.0
    %v3866 = vlaneseq
    %v3867 = vshrl.u32 %v3866, 7
    %v3868 = vsub.s32 0, %v3867
    %v3869 = vrot.slane %v3038, %v3868
    %3871 = vbcast.lane.b32.xlu0 %v3869, 256
    %v3872 = vpop.permute.xlu0 %3871
    %v3873 = vlaneseq
    %v3874 = vshrl.u32 %v3873, 7
    %v3875 = vsub.s32 1, %v3874
    %v3876 = vrot.slane %v3038, %v3875
    %3878 = vbcast.lane.b32.xlu0 %v3876, 256
    %v3879 = vpop.permute.xlu0 %3878
    %v3882 = vadd.f32 %v3862, %v3872
    %v3883 = vadd.f32 %v3863, %v3879
    %v3884 = vsel %vm3864, 1, 0
    %3885 = vset.pattern.permute.xlu0 0
    %3886 = vperm.xlu0 %3885, %v3884
    %v3887 = vpop.permute.xlu0 %3886
    %vm3888 = vcmp.eq.s32.totalorder %v3887, 1
    %3891 = vset.pattern.permute.xlu0 0
    %3892 = vperm.xlu0 %3891, %v3882
    %v3893 = vpop.permute.xlu0 %3892
    %3894 = vset.pattern.permute.xlu0 0
    %3895 = vperm.xlu0 %3894, %v3883
    %v3896 = vpop.permute.xlu0 %3895
    %v3897 = vlaneseq
    %v3898 = vshrl.u32 %v3897, 7
    %v3899 = vsub.s32 %v3580, %v3898
    %v3900 = vrot.slane %v3893, %v3899
    %v3901 = vlaneseq
    %v3902 = vshrl.u32 %v3901, 7
    %v3903 = vsub.s32 %v3580, %v3902
    %v3904 = vrot.slane %v3896, %v3903
    %v3905 = vsel %vm3589, %v3904, %v3900
    %v3907 = vsel %vm3888, %v3905, %v3802
    %s3908 = scalar_lea.vmem %s8, 10
    %v3909 = vld [vmem:[%s3908] sm:$0x3]
    %v3912 = vunpack.c.l.s4 1966171168
    %v3913 = vunpack.c.0.s8 %v3912
    %v3914 = vlaneseq
    %v3915 = vshrl.u32 %v3914, 7
    %v3916 = vsub.s32 %v3913, %v3915
    %v3917 = vrot.slane %v3907, %v3916
    %v3918 = vcombine.high %v3917, %v3917
    %v3920 = vunpack.c.l.s4 1966171168
    %v3921 = vunpack.c.0.s8 %v3920
    %v3922 = vlaneseq
    %v3923 = vshrl.u32 %v3922, 7
    %v3924 = vsub.s32 %v3921, %v3923
    %v3925 = vrot.slane %v3917, %v3924
    %v3927 = vunpack.c.l.s4 1966171168
    %v3928 = vunpack.c.0.s8 %v3927
    %v3929 = vlaneseq
    %v3930 = vshrl.u32 %v3929, 7
    %v3931 = vsub.s32 %v3928, %v3930
    %v3932 = vrot.slane %v3918, %v3931
    %v3933 = vlaneseq
    %v3934 = vshrl.u32 %v3933, 7
    %v3935 = vsub.s32 0, %v3934
    %v3936 = vrot.slane %v3925, %v3935
    %v3937 = vlaneseq
    %v3938 = vshrl.u32 %v3937, 7
    %v3939 = vsub.s32 0, %v3938
    %v3940 = vrot.slane %v3932, %v3939
    %v3943 = vadd.f32 %v3936, %v3475
    %v3944 = vadd.f32 %v3940, %v3475
    %v3945 = vsel %vm3521, %v3943, -inf
    %3946 = vmax.xlane.f32.xlu0 %v3945
    %v3947 = vpop.xlane.xlu0 %3946
    %v3948 = vsel %vm3521, %v3944, -inf
    %3949 = vmax.xlane.f32.xlu0 %v3948
    %v3950 = vpop.xlane.xlu0 %3949
    %v3951 = vsub.f32 %v3943, %v3947
    %v3952 = vsub.f32 %v3944, %v3950
    %v3953 = vmul.f32 %v3951, 1.442695
    %v3954 = vpow.pop %v3953
    %v3955 = vmul.f32 %v3952, 1.442695
    %v3956 = vpow.pop %v3955
    %v3957 = vsel %vm3521, %v3954, 0.0
    %3958 = vadd.xlane.f32.xlu0 %v3957
    %v3959 = vpop.xlane.xlu0 %3958
    %v3960 = vsel %vm3521, %v3956, 0.0
    %3961 = vadd.xlane.f32.xlu0 %v3960
    %v3962 = vpop.xlane.xlu0 %3961
    %v3963 = vlog2.pop %v3959
    %v3964 = vmul.f32 %v3963, 0.6931472
    %v3965 = vlog2.pop %v3962
    %v3966 = vmul.f32 %v3965, 0.6931472
    %v3967 = vadd.f32 %v3947, %v3964
    %v3968 = vadd.f32 %v3950, %v3966
    %vm3969 = vcmp.gt.f32.partialorder %v3909, 0.0
    %v3971 = vlaneseq
    %v3972 = vshrl.u32 %v3971, 7
    %v3973 = vsub.s32 0, %v3972
    %v3974 = vrot.slane %v3181, %v3973
    %3976 = vbcast.lane.b32.xlu0 %v3974, 256
    %v3977 = vpop.permute.xlu0 %3976
    %v3978 = vlaneseq
    %v3979 = vshrl.u32 %v3978, 7
    %v3980 = vsub.s32 1, %v3979
    %v3981 = vrot.slane %v3181, %v3980
    %3983 = vbcast.lane.b32.xlu0 %v3981, 256
    %v3984 = vpop.permute.xlu0 %3983
    %v3987 = vadd.f32 %v3967, %v3977
    %v3988 = vadd.f32 %v3968, %v3984
    %v3989 = vsel %vm3969, 1, 0
    %3990 = vset.pattern.permute.xlu0 0
    %3991 = vperm.xlu0 %3990, %v3989
    %v3992 = vpop.permute.xlu0 %3991
    %vm3993 = vcmp.eq.s32.totalorder %v3992, 1
    %3996 = vset.pattern.permute.xlu0 0
    %3997 = vperm.xlu0 %3996, %v3987
    %v3998 = vpop.permute.xlu0 %3997
    %3999 = vset.pattern.permute.xlu0 0
    %4000 = vperm.xlu0 %3999, %v3988
    %v4001 = vpop.permute.xlu0 %4000
    %v4002 = vlaneseq
    %v4003 = vshrl.u32 %v4002, 7
    %v4004 = vsub.s32 %v3580, %v4003
    %v4005 = vrot.slane %v3998, %v4004
    %v4006 = vlaneseq
    %v4007 = vshrl.u32 %v4006, 7
    %v4008 = vsub.s32 %v3580, %v4007
    %v4009 = vrot.slane %v4001, %v4008
    %v4010 = vsel %vm3589, %v4009, %v4005
    %v4012 = vsel %vm3993, %v4010, %v3907
    %s4013 = scalar_lea.vmem %s8, 12
    %v4014 = vld [vmem:[%s4013] sm:$0x3]
    %v4017 = vunpack.c.l.s4 1966171168
    %v4018 = vunpack.c.0.s8 %v4017
    %v4019 = vlaneseq
    %v4020 = vshrl.u32 %v4019, 7
    %v4021 = vsub.s32 %v4018, %v4020
    %v4022 = vrot.slane %v4012, %v4021
    %v4023 = vcombine.high %v4022, %v4022
    %v4025 = vunpack.c.l.s4 1966171168
    %v4026 = vunpack.c.0.s8 %v4025
    %v4027 = vlaneseq
    %v4028 = vshrl.u32 %v4027, 7
    %v4029 = vsub.s32 %v4026, %v4028
    %v4030 = vrot.slane %v4022, %v4029
    %v4032 = vunpack.c.l.s4 1966171168
    %v4033 = vunpack.c.0.s8 %v4032
    %v4034 = vlaneseq
    %v4035 = vshrl.u32 %v4034, 7
    %v4036 = vsub.s32 %v4033, %v4035
    %v4037 = vrot.slane %v4023, %v4036
    %v4038 = vlaneseq
    %v4039 = vshrl.u32 %v4038, 7
    %v4040 = vsub.s32 0, %v4039
    %v4041 = vrot.slane %v4030, %v4040
    %v4042 = vlaneseq
    %v4043 = vshrl.u32 %v4042, 7
    %v4044 = vsub.s32 0, %v4043
    %v4045 = vrot.slane %v4037, %v4044
    %v4048 = vadd.f32 %v4041, %v3475
    %v4049 = vadd.f32 %v4045, %v3475
    %v4050 = vsel %vm3521, %v4048, -inf
    %4051 = vmax.xlane.f32.xlu0 %v4050
    %v4052 = vpop.xlane.xlu0 %4051
    %v4053 = vsel %vm3521, %v4049, -inf
    %4054 = vmax.xlane.f32.xlu0 %v4053
    %v4055 = vpop.xlane.xlu0 %4054
    %v4056 = vsub.f32 %v4048, %v4052
    %v4057 = vsub.f32 %v4049, %v4055
    %v4058 = vmul.f32 %v4056, 1.442695
    %v4059 = vpow.pop %v4058
    %v4060 = vmul.f32 %v4057, 1.442695
    %v4061 = vpow.pop %v4060
    %v4062 = vsel %vm3521, %v4059, 0.0
    %4063 = vadd.xlane.f32.xlu0 %v4062
    %v4064 = vpop.xlane.xlu0 %4063
    %v4065 = vsel %vm3521, %v4061, 0.0
    %4066 = vadd.xlane.f32.xlu0 %v4065
    %v4067 = vpop.xlane.xlu0 %4066
    %v4068 = vlog2.pop %v4064
    %v4069 = vmul.f32 %v4068, 0.6931472
    %v4070 = vlog2.pop %v4067
    %v4071 = vmul.f32 %v4070, 0.6931472
    %v4072 = vadd.f32 %v4052, %v4069
    %v4073 = vadd.f32 %v4055, %v4071
    %vm4074 = vcmp.gt.f32.partialorder %v4014, 0.0
    %v4076 = vlaneseq
    %v4077 = vshrl.u32 %v4076, 7
    %v4078 = vsub.s32 0, %v4077
    %v4079 = vrot.slane %v3324, %v4078
    %4081 = vbcast.lane.b32.xlu0 %v4079, 256
    %v4082 = vpop.permute.xlu0 %4081
    %v4083 = vlaneseq
    %v4084 = vshrl.u32 %v4083, 7
    %v4085 = vsub.s32 1, %v4084
    %v4086 = vrot.slane %v3324, %v4085
    %4088 = vbcast.lane.b32.xlu0 %v4086, 256
    %v4089 = vpop.permute.xlu0 %4088
    %v4092 = vadd.f32 %v4072, %v4082
    %v4093 = vadd.f32 %v4073, %v4089
    %v4094 = vsel %vm4074, 1, 0
    %4095 = vset.pattern.permute.xlu0 0
    %4096 = vperm.xlu0 %4095, %v4094
    %v4097 = vpop.permute.xlu0 %4096
    %vm4098 = vcmp.eq.s32.totalorder %v4097, 1
    %4101 = vset.pattern.permute.xlu0 0
    %4102 = vperm.xlu0 %4101, %v4092
    %v4103 = vpop.permute.xlu0 %4102
    %4104 = vset.pattern.permute.xlu0 0
    %4105 = vperm.xlu0 %4104, %v4093
    %v4106 = vpop.permute.xlu0 %4105
    %v4107 = vlaneseq
    %v4108 = vshrl.u32 %v4107, 7
    %v4109 = vsub.s32 %v3580, %v4108
    %v4110 = vrot.slane %v4103, %v4109
    %v4111 = vlaneseq
    %v4112 = vshrl.u32 %v4111, 7
    %v4113 = vsub.s32 %v3580, %v4112
    %v4114 = vrot.slane %v4106, %v4113
    %v4115 = vsel %vm3589, %v4114, %v4110
    %v4117 = vsel %vm4098, %v4115, %v4012
    %s4118 = scalar_lea.vmem %s8, 14
    %v4119 = vld [vmem:[%s4118] sm:$0x3]
    %v4122 = vunpack.c.l.s4 1966171168
    %v4123 = vunpack.c.0.s8 %v4122
    %v4124 = vlaneseq
    %v4125 = vshrl.u32 %v4124, 7
    %v4126 = vsub.s32 %v4123, %v4125
    %v4127 = vrot.slane %v4117, %v4126
    %v4128 = vcombine.high %v4127, %v4127
    %v4130 = vunpack.c.l.s4 1966171168
    %v4131 = vunpack.c.0.s8 %v4130
    %v4132 = vlaneseq
    %v4133 = vshrl.u32 %v4132, 7
    %v4134 = vsub.s32 %v4131, %v4133
    %v4135 = vrot.slane %v4127, %v4134
    %v4137 = vunpack.c.l.s4 1966171168
    %v4138 = vunpack.c.0.s8 %v4137
    %v4139 = vlaneseq
    %v4140 = vshrl.u32 %v4139, 7
    %v4141 = vsub.s32 %v4138, %v4140
    %v4142 = vrot.slane %v4128, %v4141
    %v4143 = vlaneseq
    %v4144 = vshrl.u32 %v4143, 7
    %v4145 = vsub.s32 0, %v4144
    %v4146 = vrot.slane %v4135, %v4145
    %v4147 = vlaneseq
    %v4148 = vshrl.u32 %v4147, 7
    %v4149 = vsub.s32 0, %v4148
    %v4150 = vrot.slane %v4142, %v4149
    %v4153 = vadd.f32 %v4146, %v3475
    %v4154 = vadd.f32 %v4150, %v3475
    %v4155 = vsel %vm3521, %v4153, -inf
    %4156 = vmax.xlane.f32.xlu0 %v4155
    %v4157 = vpop.xlane.xlu0 %4156
    %v4158 = vsel %vm3521, %v4154, -inf
    %4159 = vmax.xlane.f32.xlu0 %v4158
    %v4160 = vpop.xlane.xlu0 %4159
    %v4161 = vsub.f32 %v4153, %v4157
    %v4162 = vsub.f32 %v4154, %v4160
    %v4163 = vmul.f32 %v4161, 1.442695
    %v4164 = vpow.pop %v4163
    %v4165 = vmul.f32 %v4162, 1.442695
    %v4166 = vpow.pop %v4165
    %v4167 = vsel %vm3521, %v4164, 0.0
    %4168 = vadd.xlane.f32.xlu0 %v4167
    %v4169 = vpop.xlane.xlu0 %4168
    %v4170 = vsel %vm3521, %v4166, 0.0
    %4171 = vadd.xlane.f32.xlu0 %v4170
    %v4172 = vpop.xlane.xlu0 %4171
    %v4173 = vlog2.pop %v4169
    %v4174 = vmul.f32 %v4173, 0.6931472
    %v4175 = vlog2.pop %v4172
    %v4176 = vmul.f32 %v4175, 0.6931472
    %v4177 = vadd.f32 %v4157, %v4174
    %v4178 = vadd.f32 %v4160, %v4176
    %vm4179 = vcmp.gt.f32.partialorder %v4119, 0.0
    %v4181 = vlaneseq
    %v4182 = vshrl.u32 %v4181, 7
    %v4183 = vsub.s32 0, %v4182
    %v4184 = vrot.slane %v3472, %v4183
    %4186 = vbcast.lane.b32.xlu0 %v4184, 256
    %v4187 = vpop.permute.xlu0 %4186
    %v4188 = vlaneseq
    %v4189 = vshrl.u32 %v4188, 7
    %v4190 = vsub.s32 1, %v4189
    %v4191 = vrot.slane %v3472, %v4190
    %4193 = vbcast.lane.b32.xlu0 %v4191, 256
    %v4194 = vpop.permute.xlu0 %4193
    %v4197 = vadd.f32 %v4177, %v4187
    %v4198 = vadd.f32 %v4178, %v4194
    %v4199 = vsel %vm4179, 1, 0
    %4200 = vset.pattern.permute.xlu0 0
    %4201 = vperm.xlu0 %4200, %v4199
    %v4202 = vpop.permute.xlu0 %4201
    %vm4203 = vcmp.eq.s32.totalorder %v4202, 1
    %4206 = vset.pattern.permute.xlu0 0
    %4207 = vperm.xlu0 %4206, %v4197
    %v4208 = vpop.permute.xlu0 %4207
    %4209 = vset.pattern.permute.xlu0 0
    %4210 = vperm.xlu0 %4209, %v4198
    %v4211 = vpop.permute.xlu0 %4210
    %v4212 = vlaneseq
    %v4213 = vshrl.u32 %v4212, 7
    %v4214 = vsub.s32 %v3580, %v4213
    %v4215 = vrot.slane %v4208, %v4214
    %v4216 = vlaneseq
    %v4217 = vshrl.u32 %v4216, 7
    %v4218 = vsub.s32 %v3580, %v4217
    %v4219 = vrot.slane %v4211, %v4218
    %v4220 = vsel %vm3589, %v4219, %v4215
    %v4222 = vsel %vm4203, %v4220, %v4117
    %v4223 = vld [vmem:[%s10] sm:$0x1]
    %v4225 = vlaneseq
    %v4226 = vshrl.u32 %v4225, 7
    %v4227 = vsub.s32 0, %v4226
    %v4228 = vrot.slane %v4223, %v4227
    %v4230 = vadd.f32 %v4222, %v4228
    %v4231 = vsel %vm2467, %v4230, -inf
    %4232 = vmax.xlane.f32.xlu0 %v4231
    %v4233 = vpop.xlane.xlu0 %4232
    %v4234 = vsub.f32 %v4230, %v4233
    %v4235 = vmul.f32 %v4234, 1.442695
    %v4236 = vpow.pop %v4235
    %v4237 = vsel %vm2467, %v4236, 0.0
    %4238 = vadd.xlane.f32.xlu0 %v4237
    %v4239 = vpop.xlane.xlu0 %4238
    %v4240 = vlog2.pop %v4239
    %v4241 = vmul.f32 %v4240, 0.6931472
    %v4242 = vadd.f32 %v4233, %v4241
    %vm4243 = vcmask 1024
    %4244 = vst.msk [vmem:[%s13] sm:$0x3] %vm4243, %v4242
    // Predicated region
    $region62: #{tpu_custom_call.1} parent=1 // pred_check
      _
    $region63: #{tpu_custom_call.1} parent=1 // pred_check_branch
      %4246 = sbr.rel (0) target = $region65
    $region64: #{tpu_custom_call.1} parent=1 // pred_region
      _
    $region65: #{tpu_custom_call.1} parent=1 // pred_fallthru
      _
    // Predicated region
    $region66: #{tpu_custom_call.1} parent=1 // pred_check
      _
    $region67: #{tpu_custom_call.1} parent=1 // pred_check_branch
      %4248 = sbr.rel (0) target = $region69
    $region68: #{tpu_custom_call.1} parent=1 // pred_region
      _
    $region69: #{tpu_custom_call.1} parent=1 // pred_fallthru
      _
    // Predicated region
    $region70: #{tpu_custom_call.1} parent=1 // pred_check
      _
    $region71: #{tpu_custom_call.1} parent=1 // pred_check_branch
      %4250 = sbr.rel (0) target = $region73
    $region72: #{tpu_custom_call.1} parent=1 // pred_region
      _
    $region73: #{tpu_custom_call.1} parent=1 // pred_fallthru
      _
    // Predicated region
    $region74: #{tpu_custom_call.1} parent=1 // pred_check
      _
    $region75: #{tpu_custom_call.1} parent=1 // pred_check_branch
      %4252 = sbr.rel (0) target = $region77
    $region76: #{tpu_custom_call.1} parent=1 // pred_region
      _
    $region77: #{tpu_custom_call.1} parent=1 // pred_fallthru
      _
    %4253 = vsyncpa [#allocation3], 1
    %4254 = vsyncpa [#allocation5], 1

</llo_original>
